<compile_context>
chip_gen: v5e
topology: v5e:2x2
jax: 0.10.0
libtpu: 0.0.40
codegen_flags: <defaults>
</compile_context>

<pallas_src>
import functools

import jax
import jax.numpy as jnp
from jax import lax
from jax.experimental import pallas as pl
from jax.experimental.pallas import tpu as pltpu


def _round_up(x, m):
    return ((x + m - 1) // m) * m


def _log_sigmoid(x):
    # Numerically stable logsigmoid(x) = min(x, 0) - log(1 + exp(-|x|)).
    # log1p-accurate without relying on a log1p lowering: Taylor branch where 1+t rounds to 1.
    t = jnp.exp(-jnp.abs(x))
    log1p_t = jnp.where(t < 1e-5, t * (1.0 - 0.5 * t), jnp.log(1.0 + t))
    return jnp.minimum(x, 0.0) - log1p_t


def _skipgram_kernel(pos_u_sm, pos_v_sm, neg_sm,   # scalar-prefetch index refs (SMEM)
                     u_w, v_w,                     # embedding tables, raw HBM refs (V, Dp)
                     loss_ref,                     # (1, 1) f32 output (VMEM)
                     buf, sem, acc,                # scratch
                     *, B, TB, K, U):
    i = pl.program_id(0)
    n = pl.num_programs(0)
    slot = i % 2
    nxt = 1 - slot

    def fetch_tile(tile, s):
        base = tile * TB

        @pl.loop(0, TB // U)
        def _(t0):
            for uu in range(U):          # static issue-unroll: co-issue addr math w/ DMA pushes
                t = t0 * U + uu
                b = base + t
                nb = b * K               # hoisted flat-negative base
                pltpu.make_async_copy(u_w.at[pos_u_sm[b]], buf.at[s, 0, t], sem.at[s]).start()
                pltpu.make_async_copy(v_w.at[pos_v_sm[b]], buf.at[s, 1, t], sem.at[s]).start()
                for k in range(K):       # K is small & static -> unrolled
                    pltpu.make_async_copy(
                        v_w.at[neg_sm[nb + k]], buf.at[s, 2 + k, t], sem.at[s]).start()

    @pl.when(i == 0)
    def _():
        acc[...] = jnp.zeros_like(acc)
        fetch_tile(0, 0)                 # prime slot 0

    @pl.when(i + 1 < n)
    def _():
        fetch_tile(i + 1, nxt)           # prefetch next tile (overlaps this tile's compute)

    # Single byte-count-matched wait: TB*(K+2) row copies of (Dp,) each landed on sem[slot];
    # the descriptor below spans exactly (K+2)*TB*Dp elements, so one wait covers the slot.
    pltpu.make_async_copy(buf.at[slot], buf.at[slot], sem.at[slot]).wait()

    block = buf[slot].astype(jnp.float32)        # (K+2, TB, Dp); slab 0 = u, 1 = pos, 2.. = neg
    u = block[0]                                 # (TB, Dp)

    # score[s, b] = <block[s, b, :], u[b, :]>   (slab 0 gives ||u||^2, masked below)
    scores = jnp.sum(block * u[None, :, :], axis=2)                  # (K+2, TB)
    k_idx = lax.broadcasted_iota(jnp.int32, scores.shape, 0)
    row = i * TB + lax.broadcasted_iota(jnp.int32, scores.shape, 1)
    signed = jnp.where(k_idx == 1, scores, -scores)                  # + for positive, - for negatives
    ls = _log_sigmoid(signed)                                        # (K+2, TB)
    valid = (k_idx >= 1) & (row < B)             # drop the u-slab and padded tail rows
    acc[...] += jnp.where(valid, ls, 0.0)        # pure VPU add; reduction deferred to epilogue

    @pl.when(i == n - 1)
    def _():
        loss_ref[...] = -jnp.sum(acc[...], axis=(0, 1), keepdims=True)


def skipgram_loss(u_weight, v_weight, pos_u, pos_v, neg_v, *, tile_b=256, issue_unroll=4):
    """Forward pass of SkipGramModel: loss = -(sum logsig(u.v_pos) + sum logsig(-u.v_neg))."""
    V, D = u_weight.shape
    assert v_weight.shape == (V, D)
    # The byte-count-matched wait requires every row DMA to move the same number of bytes.
    assert u_weight.dtype == v_weight.dtype, "u/v embedding tables must share a dtype"
    B, K = neg_v.shape

    # Lane-align the embedding dim (module default D=200 -> 256); zero columns don't change dots.
    Dp = _round_up(D, 128)
    if Dp != D:
        u_weight = jnp.pad(u_weight, ((0, 0), (0, Dp - D)))
        v_weight = jnp.pad(v_weight, ((0, 0), (0, Dp - D)))

    # Batch tile: multiple of 8 sublanes, clamped to the padded batch so tiny batches don't
    # gather piles of dummy rows.
    tile_b = max(8, min(int(tile_b), _round_up(B, 8)))
    tile_b = _round_up(tile_b, 8)
    U = max(1, int(issue_unroll))
    while tile_b % U:
        U -= 1

    num_tiles = max(1, -(-B // tile_b))
    b_pad = num_tiles * tile_b
    pad = b_pad - B

    # Indices live in SMEM (scalar prefetch); ragged tail padded with index 0 (masked in-kernel).
    pos_u_p = jnp.pad(pos_u.astype(jnp.int32), (0, pad))
    pos_v_p = jnp.pad(pos_v.astype(jnp.int32), (0, pad))
    neg_flat = jnp.pad(neg_v.astype(jnp.int32).reshape(-1), (0, pad * K))

    S = K + 2                                    # slabs per pair: [u | pos_v | K * neg_v]
    itemsize = jnp.dtype(u_weight.dtype).itemsize
    scratch_bytes = 2 * S * tile_b * Dp * itemsize + S * tile_b * 4
    vmem_limit = int(min(max(scratch_bytes + (8 << 20), 16 << 20), 64 << 20))

    kernel = functools.partial(_skipgram_kernel, B=B, TB=tile_b, K=K, U=U)

    cost = pl.CostEstimate(
        flops=2 * b_pad * S * Dp + 8 * b_pad * S,
        transcendentals=2 * b_pad * S,
        bytes_accessed=b_pad * S * Dp * itemsize + b_pad * (K + 2) * 4 + 4,
    )

    loss = pl.pallas_call(
        kernel,
        out_shape=jax.ShapeDtypeStruct((1, 1), jnp.float32),
        grid_spec=pltpu.PrefetchScalarGridSpec(
            num_scalar_prefetch=3,
            grid=(num_tiles,),
            in_specs=[
                pl.BlockSpec(memory_space=pl.ANY),   # u_embeddings.weight (V, Dp), stays in HBM
                pl.BlockSpec(memory_space=pl.ANY),   # v_embeddings.weight (V, Dp), stays in HBM
            ],
            out_specs=pl.BlockSpec((1, 1), lambda i, pu, pv, nv: (0, 0)),
            scratch_shapes=[
                pltpu.VMEM((2, S, tile_b, Dp), u_weight.dtype),   # double-buffered gather slabs
                pltpu.SemaphoreType.DMA((2,)),                    # one DMA sem per slot
                pltpu.VMEM((S, tile_b), jnp.float32),             # vreg-shaped loss partials
            ],
        ),
        compiler_params=pltpu.CompilerParams(
            dimension_semantics=("arbitrary",),
            vmem_limit_bytes=vmem_limit,
        ),
        cost_estimate=cost,
    )(pos_u_p, pos_v_p, neg_flat, u_weight, v_weight)
    return loss[0, 0]


if __name__ == "__main__":
    vocab_size = 64
    emb_size = 200     # module default; lane-padded to 256 inside the wrapper
    B = 40             # with tile_b=16: tiles of 16, 16, 8(+8 pad) -> double-buffering + ragged tail
    K = 5              # negative samples per pair

    key = jax.random.PRNGKey(0)
    k_u, k_v, k_pu, k_pv, k_nv = jax.random.split(key, 5)

    # Non-zero random weights so the in-kernel gather path is actually validated.
    # (The module's _init_emb zeros v_embeddings, which would make every score 0 and hide
    #  any index/gather bug; forward semantics are independent of the init.)
    u_weight = jax.random.uniform(k_u, (vocab_size, emb_size), jnp.float32, -0.3, 0.3)
    v_weight = jax.random.uniform(k_v, (vocab_size, emb_size), jnp.float32, -0.3, 0.3)

    pos_u = jax.random.randint(k_pu, (B,), 0, vocab_size, dtype=jnp.int32)
    pos_v = jax.random.randint(k_pv, (B,), 0, vocab_size, dtype=jnp.int32)
    neg_v = jax.random.randint(k_nv, (B, K), 0, vocab_size, dtype=jnp.int32)

    loss = skipgram_loss(u_weight, v_weight, pos_u, pos_v, neg_v, tile_b=16)
    loss = jax.block_until_ready(loss)

    # Pure-JAX reference of the same forward semantics.
    emb_u = jnp.take(u_weight, pos_u, axis=0)
    emb_v = jnp.take(v_weight, pos_v, axis=0)
    emb_neg = jnp.take(v_weight, neg_v, axis=0)
    pos_score = jax.nn.log_sigmoid(jnp.sum(emb_u * emb_v, axis=1))
    neg_score = jax.nn.log_sigmoid(-jnp.einsum("bkd,bd->bk", emb_neg, emb_u))
    ref = -(jnp.sum(pos_score) + jnp.sum(neg_score))

    assert jnp.allclose(loss, ref, rtol=1e-5, atol=1e-4), (loss, ref)
    print("KERNEL_OK")
</pallas_src>

<mosaic_0001>
module attributes {stable_mosaic.version = 11 : i64} {
  func.func @_skipgram_kernel(%arg0: i32, %arg1: memref<48xi32, #tpu.memory_space<smem>>, %arg2: memref<48xi32, #tpu.memory_space<smem>>, %arg3: memref<240xi32, #tpu.memory_space<smem>>, %arg4: memref<64x256xf32, #tpu.memory_space<any>>, %arg5: memref<64x256xf32, #tpu.memory_space<any>>, %arg6: memref<1x1xf32, #tpu.memory_space<vmem>>, %arg7: memref<2x7x16x256xf32, #tpu.memory_space<vmem>>, %arg8: memref<2x!tpu.dma_semaphore, #tpu.memory_space<semaphore_mem>>, %arg9: memref<7x16xf32, #tpu.memory_space<vmem>>) attributes {dimension_semantics = [#tpu.dimension_semantics<arbitrary>], iteration_bounds = array<i64: 3>, scalar_prefetch = 3 : i64, scratch_operands = 3 : i64, tpu.core_type = #tpu.core_type<tc>, window_params = [{}, {}, {pipeline_mode = #tpu.pipeline_mode<synchronous>, transform_indices = @transform_2, window_bounds = array<i64: 1, 1>}]} {
    %c2_i32 = arith.constant 2 : i32
    %c0_i32 = arith.constant 0 : i32
    %0 = arith.cmpi eq, %c2_i32, %c0_i32 : i32
    %c1_i32 = arith.constant 1 : i32
    %1 = arith.select %0, %c1_i32, %c2_i32 : i32
    %2 = arith.remsi %arg0, %1 : i32
    %c0_i32_0 = arith.constant 0 : i32
    %3 = arith.cmpi ne, %2, %c0_i32_0 : i32
    %c0_i32_1 = arith.constant 0 : i32
    %4 = arith.cmpi slt, %2, %c0_i32_1 : i32
    %c0_i32_2 = arith.constant 0 : i32
    %5 = arith.cmpi slt, %1, %c0_i32_2 : i32
    %6 = arith.xori %4, %5 : i1
    %7 = arith.andi %6, %3 : i1
    %8 = arith.addi %2, %1 : i32
    %9 = arith.select %7, %8, %2 : i32
    %c1_i32_3 = arith.constant 1 : i32
    %10 = arith.subi %c1_i32_3, %9 : i32
    %c0_i32_4 = arith.constant 0 : i32
    %11 = arith.cmpi eq, %arg0, %c0_i32_4 : i32
    %12 = arith.extui %11 : i1 to i32
    %c0_i32_5 = arith.constant 0 : i32
    %13 = arith.cmpi ne, %12, %c0_i32_5 : i32
    scf.if %13 {
      %cst_32 = arith.constant 0.000000e+00 : f32
      %74 = vector.broadcast %cst_32 : f32 to vector<7x16xf32>
      %c0_33 = arith.constant 0 : index
      %c0_34 = arith.constant 0 : index
      %75 = vector.load %arg9[%c0_33, %c0_34] : memref<7x16xf32, #tpu.memory_space<vmem>>, vector<7x16xf32>
      tpu.vector_store %arg9[%c0_33, %c0_34], %74 {strides = array<i32>} : memref<7x16xf32, #tpu.memory_space<vmem>>, vector<7x16xf32>,
      %c0_i32_35 = arith.constant 0 : i32
      %c4_i32 = arith.constant 4 : i32
      %76 = arith.addi %c0_i32_35, %c4_i32 : i32
      %c1_i32_36 = arith.constant 1 : i32
      scf.for %arg10 = %c0_i32_35 to %76 step %c1_i32_36  : i32 {
        %c1_i32_38 = arith.constant 1 : i32
        %77 = arith.muli %arg10, %c1_i32_38 : i32
        %c0_i32_39 = arith.constant 0 : i32
        %78 = arith.addi %c0_i32_39, %77 : i32
        %c4_i32_40 = arith.constant 4 : i32
        %79 = arith.muli %78, %c4_i32_40 : i32
        %c0_i32_41 = arith.constant 0 : i32
        %80 = arith.addi %79, %c0_i32_41 : i32
        %c0_i32_42 = arith.constant 0 : i32
        %81 = arith.addi %c0_i32_42, %80 : i32
        %c5_i32 = arith.constant 5 : i32
        %82 = arith.muli %81, %c5_i32 : i32
        %83 = arith.index_cast %81 : i32 to index
        %84 = memref.load %arg1[%83] : memref<48xi32, #tpu.memory_space<smem>>
        %c0_i32_43 = arith.constant 0 : i32
        %c0_i32_44 = arith.constant 0 : i32
        %c0_i32_45 = arith.constant 0 : i32
        %c0_i32_46 = arith.constant 0 : i32
        %85 = tpu.memref_slice %arg4[%84, %c0_i32_46] : memref<64x256xf32, #tpu.memory_space<any>> -> memref<1x256xf32, #tpu.memory_space<any>>
        %86 = tpu.memref_squeeze %85 : memref<1x256xf32, #tpu.memory_space<any>> -> memref<256xf32, #tpu.memory_space<any>>
        %c0_i32_47 = arith.constant 0 : i32
        %87 = tpu.memref_slice %arg7[%c0_i32_43, %c0_i32_44, %80, %c0_i32_47] : memref<2x7x16x256xf32, #tpu.memory_space<vmem>> -> memref<1x1x1x256xf32, #tpu.memory_space<vmem>>
        %88 = tpu.memref_squeeze %87 : memref<1x1x1x256xf32, #tpu.memory_space<vmem>> -> memref<256xf32, #tpu.memory_space<vmem>>
        %89 = tpu.memref_slice %arg8[%c0_i32_45] : memref<2x!tpu.dma_semaphore, #tpu.memory_space<semaphore_mem>> -> memref<1x!tpu.dma_semaphore, #tpu.memory_space<semaphore_mem>>
        %90 = tpu.memref_squeeze %89 : memref<1x!tpu.dma_semaphore, #tpu.memory_space<semaphore_mem>> -> memref<!tpu.dma_semaphore, #tpu.memory_space<semaphore_mem>>
        tpu.enqueue_dma source(%86 : memref<256xf32, #tpu.memory_space<any>>) target(%88 : memref<256xf32, #tpu.memory_space<vmem>>) target_semaphore(%90 : memref<!tpu.dma_semaphore, #tpu.memory_space<semaphore_mem>>)
        %91 = arith.index_cast %81 : i32 to index
        %92 = memref.load %arg2[%91] : memref<48xi32, #tpu.memory_space<smem>>
        %c0_i32_48 = arith.constant 0 : i32
        %c1_i32_49 = arith.constant 1 : i32
        %c0_i32_50 = arith.constant 0 : i32
        %c0_i32_51 = arith.constant 0 : i32
        %93 = tpu.memref_slice %arg5[%92, %c0_i32_51] : memref<64x256xf32, #tpu.memory_space<any>> -> memref<1x256xf32, #tpu.memory_space<any>>
        %94 = tpu.memref_squeeze %93 : memref<1x256xf32, #tpu.memory_space<any>> -> memref<256xf32, #tpu.memory_space<any>>
        %c0_i32_52 = arith.constant 0 : i32
        %95 = tpu.memref_slice %arg7[%c0_i32_48, %c1_i32_49, %80, %c0_i32_52] : memref<2x7x16x256xf32, #tpu.memory_space<vmem>> -> memref<1x1x1x256xf32, #tpu.memory_space<vmem>>
        %96 = tpu.memref_squeeze %95 : memref<1x1x1x256xf32, #tpu.memory_space<vmem>> -> memref<256xf32, #tpu.memory_space<vmem>>
        %97 = tpu.memref_slice %arg8[%c0_i32_50] : memref<2x!tpu.dma_semaphore, #tpu.memory_space<semaphore_mem>> -> memref<1x!tpu.dma_semaphore, #tpu.memory_space<semaphore_mem>>
        %98 = tpu.memref_squeeze %97 : memref<1x!tpu.dma_semaphore, #tpu.memory_space<semaphore_mem>> -> memref<!tpu.dma_semaphore, #tpu.memory_space<semaphore_mem>>
        tpu.enqueue_dma source(%94 : memref<256xf32, #tpu.memory_space<any>>) target(%96 : memref<256xf32, #tpu.memory_space<vmem>>) target_semaphore(%98 : memref<!tpu.dma_semaphore, #tpu.memory_space<semaphore_mem>>)
        %c0_i32_53 = arith.constant 0 : i32
        %99 = arith.addi %82, %c0_i32_53 : i32
        %100 = arith.index_cast %99 : i32 to index
        %101 = memref.load %arg3[%100] : memref<240xi32, #tpu.memory_space<smem>>
        %c0_i32_54 = arith.constant 0 : i32
        %c2_i32_55 = arith.constant 2 : i32
        %c0_i32_56 = arith.constant 0 : i32
        %c0_i32_57 = arith.constant 0 : i32
        %102 = tpu.memref_slice %arg5[%101, %c0_i32_57] : memref<64x256xf32, #tpu.memory_space<any>> -> memref<1x256xf32, #tpu.memory_space<any>>
        %103 = tpu.memref_squeeze %102 : memref<1x256xf32, #tpu.memory_space<any>> -> memref<256xf32, #tpu.memory_space<any>>
        %c0_i32_58 = arith.constant 0 : i32
        %104 = tpu.memref_slice %arg7[%c0_i32_54, %c2_i32_55, %80, %c0_i32_58] : memref<2x7x16x256xf32, #tpu.memory_space<vmem>> -> memref<1x1x1x256xf32, #tpu.memory_space<vmem>>
        %105 = tpu.memref_squeeze %104 : memref<1x1x1x256xf32, #tpu.memory_space<vmem>> -> memref<256xf32, #tpu.memory_space<vmem>>
        %106 = tpu.memref_slice %arg8[%c0_i32_56] : memref<2x!tpu.dma_semaphore, #tpu.memory_space<semaphore_mem>> -> memref<1x!tpu.dma_semaphore, #tpu.memory_space<semaphore_mem>>
        %107 = tpu.memref_squeeze %106 : memref<1x!tpu.dma_semaphore, #tpu.memory_space<semaphore_mem>> -> memref<!tpu.dma_semaphore, #tpu.memory_space<semaphore_mem>>
        tpu.enqueue_dma source(%103 : memref<256xf32, #tpu.memory_space<any>>) target(%105 : memref<256xf32, #tpu.memory_space<vmem>>) target_semaphore(%107 : memref<!tpu.dma_semaphore, #tpu.memory_space<semaphore_mem>>)
        %c1_i32_59 = arith.constant 1 : i32
        %108 = arith.addi %82, %c1_i32_59 : i32
        %109 = arith.index_cast %108 : i32 to index
        %110 = memref.load %arg3[%109] : memref<240xi32, #tpu.memory_space<smem>>
        %c0_i32_60 = arith.constant 0 : i32
        %c3_i32_61 = arith.constant 3 : i32
        %c0_i32_62 = arith.constant 0 : i32
        %c0_i32_63 = arith.constant 0 : i32
        %111 = tpu.memref_slice %arg5[%110, %c0_i32_63] : memref<64x256xf32, #tpu.memory_space<any>> -> memref<1x256xf32, #tpu.memory_space<any>>
        %112 = tpu.memref_squeeze %111 : memref<1x256xf32, #tpu.memory_space<any>> -> memref<256xf32, #tpu.memory_space<any>>
        %c0_i32_64 = arith.constant 0 : i32
        %113 = tpu.memref_slice %arg7[%c0_i32_60, %c3_i32_61, %80, %c0_i32_64] : memref<2x7x16x256xf32, #tpu.memory_space<vmem>> -> memref<1x1x1x256xf32, #tpu.memory_space<vmem>>
        %114 = tpu.memref_squeeze %113 : memref<1x1x1x256xf32, #tpu.memory_space<vmem>> -> memref<256xf32, #tpu.memory_space<vmem>>
        %115 = tpu.memref_slice %arg8[%c0_i32_62] : memref<2x!tpu.dma_semaphore, #tpu.memory_space<semaphore_mem>> -> memref<1x!tpu.dma_semaphore, #tpu.memory_space<semaphore_mem>>
        %116 = tpu.memref_squeeze %115 : memref<1x!tpu.dma_semaphore, #tpu.memory_space<semaphore_mem>> -> memref<!tpu.dma_semaphore, #tpu.memory_space<semaphore_mem>>
        tpu.enqueue_dma source(%112 : memref<256xf32, #tpu.memory_space<any>>) target(%114 : memref<256xf32, #tpu.memory_space<vmem>>) target_semaphore(%116 : memref<!tpu.dma_semaphore, #tpu.memory_space<semaphore_mem>>)
        %c2_i32_65 = arith.constant 2 : i32
        %117 = arith.addi %82, %c2_i32_65 : i32
        %118 = arith.index_cast %117 : i32 to index
        %119 = memref.load %arg3[%118] : memref<240xi32, #tpu.memory_space<smem>>
        %c0_i32_66 = arith.constant 0 : i32
        %c4_i32_67 = arith.constant 4 : i32
        %c0_i32_68 = arith.constant 0 : i32
        %c0_i32_69 = arith.constant 0 : i32
        %120 = tpu.memref_slice %arg5[%119, %c0_i32_69] : memref<64x256xf32, #tpu.memory_space<any>> -> memref<1x256xf32, #tpu.memory_space<any>>
        %121 = tpu.memref_squeeze %120 : memref<1x256xf32, #tpu.memory_space<any>> -> memref<256xf32, #tpu.memory_space<any>>
        %c0_i32_70 = arith.constant 0 : i32
        %122 = tpu.memref_slice %arg7[%c0_i32_66, %c4_i32_67, %80, %c0_i32_70] : memref<2x7x16x256xf32, #tpu.memory_space<vmem>> -> memref<1x1x1x256xf32, #tpu.memory_space<vmem>>
        %123 = tpu.memref_squeeze %122 : memref<1x1x1x256xf32, #tpu.memory_space<vmem>> -> memref<256xf32, #tpu.memory_space<vmem>>
        %124 = tpu.memref_slice %arg8[%c0_i32_68] : memref<2x!tpu.dma_semaphore, #tpu.memory_space<semaphore_mem>> -> memref<1x!tpu.dma_semaphore, #tpu.memory_space<semaphore_mem>>
        %125 = tpu.memref_squeeze %124 : memref<1x!tpu.dma_semaphore, #tpu.memory_space<semaphore_mem>> -> memref<!tpu.dma_semaphore, #tpu.memory_space<semaphore_mem>>
        tpu.enqueue_dma source(%121 : memref<256xf32, #tpu.memory_space<any>>) target(%123 : memref<256xf32, #tpu.memory_space<vmem>>) target_semaphore(%125 : memref<!tpu.dma_semaphore, #tpu.memory_space<semaphore_mem>>)
        %c3_i32_71 = arith.constant 3 : i32
        %126 = arith.addi %82, %c3_i32_71 : i32
        %127 = arith.index_cast %126 : i32 to index
        %128 = memref.load %arg3[%127] : memref<240xi32, #tpu.memory_space<smem>>
        %c0_i32_72 = arith.constant 0 : i32
        %c5_i32_73 = arith.constant 5 : i32
        %c0_i32_74 = arith.constant 0 : i32
        %c0_i32_75 = arith.constant 0 : i32
        %129 = tpu.memref_slice %arg5[%128, %c0_i32_75] : memref<64x256xf32, #tpu.memory_space<any>> -> memref<1x256xf32, #tpu.memory_space<any>>
        %130 = tpu.memref_squeeze %129 : memref<1x256xf32, #tpu.memory_space<any>> -> memref<256xf32, #tpu.memory_space<any>>
        %c0_i32_76 = arith.constant 0 : i32
        %131 = tpu.memref_slice %arg7[%c0_i32_72, %c5_i32_73, %80, %c0_i32_76] : memref<2x7x16x256xf32, #tpu.memory_space<vmem>> -> memref<1x1x1x256xf32, #tpu.memory_space<vmem>>
        %132 = tpu.memref_squeeze %131 : memref<1x1x1x256xf32, #tpu.memory_space<vmem>> -> memref<256xf32, #tpu.memory_space<vmem>>
        %133 = tpu.memref_slice %arg8[%c0_i32_74] : memref<2x!tpu.dma_semaphore, #tpu.memory_space<semaphore_mem>> -> memref<1x!tpu.dma_semaphore, #tpu.memory_space<semaphore_mem>>
        %134 = tpu.memref_squeeze %133 : memref<1x!tpu.dma_semaphore, #tpu.memory_space<semaphore_mem>> -> memref<!tpu.dma_semaphore, #tpu.memory_space<semaphore_mem>>
        tpu.enqueue_dma source(%130 : memref<256xf32, #tpu.memory_space<any>>) target(%132 : memref<256xf32, #tpu.memory_space<vmem>>) target_semaphore(%134 : memref<!tpu.dma_semaphore, #tpu.memory_space<semaphore_mem>>)
        %c4_i32_77 = arith.constant 4 : i32
        %135 = arith.addi %82, %c4_i32_77 : i32
        %136 = arith.index_cast %135 : i32 to index
        %137 = memref.load %arg3[%136] : memref<240xi32, #tpu.memory_space<smem>>
        %c0_i32_78 = arith.constant 0 : i32
        %c6_i32 = arith.constant 6 : i32
        %c0_i32_79 = arith.constant 0 : i32
        %c0_i32_80 = arith.constant 0 : i32
        %138 = tpu.memref_slice %arg5[%137, %c0_i32_80] : memref<64x256xf32, #tpu.memory_space<any>> -> memref<1x256xf32, #tpu.memory_space<any>>
        %139 = tpu.memref_squeeze %138 : memref<1x256xf32, #tpu.memory_space<any>> -> memref<256xf32, #tpu.memory_space<any>>
        %c0_i32_81 = arith.constant 0 : i32
        %140 = tpu.memref_slice %arg7[%c0_i32_78, %c6_i32, %80, %c0_i32_81] : memref<2x7x16x256xf32, #tpu.memory_space<vmem>> -> memref<1x1x1x256xf32, #tpu.memory_space<vmem>>
        %141 = tpu.memref_squeeze %140 : memref<1x1x1x256xf32, #tpu.memory_space<vmem>> -> memref<256xf32, #tpu.memory_space<vmem>>
        %142 = tpu.memref_slice %arg8[%c0_i32_79] : memref<2x!tpu.dma_semaphore, #tpu.memory_space<semaphore_mem>> -> memref<1x!tpu.dma_semaphore, #tpu.memory_space<semaphore_mem>>
        %143 = tpu.memref_squeeze %142 : memref<1x!tpu.dma_semaphore, #tpu.memory_space<semaphore_mem>> -> memref<!tpu.dma_semaphore, #tpu.memory_space<semaphore_mem>>
        tpu.enqueue_dma source(%139 : memref<256xf32, #tpu.memory_space<any>>) target(%141 : memref<256xf32, #tpu.memory_space<vmem>>) target_semaphore(%143 : memref<!tpu.dma_semaphore, #tpu.memory_space<semaphore_mem>>)
        %c4_i32_82 = arith.constant 4 : i32
        %144 = arith.muli %78, %c4_i32_82 : i32
        %c1_i32_83 = arith.constant 1 : i32
        %145 = arith.addi %144, %c1_i32_83 : i32
        %c0_i32_84 = arith.constant 0 : i32
        %146 = arith.addi %c0_i32_84, %145 : i32
        %c5_i32_85 = arith.constant 5 : i32
        %147 = arith.muli %146, %c5_i32_85 : i32
        %148 = arith.index_cast %146 : i32 to index
        %149 = memref.load %arg1[%148] : memref<48xi32, #tpu.memory_space<smem>>
        %c0_i32_86 = arith.constant 0 : i32
        %c0_i32_87 = arith.constant 0 : i32
        %c0_i32_88 = arith.constant 0 : i32
        %c0_i32_89 = arith.constant 0 : i32
        %150 = tpu.memref_slice %arg4[%149, %c0_i32_89] : memref<64x256xf32, #tpu.memory_space<any>> -> memref<1x256xf32, #tpu.memory_space<any>>
        %151 = tpu.memref_squeeze %150 : memref<1x256xf32, #tpu.memory_space<any>> -> memref<256xf32, #tpu.memory_space<any>>
        %c0_i32_90 = arith.constant 0 : i32
        %152 = tpu.memref_slice %arg7[%c0_i32_86, %c0_i32_87, %145, %c0_i32_90] : memref<2x7x16x256xf32, #tpu.memory_space<vmem>> -> memref<1x1x1x256xf32, #tpu.memory_space<vmem>>
        %153 = tpu.memref_squeeze %152 : memref<1x1x1x256xf32, #tpu.memory_space<vmem>> -> memref<256xf32, #tpu.memory_space<vmem>>
        %154 = tpu.memref_slice %arg8[%c0_i32_88] : memref<2x!tpu.dma_semaphore, #tpu.memory_space<semaphore_mem>> -> memref<1x!tpu.dma_semaphore, #tpu.memory_space<semaphore_mem>>
        %155 = tpu.memref_squeeze %154 : memref<1x!tpu.dma_semaphore, #tpu.memory_space<semaphore_mem>> -> memref<!tpu.dma_semaphore, #tpu.memory_space<semaphore_mem>>
        tpu.enqueue_dma source(%151 : memref<256xf32, #tpu.memory_space<any>>) target(%153 : memref<256xf32, #tpu.memory_space<vmem>>) target_semaphore(%155 : memref<!tpu.dma_semaphore, #tpu.memory_space<semaphore_mem>>)
        %156 = arith.index_cast %146 : i32 to index
        %157 = memref.load %arg2[%156] : memref<48xi32, #tpu.memory_space<smem>>
        %c0_i32_91 = arith.constant 0 : i32
        %c1_i32_92 = arith.constant 1 : i32
        %c0_i32_93 = arith.constant 0 : i32
        %c0_i32_94 = arith.constant 0 : i32
        %158 = tpu.memref_slice %arg5[%157, %c0_i32_94] : memref<64x256xf32, #tpu.memory_space<any>> -> memref<1x256xf32, #tpu.memory_space<any>>
        %159 = tpu.memref_squeeze %158 : memref<1x256xf32, #tpu.memory_space<any>> -> memref<256xf32, #tpu.memory_space<any>>
        %c0_i32_95 = arith.constant 0 : i32
        %160 = tpu.memref_slice %arg7[%c0_i32_91, %c1_i32_92, %145, %c0_i32_95] : memref<2x7x16x256xf32, #tpu.memory_space<vmem>> -> memref<1x1x1x256xf32, #tpu.memory_space<vmem>>
        %161 = tpu.memref_squeeze %160 : memref<1x1x1x256xf32, #tpu.memory_space<vmem>> -> memref<256xf32, #tpu.memory_space<vmem>>
        %162 = tpu.memref_slice %arg8[%c0_i32_93] : memref<2x!tpu.dma_semaphore, #tpu.memory_space<semaphore_mem>> -> memref<1x!tpu.dma_semaphore, #tpu.memory_space<semaphore_mem>>
        %163 = tpu.memref_squeeze %162 : memref<1x!tpu.dma_semaphore, #tpu.memory_space<semaphore_mem>> -> memref<!tpu.dma_semaphore, #tpu.memory_space<semaphore_mem>>
        tpu.enqueue_dma source(%159 : memref<256xf32, #tpu.memory_space<any>>) target(%161 : memref<256xf32, #tpu.memory_space<vmem>>) target_semaphore(%163 : memref<!tpu.dma_semaphore, #tpu.memory_space<semaphore_mem>>)
        %c0_i32_96 = arith.constant 0 : i32
        %164 = arith.addi %147, %c0_i32_96 : i32
        %165 = arith.index_cast %164 : i32 to index
        %166 = memref.load %arg3[%165] : memref<240xi32, #tpu.memory_space<smem>>
        %c0_i32_97 = arith.constant 0 : i32
        %c2_i32_98 = arith.constant 2 : i32
        %c0_i32_99 = arith.constant 0 : i32
        %c0_i32_100 = arith.constant 0 : i32
        %167 = tpu.memref_slice %arg5[%166, %c0_i32_100] : memref<64x256xf32, #tpu.memory_space<any>> -> memref<1x256xf32, #tpu.memory_space<any>>
        %168 = tpu.memref_squeeze %167 : memref<1x256xf32, #tpu.memory_space<any>> -> memref<256xf32, #tpu.memory_space<any>>
        %c0_i32_101 = arith.constant 0 : i32
        %169 = tpu.memref_slice %arg7[%c0_i32_97, %c2_i32_98, %145, %c0_i32_101] : memref<2x7x16x256xf32, #tpu.memory_space<vmem>> -> memref<1x1x1x256xf32, #tpu.memory_space<vmem>>
        %170 = tpu.memref_squeeze %169 : memref<1x1x1x256xf32, #tpu.memory_space<vmem>> -> memref<256xf32, #tpu.memory_space<vmem>>
        %171 = tpu.memref_slice %arg8[%c0_i32_99] : memref<2x!tpu.dma_semaphore, #tpu.memory_space<semaphore_mem>> -> memref<1x!tpu.dma_semaphore, #tpu.memory_space<semaphore_mem>>
        %172 = tpu.memref_squeeze %171 : memref<1x!tpu.dma_semaphore, #tpu.memory_space<semaphore_mem>> -> memref<!tpu.dma_semaphore, #tpu.memory_space<semaphore_mem>>
        tpu.enqueue_dma source(%168 : memref<256xf32, #tpu.memory_space<any>>) target(%170 : memref<256xf32, #tpu.memory_space<vmem>>) target_semaphore(%172 : memref<!tpu.dma_semaphore, #tpu.memory_space<semaphore_mem>>)
        %c1_i32_102 = arith.constant 1 : i32
        %173 = arith.addi %147, %c1_i32_102 : i32
        %174 = arith.index_cast %173 : i32 to index
        %175 = memref.load %arg3[%174] : memref<240xi32, #tpu.memory_space<smem>>
        %c0_i32_103 = arith.constant 0 : i32
        %c3_i32_104 = arith.constant 3 : i32
        %c0_i32_105 = arith.constant 0 : i32
        %c0_i32_106 = arith.constant 0 : i32
        %176 = tpu.memref_slice %arg5[%175, %c0_i32_106] : memref<64x256xf32, #tpu.memory_space<any>> -> memref<1x256xf32, #tpu.memory_space<any>>
        %177 = tpu.memref_squeeze %176 : memref<1x256xf32, #tpu.memory_space<any>> -> memref<256xf32, #tpu.memory_space<any>>
        %c0_i32_107 = arith.constant 0 : i32
        %178 = tpu.memref_slice %arg7[%c0_i32_103, %c3_i32_104, %145, %c0_i32_107] : memref<2x7x16x256xf32, #tpu.memory_space<vmem>> -> memref<1x1x1x256xf32, #tpu.memory_space<vmem>>
        %179 = tpu.memref_squeeze %178 : memref<1x1x1x256xf32, #tpu.memory_space<vmem>> -> memref<256xf32, #tpu.memory_space<vmem>>
        %180 = tpu.memref_slice %arg8[%c0_i32_105] : memref<2x!tpu.dma_semaphore, #tpu.memory_space<semaphore_mem>> -> memref<1x!tpu.dma_semaphore, #tpu.memory_space<semaphore_mem>>
        %181 = tpu.memref_squeeze %180 : memref<1x!tpu.dma_semaphore, #tpu.memory_space<semaphore_mem>> -> memref<!tpu.dma_semaphore, #tpu.memory_space<semaphore_mem>>
        tpu.enqueue_dma source(%177 : memref<256xf32, #tpu.memory_space<any>>) target(%179 : memref<256xf32, #tpu.memory_space<vmem>>) target_semaphore(%181 : memref<!tpu.dma_semaphore, #tpu.memory_space<semaphore_mem>>)
        %c2_i32_108 = arith.constant 2 : i32
        %182 = arith.addi %147, %c2_i32_108 : i32
        %183 = arith.index_cast %182 : i32 to index
        %184 = memref.load %arg3[%183] : memref<240xi32, #tpu.memory_space<smem>>
        %c0_i32_109 = arith.constant 0 : i32
        %c4_i32_110 = arith.constant 4 : i32
        %c0_i32_111 = arith.constant 0 : i32
        %c0_i32_112 = arith.constant 0 : i32
        %185 = tpu.memref_slice %arg5[%184, %c0_i32_112] : memref<64x256xf32, #tpu.memory_space<any>> -> memref<1x256xf32, #tpu.memory_space<any>>
        %186 = tpu.memref_squeeze %185 : memref<1x256xf32, #tpu.memory_space<any>> -> memref<256xf32, #tpu.memory_space<any>>
        %c0_i32_113 = arith.constant 0 : i32
        %187 = tpu.memref_slice %arg7[%c0_i32_109, %c4_i32_110, %145, %c0_i32_113] : memref<2x7x16x256xf32, #tpu.memory_space<vmem>> -> memref<1x1x1x256xf32, #tpu.memory_space<vmem>>
        %188 = tpu.memref_squeeze %187 : memref<1x1x1x256xf32, #tpu.memory_space<vmem>> -> memref<256xf32, #tpu.memory_space<vmem>>
        %189 = tpu.memref_slice %arg8[%c0_i32_111] : memref<2x!tpu.dma_semaphore, #tpu.memory_space<semaphore_mem>> -> memref<1x!tpu.dma_semaphore, #tpu.memory_space<semaphore_mem>>
        %190 = tpu.memref_squeeze %189 : memref<1x!tpu.dma_semaphore, #tpu.memory_space<semaphore_mem>> -> memref<!tpu.dma_semaphore, #tpu.memory_space<semaphore_mem>>
        tpu.enqueue_dma source(%186 : memref<256xf32, #tpu.memory_space<any>>) target(%188 : memref<256xf32, #tpu.memory_space<vmem>>) target_semaphore(%190 : memref<!tpu.dma_semaphore, #tpu.memory_space<semaphore_mem>>)
        %c3_i32_114 = arith.constant 3 : i32
        %191 = arith.addi %147, %c3_i32_114 : i32
        %192 = arith.index_cast %191 : i32 to index
        %193 = memref.load %arg3[%192] : memref<240xi32, #tpu.memory_space<smem>>
        %c0_i32_115 = arith.constant 0 : i32
        %c5_i32_116 = arith.constant 5 : i32
        %c0_i32_117 = arith.constant 0 : i32
        %c0_i32_118 = arith.constant 0 : i32
        %194 = tpu.memref_slice %arg5[%193, %c0_i32_118] : memref<64x256xf32, #tpu.memory_space<any>> -> memref<1x256xf32, #tpu.memory_space<any>>
        %195 = tpu.memref_squeeze %194 : memref<1x256xf32, #tpu.memory_space<any>> -> memref<256xf32, #tpu.memory_space<any>>
        %c0_i32_119 = arith.constant 0 : i32
        %196 = tpu.memref_slice %arg7[%c0_i32_115, %c5_i32_116, %145, %c0_i32_119] : memref<2x7x16x256xf32, #tpu.memory_space<vmem>> -> memref<1x1x1x256xf32, #tpu.memory_space<vmem>>
        %197 = tpu.memref_squeeze %196 : memref<1x1x1x256xf32, #tpu.memory_space<vmem>> -> memref<256xf32, #tpu.memory_space<vmem>>
        %198 = tpu.memref_slice %arg8[%c0_i32_117] : memref<2x!tpu.dma_semaphore, #tpu.memory_space<semaphore_mem>> -> memref<1x!tpu.dma_semaphore, #tpu.memory_space<semaphore_mem>>
        %199 = tpu.memref_squeeze %198 : memref<1x!tpu.dma_semaphore, #tpu.memory_space<semaphore_mem>> -> memref<!tpu.dma_semaphore, #tpu.memory_space<semaphore_mem>>
        tpu.enqueue_dma source(%195 : memref<256xf32, #tpu.memory_space<any>>) target(%197 : memref<256xf32, #tpu.memory_space<vmem>>) target_semaphore(%199 : memref<!tpu.dma_semaphore, #tpu.memory_space<semaphore_mem>>)
        %c4_i32_120 = arith.constant 4 : i32
        %200 = arith.addi %147, %c4_i32_120 : i32
        %201 = arith.index_cast %200 : i32 to index
        %202 = memref.load %arg3[%201] : memref<240xi32, #tpu.memory_space<smem>>
        %c0_i32_121 = arith.constant 0 : i32
        %c6_i32_122 = arith.constant 6 : i32
        %c0_i32_123 = arith.constant 0 : i32
        %c0_i32_124 = arith.constant 0 : i32
        %203 = tpu.memref_slice %arg5[%202, %c0_i32_124] : memref<64x256xf32, #tpu.memory_space<any>> -> memref<1x256xf32, #tpu.memory_space<any>>
        %204 = tpu.memref_squeeze %203 : memref<1x256xf32, #tpu.memory_space<any>> -> memref<256xf32, #tpu.memory_space<any>>
        %c0_i32_125 = arith.constant 0 : i32
        %205 = tpu.memref_slice %arg7[%c0_i32_121, %c6_i32_122, %145, %c0_i32_125] : memref<2x7x16x256xf32, #tpu.memory_space<vmem>> -> memref<1x1x1x256xf32, #tpu.memory_space<vmem>>
        %206 = tpu.memref_squeeze %205 : memref<1x1x1x256xf32, #tpu.memory_space<vmem>> -> memref<256xf32, #tpu.memory_space<vmem>>
        %207 = tpu.memref_slice %arg8[%c0_i32_123] : memref<2x!tpu.dma_semaphore, #tpu.memory_space<semaphore_mem>> -> memref<1x!tpu.dma_semaphore, #tpu.memory_space<semaphore_mem>>
        %208 = tpu.memref_squeeze %207 : memref<1x!tpu.dma_semaphore, #tpu.memory_space<semaphore_mem>> -> memref<!tpu.dma_semaphore, #tpu.memory_space<semaphore_mem>>
        tpu.enqueue_dma source(%204 : memref<256xf32, #tpu.memory_space<any>>) target(%206 : memref<256xf32, #tpu.memory_space<vmem>>) target_semaphore(%208 : memref<!tpu.dma_semaphore, #tpu.memory_space<semaphore_mem>>)
        %c4_i32_126 = arith.constant 4 : i32
        %209 = arith.muli %78, %c4_i32_126 : i32
        %c2_i32_127 = arith.constant 2 : i32
        %210 = arith.addi %209, %c2_i32_127 : i32
        %c0_i32_128 = arith.constant 0 : i32
        %211 = arith.addi %c0_i32_128, %210 : i32
        %c5_i32_129 = arith.constant 5 : i32
        %212 = arith.muli %211, %c5_i32_129 : i32
        %213 = arith.index_cast %211 : i32 to index
        %214 = memref.load %arg1[%213] : memref<48xi32, #tpu.memory_space<smem>>
        %c0_i32_130 = arith.constant 0 : i32
        %c0_i32_131 = arith.constant 0 : i32
        %c0_i32_132 = arith.constant 0 : i32
        %c0_i32_133 = arith.constant 0 : i32
        %215 = tpu.memref_slice %arg4[%214, %c0_i32_133] : memref<64x256xf32, #tpu.memory_space<any>> -> memref<1x256xf32, #tpu.memory_space<any>>
        %216 = tpu.memref_squeeze %215 : memref<1x256xf32, #tpu.memory_space<any>> -> memref<256xf32, #tpu.memory_space<any>>
        %c0_i32_134 = arith.constant 0 : i32
        %217 = tpu.memref_slice %arg7[%c0_i32_130, %c0_i32_131, %210, %c0_i32_134] : memref<2x7x16x256xf32, #tpu.memory_space<vmem>> -> memref<1x1x1x256xf32, #tpu.memory_space<vmem>>
        %218 = tpu.memref_squeeze %217 : memref<1x1x1x256xf32, #tpu.memory_space<vmem>> -> memref<256xf32, #tpu.memory_space<vmem>>
        %219 = tpu.memref_slice %arg8[%c0_i32_132] : memref<2x!tpu.dma_semaphore, #tpu.memory_space<semaphore_mem>> -> memref<1x!tpu.dma_semaphore, #tpu.memory_space<semaphore_mem>>
        %220 = tpu.memref_squeeze %219 : memref<1x!tpu.dma_semaphore, #tpu.memory_space<semaphore_mem>> -> memref<!tpu.dma_semaphore, #tpu.memory_space<semaphore_mem>>
        tpu.enqueue_dma source(%216 : memref<256xf32, #tpu.memory_space<any>>) target(%218 : memref<256xf32, #tpu.memory_space<vmem>>) target_semaphore(%220 : memref<!tpu.dma_semaphore, #tpu.memory_space<semaphore_mem>>)
        %221 = arith.index_cast %211 : i32 to index
        %222 = memref.load %arg2[%221] : memref<48xi32, #tpu.memory_space<smem>>
        %c0_i32_135 = arith.constant 0 : i32
        %c1_i32_136 = arith.constant 1 : i32
        %c0_i32_137 = arith.constant 0 : i32
        %c0_i32_138 = arith.constant 0 : i32
        %223 = tpu.memref_slice %arg5[%222, %c0_i32_138] : memref<64x256xf32, #tpu.memory_space<any>> -> memref<1x256xf32, #tpu.memory_space<any>>
        %224 = tpu.memref_squeeze %223 : memref<1x256xf32, #tpu.memory_space<any>> -> memref<256xf32, #tpu.memory_space<any>>
        %c0_i32_139 = arith.constant 0 : i32
        %225 = tpu.memref_slice %arg7[%c0_i32_135, %c1_i32_136, %210, %c0_i32_139] : memref<2x7x16x256xf32, #tpu.memory_space<vmem>> -> memref<1x1x1x256xf32, #tpu.memory_space<vmem>>
        %226 = tpu.memref_squeeze %225 : memref<1x1x1x256xf32, #tpu.memory_space<vmem>> -> memref<256xf32, #tpu.memory_space<vmem>>
        %227 = tpu.memref_slice %arg8[%c0_i32_137] : memref<2x!tpu.dma_semaphore, #tpu.memory_space<semaphore_mem>> -> memref<1x!tpu.dma_semaphore, #tpu.memory_space<semaphore_mem>>
        %228 = tpu.memref_squeeze %227 : memref<1x!tpu.dma_semaphore, #tpu.memory_space<semaphore_mem>> -> memref<!tpu.dma_semaphore, #tpu.memory_space<semaphore_mem>>
        tpu.enqueue_dma source(%224 : memref<256xf32, #tpu.memory_space<any>>) target(%226 : memref<256xf32, #tpu.memory_space<vmem>>) target_semaphore(%228 : memref<!tpu.dma_semaphore, #tpu.memory_space<semaphore_mem>>)
        %c0_i32_140 = arith.constant 0 : i32
        %229 = arith.addi %212, %c0_i32_140 : i32
        %230 = arith.index_cast %229 : i32 to index
        %231 = memref.load %arg3[%230] : memref<240xi32, #tpu.memory_space<smem>>
        %c0_i32_141 = arith.constant 0 : i32
        %c2_i32_142 = arith.constant 2 : i32
        %c0_i32_143 = arith.constant 0 : i32
        %c0_i32_144 = arith.constant 0 : i32
        %232 = tpu.memref_slice %arg5[%231, %c0_i32_144] : memref<64x256xf32, #tpu.memory_space<any>> -> memref<1x256xf32, #tpu.memory_space<any>>
        %233 = tpu.memref_squeeze %232 : memref<1x256xf32, #tpu.memory_space<any>> -> memref<256xf32, #tpu.memory_space<any>>
        %c0_i32_145 = arith.constant 0 : i32
        %234 = tpu.memref_slice %arg7[%c0_i32_141, %c2_i32_142, %210, %c0_i32_145] : memref<2x7x16x256xf32, #tpu.memory_space<vmem>> -> memref<1x1x1x256xf32, #tpu.memory_space<vmem>>
        %235 = tpu.memref_squeeze %234 : memref<1x1x1x256xf32, #tpu.memory_space<vmem>> -> memref<256xf32, #tpu.memory_space<vmem>>
        %236 = tpu.memref_slice %arg8[%c0_i32_143] : memref<2x!tpu.dma_semaphore, #tpu.memory_space<semaphore_mem>> -> memref<1x!tpu.dma_semaphore, #tpu.memory_space<semaphore_mem>>
        %237 = tpu.memref_squeeze %236 : memref<1x!tpu.dma_semaphore, #tpu.memory_space<semaphore_mem>> -> memref<!tpu.dma_semaphore, #tpu.memory_space<semaphore_mem>>
        tpu.enqueue_dma source(%233 : memref<256xf32, #tpu.memory_space<any>>) target(%235 : memref<256xf32, #tpu.memory_space<vmem>>) target_semaphore(%237 : memref<!tpu.dma_semaphore, #tpu.memory_space<semaphore_mem>>)
        %c1_i32_146 = arith.constant 1 : i32
        %238 = arith.addi %212, %c1_i32_146 : i32
        %239 = arith.index_cast %238 : i32 to index
        %240 = memref.load %arg3[%239] : memref<240xi32, #tpu.memory_space<smem>>
        %c0_i32_147 = arith.constant 0 : i32
        %c3_i32_148 = arith.constant 3 : i32
        %c0_i32_149 = arith.constant 0 : i32
        %c0_i32_150 = arith.constant 0 : i32
        %241 = tpu.memref_slice %arg5[%240, %c0_i32_150] : memref<64x256xf32, #tpu.memory_space<any>> -> memref<1x256xf32, #tpu.memory_space<any>>
        %242 = tpu.memref_squeeze %241 : memref<1x256xf32, #tpu.memory_space<any>> -> memref<256xf32, #tpu.memory_space<any>>
        %c0_i32_151 = arith.constant 0 : i32
        %243 = tpu.memref_slice %arg7[%c0_i32_147, %c3_i32_148, %210, %c0_i32_151] : memref<2x7x16x256xf32, #tpu.memory_space<vmem>> -> memref<1x1x1x256xf32, #tpu.memory_space<vmem>>
        %244 = tpu.memref_squeeze %243 : memref<1x1x1x256xf32, #tpu.memory_space<vmem>> -> memref<256xf32, #tpu.memory_space<vmem>>
        %245 = tpu.memref_slice %arg8[%c0_i32_149] : memref<2x!tpu.dma_semaphore, #tpu.memory_space<semaphore_mem>> -> memref<1x!tpu.dma_semaphore, #tpu.memory_space<semaphore_mem>>
        %246 = tpu.memref_squeeze %245 : memref<1x!tpu.dma_semaphore, #tpu.memory_space<semaphore_mem>> -> memref<!tpu.dma_semaphore, #tpu.memory_space<semaphore_mem>>
        tpu.enqueue_dma source(%242 : memref<256xf32, #tpu.memory_space<any>>) target(%244 : memref<256xf32, #tpu.memory_space<vmem>>) target_semaphore(%246 : memref<!tpu.dma_semaphore, #tpu.memory_space<semaphore_mem>>)
        %c2_i32_152 = arith.constant 2 : i32
        %247 = arith.addi %212, %c2_i32_152 : i32
        %248 = arith.index_cast %247 : i32 to index
        %249 = memref.load %arg3[%248] : memref<240xi32, #tpu.memory_space<smem>>
        %c0_i32_153 = arith.constant 0 : i32
        %c4_i32_154 = arith.constant 4 : i32
        %c0_i32_155 = arith.constant 0 : i32
        %c0_i32_156 = arith.constant 0 : i32
        %250 = tpu.memref_slice %arg5[%249, %c0_i32_156] : memref<64x256xf32, #tpu.memory_space<any>> -> memref<1x256xf32, #tpu.memory_space<any>>
        %251 = tpu.memref_squeeze %250 : memref<1x256xf32, #tpu.memory_space<any>> -> memref<256xf32, #tpu.memory_space<any>>
        %c0_i32_157 = arith.constant 0 : i32
        %252 = tpu.memref_slice %arg7[%c0_i32_153, %c4_i32_154, %210, %c0_i32_157] : memref<2x7x16x256xf32, #tpu.memory_space<vmem>> -> memref<1x1x1x256xf32, #tpu.memory_space<vmem>>
        %253 = tpu.memref_squeeze %252 : memref<1x1x1x256xf32, #tpu.memory_space<vmem>> -> memref<256xf32, #tpu.memory_space<vmem>>
        %254 = tpu.memref_slice %arg8[%c0_i32_155] : memref<2x!tpu.dma_semaphore, #tpu.memory_space<semaphore_mem>> -> memref<1x!tpu.dma_semaphore, #tpu.memory_space<semaphore_mem>>
        %255 = tpu.memref_squeeze %254 : memref<1x!tpu.dma_semaphore, #tpu.memory_space<semaphore_mem>> -> memref<!tpu.dma_semaphore, #tpu.memory_space<semaphore_mem>>
        tpu.enqueue_dma source(%251 : memref<256xf32, #tpu.memory_space<any>>) target(%253 : memref<256xf32, #tpu.memory_space<vmem>>) target_semaphore(%255 : memref<!tpu.dma_semaphore, #tpu.memory_space<semaphore_mem>>)
        %c3_i32_158 = arith.constant 3 : i32
        %256 = arith.addi %212, %c3_i32_158 : i32
        %257 = arith.index_cast %256 : i32 to index
        %258 = memref.load %arg3[%257] : memref<240xi32, #tpu.memory_space<smem>>
        %c0_i32_159 = arith.constant 0 : i32
        %c5_i32_160 = arith.constant 5 : i32
        %c0_i32_161 = arith.constant 0 : i32
        %c0_i32_162 = arith.constant 0 : i32
        %259 = tpu.memref_slice %arg5[%258, %c0_i32_162] : memref<64x256xf32, #tpu.memory_space<any>> -> memref<1x256xf32, #tpu.memory_space<any>>
        %260 = tpu.memref_squeeze %259 : memref<1x256xf32, #tpu.memory_space<any>> -> memref<256xf32, #tpu.memory_space<any>>
        %c0_i32_163 = arith.constant 0 : i32
        %261 = tpu.memref_slice %arg7[%c0_i32_159, %c5_i32_160, %210, %c0_i32_163] : memref<2x7x16x256xf32, #tpu.memory_space<vmem>> -> memref<1x1x1x256xf32, #tpu.memory_space<vmem>>
        %262 = tpu.memref_squeeze %261 : memref<1x1x1x256xf32, #tpu.memory_space<vmem>> -> memref<256xf32, #tpu.memory_space<vmem>>
        %263 = tpu.memref_slice %arg8[%c0_i32_161] : memref<2x!tpu.dma_semaphore, #tpu.memory_space<semaphore_mem>> -> memref<1x!tpu.dma_semaphore, #tpu.memory_space<semaphore_mem>>
        %264 = tpu.memref_squeeze %263 : memref<1x!tpu.dma_semaphore, #tpu.memory_space<semaphore_mem>> -> memref<!tpu.dma_semaphore, #tpu.memory_space<semaphore_mem>>
        tpu.enqueue_dma source(%260 : memref<256xf32, #tpu.memory_space<any>>) target(%262 : memref<256xf32, #tpu.memory_space<vmem>>) target_semaphore(%264 : memref<!tpu.dma_semaphore, #tpu.memory_space<semaphore_mem>>)
        %c4_i32_164 = arith.constant 4 : i32
        %265 = arith.addi %212, %c4_i32_164 : i32
        %266 = arith.index_cast %265 : i32 to index
        %267 = memref.load %arg3[%266] : memref<240xi32, #tpu.memory_space<smem>>
        %c0_i32_165 = arith.constant 0 : i32
        %c6_i32_166 = arith.constant 6 : i32
        %c0_i32_167 = arith.constant 0 : i32
        %c0_i32_168 = arith.constant 0 : i32
        %268 = tpu.memref_slice %arg5[%267, %c0_i32_168] : memref<64x256xf32, #tpu.memory_space<any>> -> memref<1x256xf32, #tpu.memory_space<any>>
        %269 = tpu.memref_squeeze %268 : memref<1x256xf32, #tpu.memory_space<any>> -> memref<256xf32, #tpu.memory_space<any>>
        %c0_i32_169 = arith.constant 0 : i32
        %270 = tpu.memref_slice %arg7[%c0_i32_165, %c6_i32_166, %210, %c0_i32_169] : memref<2x7x16x256xf32, #tpu.memory_space<vmem>> -> memref<1x1x1x256xf32, #tpu.memory_space<vmem>>
        %271 = tpu.memref_squeeze %270 : memref<1x1x1x256xf32, #tpu.memory_space<vmem>> -> memref<256xf32, #tpu.memory_space<vmem>>
        %272 = tpu.memref_slice %arg8[%c0_i32_167] : memref<2x!tpu.dma_semaphore, #tpu.memory_space<semaphore_mem>> -> memref<1x!tpu.dma_semaphore, #tpu.memory_space<semaphore_mem>>
        %273 = tpu.memref_squeeze %272 : memref<1x!tpu.dma_semaphore, #tpu.memory_space<semaphore_mem>> -> memref<!tpu.dma_semaphore, #tpu.memory_space<semaphore_mem>>
        tpu.enqueue_dma source(%269 : memref<256xf32, #tpu.memory_space<any>>) target(%271 : memref<256xf32, #tpu.memory_space<vmem>>) target_semaphore(%273 : memref<!tpu.dma_semaphore, #tpu.memory_space<semaphore_mem>>)
        %c4_i32_170 = arith.constant 4 : i32
        %274 = arith.muli %78, %c4_i32_170 : i32
        %c3_i32_171 = arith.constant 3 : i32
        %275 = arith.addi %274, %c3_i32_171 : i32
        %c0_i32_172 = arith.constant 0 : i32
        %276 = arith.addi %c0_i32_172, %275 : i32
        %c5_i32_173 = arith.constant 5 : i32
        %277 = arith.muli %276, %c5_i32_173 : i32
        %278 = arith.index_cast %276 : i32 to index
        %279 = memref.load %arg1[%278] : memref<48xi32, #tpu.memory_space<smem>>
        %c0_i32_174 = arith.constant 0 : i32
        %c0_i32_175 = arith.constant 0 : i32
        %c0_i32_176 = arith.constant 0 : i32
        %c0_i32_177 = arith.constant 0 : i32
        %280 = tpu.memref_slice %arg4[%279, %c0_i32_177] : memref<64x256xf32, #tpu.memory_space<any>> -> memref<1x256xf32, #tpu.memory_space<any>>
        %281 = tpu.memref_squeeze %280 : memref<1x256xf32, #tpu.memory_space<any>> -> memref<256xf32, #tpu.memory_space<any>>
        %c0_i32_178 = arith.constant 0 : i32
        %282 = tpu.memref_slice %arg7[%c0_i32_174, %c0_i32_175, %275, %c0_i32_178] : memref<2x7x16x256xf32, #tpu.memory_space<vmem>> -> memref<1x1x1x256xf32, #tpu.memory_space<vmem>>
        %283 = tpu.memref_squeeze %282 : memref<1x1x1x256xf32, #tpu.memory_space<vmem>> -> memref<256xf32, #tpu.memory_space<vmem>>
        %284 = tpu.memref_slice %arg8[%c0_i32_176] : memref<2x!tpu.dma_semaphore, #tpu.memory_space<semaphore_mem>> -> memref<1x!tpu.dma_semaphore, #tpu.memory_space<semaphore_mem>>
        %285 = tpu.memref_squeeze %284 : memref<1x!tpu.dma_semaphore, #tpu.memory_space<semaphore_mem>> -> memref<!tpu.dma_semaphore, #tpu.memory_space<semaphore_mem>>
        tpu.enqueue_dma source(%281 : memref<256xf32, #tpu.memory_space<any>>) target(%283 : memref<256xf32, #tpu.memory_space<vmem>>) target_semaphore(%285 : memref<!tpu.dma_semaphore, #tpu.memory_space<semaphore_mem>>)
        %286 = arith.index_cast %276 : i32 to index
        %287 = memref.load %arg2[%286] : memref<48xi32, #tpu.memory_space<smem>>
        %c0_i32_179 = arith.constant 0 : i32
        %c1_i32_180 = arith.constant 1 : i32
        %c0_i32_181 = arith.constant 0 : i32
        %c0_i32_182 = arith.constant 0 : i32
        %288 = tpu.memref_slice %arg5[%287, %c0_i32_182] : memref<64x256xf32, #tpu.memory_space<any>> -> memref<1x256xf32, #tpu.memory_space<any>>
        %289 = tpu.memref_squeeze %288 : memref<1x256xf32, #tpu.memory_space<any>> -> memref<256xf32, #tpu.memory_space<any>>
        %c0_i32_183 = arith.constant 0 : i32
        %290 = tpu.memref_slice %arg7[%c0_i32_179, %c1_i32_180, %275, %c0_i32_183] : memref<2x7x16x256xf32, #tpu.memory_space<vmem>> -> memref<1x1x1x256xf32, #tpu.memory_space<vmem>>
        %291 = tpu.memref_squeeze %290 : memref<1x1x1x256xf32, #tpu.memory_space<vmem>> -> memref<256xf32, #tpu.memory_space<vmem>>
        %292 = tpu.memref_slice %arg8[%c0_i32_181] : memref<2x!tpu.dma_semaphore, #tpu.memory_space<semaphore_mem>> -> memref<1x!tpu.dma_semaphore, #tpu.memory_space<semaphore_mem>>
        %293 = tpu.memref_squeeze %292 : memref<1x!tpu.dma_semaphore, #tpu.memory_space<semaphore_mem>> -> memref<!tpu.dma_semaphore, #tpu.memory_space<semaphore_mem>>
        tpu.enqueue_dma source(%289 : memref<256xf32, #tpu.memory_space<any>>) target(%291 : memref<256xf32, #tpu.memory_space<vmem>>) target_semaphore(%293 : memref<!tpu.dma_semaphore, #tpu.memory_space<semaphore_mem>>)
        %c0_i32_184 = arith.constant 0 : i32
        %294 = arith.addi %277, %c0_i32_184 : i32
        %295 = arith.index_cast %294 : i32 to index
        %296 = memref.load %arg3[%295] : memref<240xi32, #tpu.memory_space<smem>>
        %c0_i32_185 = arith.constant 0 : i32
        %c2_i32_186 = arith.constant 2 : i32
        %c0_i32_187 = arith.constant 0 : i32
        %c0_i32_188 = arith.constant 0 : i32
        %297 = tpu.memref_slice %arg5[%296, %c0_i32_188] : memref<64x256xf32, #tpu.memory_space<any>> -> memref<1x256xf32, #tpu.memory_space<any>>
        %298 = tpu.memref_squeeze %297 : memref<1x256xf32, #tpu.memory_space<any>> -> memref<256xf32, #tpu.memory_space<any>>
        %c0_i32_189 = arith.constant 0 : i32
        %299 = tpu.memref_slice %arg7[%c0_i32_185, %c2_i32_186, %275, %c0_i32_189] : memref<2x7x16x256xf32, #tpu.memory_space<vmem>> -> memref<1x1x1x256xf32, #tpu.memory_space<vmem>>
        %300 = tpu.memref_squeeze %299 : memref<1x1x1x256xf32, #tpu.memory_space<vmem>> -> memref<256xf32, #tpu.memory_space<vmem>>
        %301 = tpu.memref_slice %arg8[%c0_i32_187] : memref<2x!tpu.dma_semaphore, #tpu.memory_space<semaphore_mem>> -> memref<1x!tpu.dma_semaphore, #tpu.memory_space<semaphore_mem>>
        %302 = tpu.memref_squeeze %301 : memref<1x!tpu.dma_semaphore, #tpu.memory_space<semaphore_mem>> -> memref<!tpu.dma_semaphore, #tpu.memory_space<semaphore_mem>>
        tpu.enqueue_dma source(%298 : memref<256xf32, #tpu.memory_space<any>>) target(%300 : memref<256xf32, #tpu.memory_space<vmem>>) target_semaphore(%302 : memref<!tpu.dma_semaphore, #tpu.memory_space<semaphore_mem>>)
        %c1_i32_190 = arith.constant 1 : i32
        %303 = arith.addi %277, %c1_i32_190 : i32
        %304 = arith.index_cast %303 : i32 to index
        %305 = memref.load %arg3[%304] : memref<240xi32, #tpu.memory_space<smem>>
        %c0_i32_191 = arith.constant 0 : i32
        %c3_i32_192 = arith.constant 3 : i32
        %c0_i32_193 = arith.constant 0 : i32
        %c0_i32_194 = arith.constant 0 : i32
        %306 = tpu.memref_slice %arg5[%305, %c0_i32_194] : memref<64x256xf32, #tpu.memory_space<any>> -> memref<1x256xf32, #tpu.memory_space<any>>
        %307 = tpu.memref_squeeze %306 : memref<1x256xf32, #tpu.memory_space<any>> -> memref<256xf32, #tpu.memory_space<any>>
        %c0_i32_195 = arith.constant 0 : i32
        %308 = tpu.memref_slice %arg7[%c0_i32_191, %c3_i32_192, %275, %c0_i32_195] : memref<2x7x16x256xf32, #tpu.memory_space<vmem>> -> memref<1x1x1x256xf32, #tpu.memory_space<vmem>>
        %309 = tpu.memref_squeeze %308 : memref<1x1x1x256xf32, #tpu.memory_space<vmem>> -> memref<256xf32, #tpu.memory_space<vmem>>
        %310 = tpu.memref_slice %arg8[%c0_i32_193] : memref<2x!tpu.dma_semaphore, #tpu.memory_space<semaphore_mem>> -> memref<1x!tpu.dma_semaphore, #tpu.memory_space<semaphore_mem>>
        %311 = tpu.memref_squeeze %310 : memref<1x!tpu.dma_semaphore, #tpu.memory_space<semaphore_mem>> -> memref<!tpu.dma_semaphore, #tpu.memory_space<semaphore_mem>>
        tpu.enqueue_dma source(%307 : memref<256xf32, #tpu.memory_space<any>>) target(%309 : memref<256xf32, #tpu.memory_space<vmem>>) target_semaphore(%311 : memref<!tpu.dma_semaphore, #tpu.memory_space<semaphore_mem>>)
        %c2_i32_196 = arith.constant 2 : i32
        %312 = arith.addi %277, %c2_i32_196 : i32
        %313 = arith.index_cast %312 : i32 to index
        %314 = memref.load %arg3[%313] : memref<240xi32, #tpu.memory_space<smem>>
        %c0_i32_197 = arith.constant 0 : i32
        %c4_i32_198 = arith.constant 4 : i32
        %c0_i32_199 = arith.constant 0 : i32
        %c0_i32_200 = arith.constant 0 : i32
        %315 = tpu.memref_slice %arg5[%314, %c0_i32_200] : memref<64x256xf32, #tpu.memory_space<any>> -> memref<1x256xf32, #tpu.memory_space<any>>
        %316 = tpu.memref_squeeze %315 : memref<1x256xf32, #tpu.memory_space<any>> -> memref<256xf32, #tpu.memory_space<any>>
        %c0_i32_201 = arith.constant 0 : i32
        %317 = tpu.memref_slice %arg7[%c0_i32_197, %c4_i32_198, %275, %c0_i32_201] : memref<2x7x16x256xf32, #tpu.memory_space<vmem>> -> memref<1x1x1x256xf32, #tpu.memory_space<vmem>>
        %318 = tpu.memref_squeeze %317 : memref<1x1x1x256xf32, #tpu.memory_space<vmem>> -> memref<256xf32, #tpu.memory_space<vmem>>
        %319 = tpu.memref_slice %arg8[%c0_i32_199] : memref<2x!tpu.dma_semaphore, #tpu.memory_space<semaphore_mem>> -> memref<1x!tpu.dma_semaphore, #tpu.memory_space<semaphore_mem>>
        %320 = tpu.memref_squeeze %319 : memref<1x!tpu.dma_semaphore, #tpu.memory_space<semaphore_mem>> -> memref<!tpu.dma_semaphore, #tpu.memory_space<semaphore_mem>>
        tpu.enqueue_dma source(%316 : memref<256xf32, #tpu.memory_space<any>>) target(%318 : memref<256xf32, #tpu.memory_space<vmem>>) target_semaphore(%320 : memref<!tpu.dma_semaphore, #tpu.memory_space<semaphore_mem>>)
        %c3_i32_202 = arith.constant 3 : i32
        %321 = arith.addi %277, %c3_i32_202 : i32
        %322 = arith.index_cast %321 : i32 to index
        %323 = memref.load %arg3[%322] : memref<240xi32, #tpu.memory_space<smem>>
        %c0_i32_203 = arith.constant 0 : i32
        %c5_i32_204 = arith.constant 5 : i32
        %c0_i32_205 = arith.constant 0 : i32
        %c0_i32_206 = arith.constant 0 : i32
        %324 = tpu.memref_slice %arg5[%323, %c0_i32_206] : memref<64x256xf32, #tpu.memory_space<any>> -> memref<1x256xf32, #tpu.memory_space<any>>
        %325 = tpu.memref_squeeze %324 : memref<1x256xf32, #tpu.memory_space<any>> -> memref<256xf32, #tpu.memory_space<any>>
        %c0_i32_207 = arith.constant 0 : i32
        %326 = tpu.memref_slice %arg7[%c0_i32_203, %c5_i32_204, %275, %c0_i32_207] : memref<2x7x16x256xf32, #tpu.memory_space<vmem>> -> memref<1x1x1x256xf32, #tpu.memory_space<vmem>>
        %327 = tpu.memref_squeeze %326 : memref<1x1x1x256xf32, #tpu.memory_space<vmem>> -> memref<256xf32, #tpu.memory_space<vmem>>
        %328 = tpu.memref_slice %arg8[%c0_i32_205] : memref<2x!tpu.dma_semaphore, #tpu.memory_space<semaphore_mem>> -> memref<1x!tpu.dma_semaphore, #tpu.memory_space<semaphore_mem>>
        %329 = tpu.memref_squeeze %328 : memref<1x!tpu.dma_semaphore, #tpu.memory_space<semaphore_mem>> -> memref<!tpu.dma_semaphore, #tpu.memory_space<semaphore_mem>>
        tpu.enqueue_dma source(%325 : memref<256xf32, #tpu.memory_space<any>>) target(%327 : memref<256xf32, #tpu.memory_space<vmem>>) target_semaphore(%329 : memref<!tpu.dma_semaphore, #tpu.memory_space<semaphore_mem>>)
        %c4_i32_208 = arith.constant 4 : i32
        %330 = arith.addi %277, %c4_i32_208 : i32
        %331 = arith.index_cast %330 : i32 to index
        %332 = memref.load %arg3[%331] : memref<240xi32, #tpu.memory_space<smem>>
        %c0_i32_209 = arith.constant 0 : i32
        %c6_i32_210 = arith.constant 6 : i32
        %c0_i32_211 = arith.constant 0 : i32
        %c0_i32_212 = arith.constant 0 : i32
        %333 = tpu.memref_slice %arg5[%332, %c0_i32_212] : memref<64x256xf32, #tpu.memory_space<any>> -> memref<1x256xf32, #tpu.memory_space<any>>
        %334 = tpu.memref_squeeze %333 : memref<1x256xf32, #tpu.memory_space<any>> -> memref<256xf32, #tpu.memory_space<any>>
        %c0_i32_213 = arith.constant 0 : i32
        %335 = tpu.memref_slice %arg7[%c0_i32_209, %c6_i32_210, %275, %c0_i32_213] : memref<2x7x16x256xf32, #tpu.memory_space<vmem>> -> memref<1x1x1x256xf32, #tpu.memory_space<vmem>>
        %336 = tpu.memref_squeeze %335 : memref<1x1x1x256xf32, #tpu.memory_space<vmem>> -> memref<256xf32, #tpu.memory_space<vmem>>
        %337 = tpu.memref_slice %arg8[%c0_i32_211] : memref<2x!tpu.dma_semaphore, #tpu.memory_space<semaphore_mem>> -> memref<1x!tpu.dma_semaphore, #tpu.memory_space<semaphore_mem>>
        %338 = tpu.memref_squeeze %337 : memref<1x!tpu.dma_semaphore, #tpu.memory_space<semaphore_mem>> -> memref<!tpu.dma_semaphore, #tpu.memory_space<semaphore_mem>>
        tpu.enqueue_dma source(%334 : memref<256xf32, #tpu.memory_space<any>>) target(%336 : memref<256xf32, #tpu.memory_space<vmem>>) target_semaphore(%338 : memref<!tpu.dma_semaphore, #tpu.memory_space<semaphore_mem>>)
      }
      %c4_i32_37 = arith.constant 4 : i32
    } else {
    }
    %c1_i32_6 = arith.constant 1 : i32
    %14 = arith.addi %arg0, %c1_i32_6 : i32
    %c3_i32 = arith.constant 3 : i32
    %15 = arith.cmpi slt, %14, %c3_i32 : i32
    %16 = arith.extui %15 : i1 to i32
    %c0_i32_7 = arith.constant 0 : i32
    %17 = arith.cmpi ne, %16, %c0_i32_7 : i32
    scf.if %17 {
      %c1_i32_32 = arith.constant 1 : i32
      %74 = arith.addi %arg0, %c1_i32_32 : i32
      %c16_i32_33 = arith.constant 16 : i32
      %75 = arith.muli %74, %c16_i32_33 : i32
      %c0_i32_34 = arith.constant 0 : i32
      %c4_i32 = arith.constant 4 : i32
      %76 = arith.addi %c0_i32_34, %c4_i32 : i32
      %c1_i32_35 = arith.constant 1 : i32
      scf.for %arg10 = %c0_i32_34 to %76 step %c1_i32_35  : i32 {
        %c1_i32_37 = arith.constant 1 : i32
        %77 = arith.muli %arg10, %c1_i32_37 : i32
        %c0_i32_38 = arith.constant 0 : i32
        %78 = arith.addi %c0_i32_38, %77 : i32
        %c4_i32_39 = arith.constant 4 : i32
        %79 = arith.muli %78, %c4_i32_39 : i32
        %c0_i32_40 = arith.constant 0 : i32
        %80 = arith.addi %79, %c0_i32_40 : i32
        %81 = arith.addi %75, %80 : i32
        %c5_i32 = arith.constant 5 : i32
        %82 = arith.muli %81, %c5_i32 : i32
        %83 = arith.index_cast %81 : i32 to index
        %84 = memref.load %arg1[%83] : memref<48xi32, #tpu.memory_space<smem>>
        %c0_i32_41 = arith.constant 0 : i32
        %c0_i32_42 = arith.constant 0 : i32
        %85 = tpu.memref_slice %arg4[%84, %c0_i32_42] : memref<64x256xf32, #tpu.memory_space<any>> -> memref<1x256xf32, #tpu.memory_space<any>>
        %86 = tpu.memref_squeeze %85 : memref<1x256xf32, #tpu.memory_space<any>> -> memref<256xf32, #tpu.memory_space<any>>
        %c0_i32_43 = arith.constant 0 : i32
        %87 = tpu.memref_slice %arg7[%10, %c0_i32_41, %80, %c0_i32_43] : memref<2x7x16x256xf32, #tpu.memory_space<vmem>> -> memref<1x1x1x256xf32, #tpu.memory_space<vmem>>
        %88 = tpu.memref_squeeze %87 : memref<1x1x1x256xf32, #tpu.memory_space<vmem>> -> memref<256xf32, #tpu.memory_space<vmem>>
        %89 = tpu.memref_slice %arg8[%10] : memref<2x!tpu.dma_semaphore, #tpu.memory_space<semaphore_mem>> -> memref<1x!tpu.dma_semaphore, #tpu.memory_space<semaphore_mem>>
        %90 = tpu.memref_squeeze %89 : memref<1x!tpu.dma_semaphore, #tpu.memory_space<semaphore_mem>> -> memref<!tpu.dma_semaphore, #tpu.memory_space<semaphore_mem>>
        tpu.enqueue_dma source(%86 : memref<256xf32, #tpu.memory_space<any>>) target(%88 : memref<256xf32, #tpu.memory_space<vmem>>) target_semaphore(%90 : memref<!tpu.dma_semaphore, #tpu.memory_space<semaphore_mem>>)
        %91 = arith.index_cast %81 : i32 to index
        %92 = memref.load %arg2[%91] : memref<48xi32, #tpu.memory_space<smem>>
        %c1_i32_44 = arith.constant 1 : i32
        %c0_i32_45 = arith.constant 0 : i32
        %93 = tpu.memref_slice %arg5[%92, %c0_i32_45] : memref<64x256xf32, #tpu.memory_space<any>> -> memref<1x256xf32, #tpu.memory_space<any>>
        %94 = tpu.memref_squeeze %93 : memref<1x256xf32, #tpu.memory_space<any>> -> memref<256xf32, #tpu.memory_space<any>>
        %c0_i32_46 = arith.constant 0 : i32
        %95 = tpu.memref_slice %arg7[%10, %c1_i32_44, %80, %c0_i32_46] : memref<2x7x16x256xf32, #tpu.memory_space<vmem>> -> memref<1x1x1x256xf32, #tpu.memory_space<vmem>>
        %96 = tpu.memref_squeeze %95 : memref<1x1x1x256xf32, #tpu.memory_space<vmem>> -> memref<256xf32, #tpu.memory_space<vmem>>
        %97 = tpu.memref_slice %arg8[%10] : memref<2x!tpu.dma_semaphore, #tpu.memory_space<semaphore_mem>> -> memref<1x!tpu.dma_semaphore, #tpu.memory_space<semaphore_mem>>
        %98 = tpu.memref_squeeze %97 : memref<1x!tpu.dma_semaphore, #tpu.memory_space<semaphore_mem>> -> memref<!tpu.dma_semaphore, #tpu.memory_space<semaphore_mem>>
        tpu.enqueue_dma source(%94 : memref<256xf32, #tpu.memory_space<any>>) target(%96 : memref<256xf32, #tpu.memory_space<vmem>>) target_semaphore(%98 : memref<!tpu.dma_semaphore, #tpu.memory_space<semaphore_mem>>)
        %c0_i32_47 = arith.constant 0 : i32
        %99 = arith.addi %82, %c0_i32_47 : i32
        %100 = arith.index_cast %99 : i32 to index
        %101 = memref.load %arg3[%100] : memref<240xi32, #tpu.memory_space<smem>>
        %c2_i32_48 = arith.constant 2 : i32
        %c0_i32_49 = arith.constant 0 : i32
        %102 = tpu.memref_slice %arg5[%101, %c0_i32_49] : memref<64x256xf32, #tpu.memory_space<any>> -> memref<1x256xf32, #tpu.memory_space<any>>
        %103 = tpu.memref_squeeze %102 : memref<1x256xf32, #tpu.memory_space<any>> -> memref<256xf32, #tpu.memory_space<any>>
        %c0_i32_50 = arith.constant 0 : i32
        %104 = tpu.memref_slice %arg7[%10, %c2_i32_48, %80, %c0_i32_50] : memref<2x7x16x256xf32, #tpu.memory_space<vmem>> -> memref<1x1x1x256xf32, #tpu.memory_space<vmem>>
        %105 = tpu.memref_squeeze %104 : memref<1x1x1x256xf32, #tpu.memory_space<vmem>> -> memref<256xf32, #tpu.memory_space<vmem>>
        %106 = tpu.memref_slice %arg8[%10] : memref<2x!tpu.dma_semaphore, #tpu.memory_space<semaphore_mem>> -> memref<1x!tpu.dma_semaphore, #tpu.memory_space<semaphore_mem>>
        %107 = tpu.memref_squeeze %106 : memref<1x!tpu.dma_semaphore, #tpu.memory_space<semaphore_mem>> -> memref<!tpu.dma_semaphore, #tpu.memory_space<semaphore_mem>>
        tpu.enqueue_dma source(%103 : memref<256xf32, #tpu.memory_space<any>>) target(%105 : memref<256xf32, #tpu.memory_space<vmem>>) target_semaphore(%107 : memref<!tpu.dma_semaphore, #tpu.memory_space<semaphore_mem>>)
        %c1_i32_51 = arith.constant 1 : i32
        %108 = arith.addi %82, %c1_i32_51 : i32
        %109 = arith.index_cast %108 : i32 to index
        %110 = memref.load %arg3[%109] : memref<240xi32, #tpu.memory_space<smem>>
        %c3_i32_52 = arith.constant 3 : i32
        %c0_i32_53 = arith.constant 0 : i32
        %111 = tpu.memref_slice %arg5[%110, %c0_i32_53] : memref<64x256xf32, #tpu.memory_space<any>> -> memref<1x256xf32, #tpu.memory_space<any>>
        %112 = tpu.memref_squeeze %111 : memref<1x256xf32, #tpu.memory_space<any>> -> memref<256xf32, #tpu.memory_space<any>>
        %c0_i32_54 = arith.constant 0 : i32
        %113 = tpu.memref_slice %arg7[%10, %c3_i32_52, %80, %c0_i32_54] : memref<2x7x16x256xf32, #tpu.memory_space<vmem>> -> memref<1x1x1x256xf32, #tpu.memory_space<vmem>>
        %114 = tpu.memref_squeeze %113 : memref<1x1x1x256xf32, #tpu.memory_space<vmem>> -> memref<256xf32, #tpu.memory_space<vmem>>
        %115 = tpu.memref_slice %arg8[%10] : memref<2x!tpu.dma_semaphore, #tpu.memory_space<semaphore_mem>> -> memref<1x!tpu.dma_semaphore, #tpu.memory_space<semaphore_mem>>
        %116 = tpu.memref_squeeze %115 : memref<1x!tpu.dma_semaphore, #tpu.memory_space<semaphore_mem>> -> memref<!tpu.dma_semaphore, #tpu.memory_space<semaphore_mem>>
        tpu.enqueue_dma source(%112 : memref<256xf32, #tpu.memory_space<any>>) target(%114 : memref<256xf32, #tpu.memory_space<vmem>>) target_semaphore(%116 : memref<!tpu.dma_semaphore, #tpu.memory_space<semaphore_mem>>)
        %c2_i32_55 = arith.constant 2 : i32
        %117 = arith.addi %82, %c2_i32_55 : i32
        %118 = arith.index_cast %117 : i32 to index
        %119 = memref.load %arg3[%118] : memref<240xi32, #tpu.memory_space<smem>>
        %c4_i32_56 = arith.constant 4 : i32
        %c0_i32_57 = arith.constant 0 : i32
        %120 = tpu.memref_slice %arg5[%119, %c0_i32_57] : memref<64x256xf32, #tpu.memory_space<any>> -> memref<1x256xf32, #tpu.memory_space<any>>
        %121 = tpu.memref_squeeze %120 : memref<1x256xf32, #tpu.memory_space<any>> -> memref<256xf32, #tpu.memory_space<any>>
        %c0_i32_58 = arith.constant 0 : i32
        %122 = tpu.memref_slice %arg7[%10, %c4_i32_56, %80, %c0_i32_58] : memref<2x7x16x256xf32, #tpu.memory_space<vmem>> -> memref<1x1x1x256xf32, #tpu.memory_space<vmem>>
        %123 = tpu.memref_squeeze %122 : memref<1x1x1x256xf32, #tpu.memory_space<vmem>> -> memref<256xf32, #tpu.memory_space<vmem>>
        %124 = tpu.memref_slice %arg8[%10] : memref<2x!tpu.dma_semaphore, #tpu.memory_space<semaphore_mem>> -> memref<1x!tpu.dma_semaphore, #tpu.memory_space<semaphore_mem>>
        %125 = tpu.memref_squeeze %124 : memref<1x!tpu.dma_semaphore, #tpu.memory_space<semaphore_mem>> -> memref<!tpu.dma_semaphore, #tpu.memory_space<semaphore_mem>>
        tpu.enqueue_dma source(%121 : memref<256xf32, #tpu.memory_space<any>>) target(%123 : memref<256xf32, #tpu.memory_space<vmem>>) target_semaphore(%125 : memref<!tpu.dma_semaphore, #tpu.memory_space<semaphore_mem>>)
        %c3_i32_59 = arith.constant 3 : i32
        %126 = arith.addi %82, %c3_i32_59 : i32
        %127 = arith.index_cast %126 : i32 to index
        %128 = memref.load %arg3[%127] : memref<240xi32, #tpu.memory_space<smem>>
        %c5_i32_60 = arith.constant 5 : i32
        %c0_i32_61 = arith.constant 0 : i32
        %129 = tpu.memref_slice %arg5[%128, %c0_i32_61] : memref<64x256xf32, #tpu.memory_space<any>> -> memref<1x256xf32, #tpu.memory_space<any>>
        %130 = tpu.memref_squeeze %129 : memref<1x256xf32, #tpu.memory_space<any>> -> memref<256xf32, #tpu.memory_space<any>>
        %c0_i32_62 = arith.constant 0 : i32
        %131 = tpu.memref_slice %arg7[%10, %c5_i32_60, %80, %c0_i32_62] : memref<2x7x16x256xf32, #tpu.memory_space<vmem>> -> memref<1x1x1x256xf32, #tpu.memory_space<vmem>>
        %132 = tpu.memref_squeeze %131 : memref<1x1x1x256xf32, #tpu.memory_space<vmem>> -> memref<256xf32, #tpu.memory_space<vmem>>
        %133 = tpu.memref_slice %arg8[%10] : memref<2x!tpu.dma_semaphore, #tpu.memory_space<semaphore_mem>> -> memref<1x!tpu.dma_semaphore, #tpu.memory_space<semaphore_mem>>
        %134 = tpu.memref_squeeze %133 : memref<1x!tpu.dma_semaphore, #tpu.memory_space<semaphore_mem>> -> memref<!tpu.dma_semaphore, #tpu.memory_space<semaphore_mem>>
        tpu.enqueue_dma source(%130 : memref<256xf32, #tpu.memory_space<any>>) target(%132 : memref<256xf32, #tpu.memory_space<vmem>>) target_semaphore(%134 : memref<!tpu.dma_semaphore, #tpu.memory_space<semaphore_mem>>)
        %c4_i32_63 = arith.constant 4 : i32
        %135 = arith.addi %82, %c4_i32_63 : i32
        %136 = arith.index_cast %135 : i32 to index
        %137 = memref.load %arg3[%136] : memref<240xi32, #tpu.memory_space<smem>>
        %c6_i32 = arith.constant 6 : i32
        %c0_i32_64 = arith.constant 0 : i32
        %138 = tpu.memref_slice %arg5[%137, %c0_i32_64] : memref<64x256xf32, #tpu.memory_space<any>> -> memref<1x256xf32, #tpu.memory_space<any>>
        %139 = tpu.memref_squeeze %138 : memref<1x256xf32, #tpu.memory_space<any>> -> memref<256xf32, #tpu.memory_space<any>>
        %c0_i32_65 = arith.constant 0 : i32
        %140 = tpu.memref_slice %arg7[%10, %c6_i32, %80, %c0_i32_65] : memref<2x7x16x256xf32, #tpu.memory_space<vmem>> -> memref<1x1x1x256xf32, #tpu.memory_space<vmem>>
        %141 = tpu.memref_squeeze %140 : memref<1x1x1x256xf32, #tpu.memory_space<vmem>> -> memref<256xf32, #tpu.memory_space<vmem>>
        %142 = tpu.memref_slice %arg8[%10] : memref<2x!tpu.dma_semaphore, #tpu.memory_space<semaphore_mem>> -> memref<1x!tpu.dma_semaphore, #tpu.memory_space<semaphore_mem>>
        %143 = tpu.memref_squeeze %142 : memref<1x!tpu.dma_semaphore, #tpu.memory_space<semaphore_mem>> -> memref<!tpu.dma_semaphore, #tpu.memory_space<semaphore_mem>>
        tpu.enqueue_dma source(%139 : memref<256xf32, #tpu.memory_space<any>>) target(%141 : memref<256xf32, #tpu.memory_space<vmem>>) target_semaphore(%143 : memref<!tpu.dma_semaphore, #tpu.memory_space<semaphore_mem>>)
        %c4_i32_66 = arith.constant 4 : i32
        %144 = arith.muli %78, %c4_i32_66 : i32
        %c1_i32_67 = arith.constant 1 : i32
        %145 = arith.addi %144, %c1_i32_67 : i32
        %146 = arith.addi %75, %145 : i32
        %c5_i32_68 = arith.constant 5 : i32
        %147 = arith.muli %146, %c5_i32_68 : i32
        %148 = arith.index_cast %146 : i32 to index
        %149 = memref.load %arg1[%148] : memref<48xi32, #tpu.memory_space<smem>>
        %c0_i32_69 = arith.constant 0 : i32
        %c0_i32_70 = arith.constant 0 : i32
        %150 = tpu.memref_slice %arg4[%149, %c0_i32_70] : memref<64x256xf32, #tpu.memory_space<any>> -> memref<1x256xf32, #tpu.memory_space<any>>
        %151 = tpu.memref_squeeze %150 : memref<1x256xf32, #tpu.memory_space<any>> -> memref<256xf32, #tpu.memory_space<any>>
        %c0_i32_71 = arith.constant 0 : i32
        %152 = tpu.memref_slice %arg7[%10, %c0_i32_69, %145, %c0_i32_71] : memref<2x7x16x256xf32, #tpu.memory_space<vmem>> -> memref<1x1x1x256xf32, #tpu.memory_space<vmem>>
        %153 = tpu.memref_squeeze %152 : memref<1x1x1x256xf32, #tpu.memory_space<vmem>> -> memref<256xf32, #tpu.memory_space<vmem>>
        %154 = tpu.memref_slice %arg8[%10] : memref<2x!tpu.dma_semaphore, #tpu.memory_space<semaphore_mem>> -> memref<1x!tpu.dma_semaphore, #tpu.memory_space<semaphore_mem>>
        %155 = tpu.memref_squeeze %154 : memref<1x!tpu.dma_semaphore, #tpu.memory_space<semaphore_mem>> -> memref<!tpu.dma_semaphore, #tpu.memory_space<semaphore_mem>>
        tpu.enqueue_dma source(%151 : memref<256xf32, #tpu.memory_space<any>>) target(%153 : memref<256xf32, #tpu.memory_space<vmem>>) target_semaphore(%155 : memref<!tpu.dma_semaphore, #tpu.memory_space<semaphore_mem>>)
        %156 = arith.index_cast %146 : i32 to index
        %157 = memref.load %arg2[%156] : memref<48xi32, #tpu.memory_space<smem>>
        %c1_i32_72 = arith.constant 1 : i32
        %c0_i32_73 = arith.constant 0 : i32
        %158 = tpu.memref_slice %arg5[%157, %c0_i32_73] : memref<64x256xf32, #tpu.memory_space<any>> -> memref<1x256xf32, #tpu.memory_space<any>>
        %159 = tpu.memref_squeeze %158 : memref<1x256xf32, #tpu.memory_space<any>> -> memref<256xf32, #tpu.memory_space<any>>
        %c0_i32_74 = arith.constant 0 : i32
        %160 = tpu.memref_slice %arg7[%10, %c1_i32_72, %145, %c0_i32_74] : memref<2x7x16x256xf32, #tpu.memory_space<vmem>> -> memref<1x1x1x256xf32, #tpu.memory_space<vmem>>
        %161 = tpu.memref_squeeze %160 : memref<1x1x1x256xf32, #tpu.memory_space<vmem>> -> memref<256xf32, #tpu.memory_space<vmem>>
        %162 = tpu.memref_slice %arg8[%10] : memref<2x!tpu.dma_semaphore, #tpu.memory_space<semaphore_mem>> -> memref<1x!tpu.dma_semaphore, #tpu.memory_space<semaphore_mem>>
        %163 = tpu.memref_squeeze %162 : memref<1x!tpu.dma_semaphore, #tpu.memory_space<semaphore_mem>> -> memref<!tpu.dma_semaphore, #tpu.memory_space<semaphore_mem>>
        tpu.enqueue_dma source(%159 : memref<256xf32, #tpu.memory_space<any>>) target(%161 : memref<256xf32, #tpu.memory_space<vmem>>) target_semaphore(%163 : memref<!tpu.dma_semaphore, #tpu.memory_space<semaphore_mem>>)
        %c0_i32_75 = arith.constant 0 : i32
        %164 = arith.addi %147, %c0_i32_75 : i32
        %165 = arith.index_cast %164 : i32 to index
        %166 = memref.load %arg3[%165] : memref<240xi32, #tpu.memory_space<smem>>
        %c2_i32_76 = arith.constant 2 : i32
        %c0_i32_77 = arith.constant 0 : i32
        %167 = tpu.memref_slice %arg5[%166, %c0_i32_77] : memref<64x256xf32, #tpu.memory_space<any>> -> memref<1x256xf32, #tpu.memory_space<any>>
        %168 = tpu.memref_squeeze %167 : memref<1x256xf32, #tpu.memory_space<any>> -> memref<256xf32, #tpu.memory_space<any>>
        %c0_i32_78 = arith.constant 0 : i32
        %169 = tpu.memref_slice %arg7[%10, %c2_i32_76, %145, %c0_i32_78] : memref<2x7x16x256xf32, #tpu.memory_space<vmem>> -> memref<1x1x1x256xf32, #tpu.memory_space<vmem>>
        %170 = tpu.memref_squeeze %169 : memref<1x1x1x256xf32, #tpu.memory_space<vmem>> -> memref<256xf32, #tpu.memory_space<vmem>>
        %171 = tpu.memref_slice %arg8[%10] : memref<2x!tpu.dma_semaphore, #tpu.memory_space<semaphore_mem>> -> memref<1x!tpu.dma_semaphore, #tpu.memory_space<semaphore_mem>>
        %172 = tpu.memref_squeeze %171 : memref<1x!tpu.dma_semaphore, #tpu.memory_space<semaphore_mem>> -> memref<!tpu.dma_semaphore, #tpu.memory_space<semaphore_mem>>
        tpu.enqueue_dma source(%168 : memref<256xf32, #tpu.memory_space<any>>) target(%170 : memref<256xf32, #tpu.memory_space<vmem>>) target_semaphore(%172 : memref<!tpu.dma_semaphore, #tpu.memory_space<semaphore_mem>>)
        %c1_i32_79 = arith.constant 1 : i32
        %173 = arith.addi %147, %c1_i32_79 : i32
        %174 = arith.index_cast %173 : i32 to index
        %175 = memref.load %arg3[%174] : memref<240xi32, #tpu.memory_space<smem>>
        %c3_i32_80 = arith.constant 3 : i32
        %c0_i32_81 = arith.constant 0 : i32
        %176 = tpu.memref_slice %arg5[%175, %c0_i32_81] : memref<64x256xf32, #tpu.memory_space<any>> -> memref<1x256xf32, #tpu.memory_space<any>>
        %177 = tpu.memref_squeeze %176 : memref<1x256xf32, #tpu.memory_space<any>> -> memref<256xf32, #tpu.memory_space<any>>
        %c0_i32_82 = arith.constant 0 : i32
        %178 = tpu.memref_slice %arg7[%10, %c3_i32_80, %145, %c0_i32_82] : memref<2x7x16x256xf32, #tpu.memory_space<vmem>> -> memref<1x1x1x256xf32, #tpu.memory_space<vmem>>
        %179 = tpu.memref_squeeze %178 : memref<1x1x1x256xf32, #tpu.memory_space<vmem>> -> memref<256xf32, #tpu.memory_space<vmem>>
        %180 = tpu.memref_slice %arg8[%10] : memref<2x!tpu.dma_semaphore, #tpu.memory_space<semaphore_mem>> -> memref<1x!tpu.dma_semaphore, #tpu.memory_space<semaphore_mem>>
        %181 = tpu.memref_squeeze %180 : memref<1x!tpu.dma_semaphore, #tpu.memory_space<semaphore_mem>> -> memref<!tpu.dma_semaphore, #tpu.memory_space<semaphore_mem>>
        tpu.enqueue_dma source(%177 : memref<256xf32, #tpu.memory_space<any>>) target(%179 : memref<256xf32, #tpu.memory_space<vmem>>) target_semaphore(%181 : memref<!tpu.dma_semaphore, #tpu.memory_space<semaphore_mem>>)
        %c2_i32_83 = arith.constant 2 : i32
        %182 = arith.addi %147, %c2_i32_83 : i32
        %183 = arith.index_cast %182 : i32 to index
        %184 = memref.load %arg3[%183] : memref<240xi32, #tpu.memory_space<smem>>
        %c4_i32_84 = arith.constant 4 : i32
        %c0_i32_85 = arith.constant 0 : i32
        %185 = tpu.memref_slice %arg5[%184, %c0_i32_85] : memref<64x256xf32, #tpu.memory_space<any>> -> memref<1x256xf32, #tpu.memory_space<any>>
        %186 = tpu.memref_squeeze %185 : memref<1x256xf32, #tpu.memory_space<any>> -> memref<256xf32, #tpu.memory_space<any>>
        %c0_i32_86 = arith.constant 0 : i32
        %187 = tpu.memref_slice %arg7[%10, %c4_i32_84, %145, %c0_i32_86] : memref<2x7x16x256xf32, #tpu.memory_space<vmem>> -> memref<1x1x1x256xf32, #tpu.memory_space<vmem>>
        %188 = tpu.memref_squeeze %187 : memref<1x1x1x256xf32, #tpu.memory_space<vmem>> -> memref<256xf32, #tpu.memory_space<vmem>>
        %189 = tpu.memref_slice %arg8[%10] : memref<2x!tpu.dma_semaphore, #tpu.memory_space<semaphore_mem>> -> memref<1x!tpu.dma_semaphore, #tpu.memory_space<semaphore_mem>>
        %190 = tpu.memref_squeeze %189 : memref<1x!tpu.dma_semaphore, #tpu.memory_space<semaphore_mem>> -> memref<!tpu.dma_semaphore, #tpu.memory_space<semaphore_mem>>
        tpu.enqueue_dma source(%186 : memref<256xf32, #tpu.memory_space<any>>) target(%188 : memref<256xf32, #tpu.memory_space<vmem>>) target_semaphore(%190 : memref<!tpu.dma_semaphore, #tpu.memory_space<semaphore_mem>>)
        %c3_i32_87 = arith.constant 3 : i32
        %191 = arith.addi %147, %c3_i32_87 : i32
        %192 = arith.index_cast %191 : i32 to index
        %193 = memref.load %arg3[%192] : memref<240xi32, #tpu.memory_space<smem>>
        %c5_i32_88 = arith.constant 5 : i32
        %c0_i32_89 = arith.constant 0 : i32
        %194 = tpu.memref_slice %arg5[%193, %c0_i32_89] : memref<64x256xf32, #tpu.memory_space<any>> -> memref<1x256xf32, #tpu.memory_space<any>>
        %195 = tpu.memref_squeeze %194 : memref<1x256xf32, #tpu.memory_space<any>> -> memref<256xf32, #tpu.memory_space<any>>
        %c0_i32_90 = arith.constant 0 : i32
        %196 = tpu.memref_slice %arg7[%10, %c5_i32_88, %145, %c0_i32_90] : memref<2x7x16x256xf32, #tpu.memory_space<vmem>> -> memref<1x1x1x256xf32, #tpu.memory_space<vmem>>
        %197 = tpu.memref_squeeze %196 : memref<1x1x1x256xf32, #tpu.memory_space<vmem>> -> memref<256xf32, #tpu.memory_space<vmem>>
        %198 = tpu.memref_slice %arg8[%10] : memref<2x!tpu.dma_semaphore, #tpu.memory_space<semaphore_mem>> -> memref<1x!tpu.dma_semaphore, #tpu.memory_space<semaphore_mem>>
        %199 = tpu.memref_squeeze %198 : memref<1x!tpu.dma_semaphore, #tpu.memory_space<semaphore_mem>> -> memref<!tpu.dma_semaphore, #tpu.memory_space<semaphore_mem>>
        tpu.enqueue_dma source(%195 : memref<256xf32, #tpu.memory_space<any>>) target(%197 : memref<256xf32, #tpu.memory_space<vmem>>) target_semaphore(%199 : memref<!tpu.dma_semaphore, #tpu.memory_space<semaphore_mem>>)
        %c4_i32_91 = arith.constant 4 : i32
        %200 = arith.addi %147, %c4_i32_91 : i32
        %201 = arith.index_cast %200 : i32 to index
        %202 = memref.load %arg3[%201] : memref<240xi32, #tpu.memory_space<smem>>
        %c6_i32_92 = arith.constant 6 : i32
        %c0_i32_93 = arith.constant 0 : i32
        %203 = tpu.memref_slice %arg5[%202, %c0_i32_93] : memref<64x256xf32, #tpu.memory_space<any>> -> memref<1x256xf32, #tpu.memory_space<any>>
        %204 = tpu.memref_squeeze %203 : memref<1x256xf32, #tpu.memory_space<any>> -> memref<256xf32, #tpu.memory_space<any>>
        %c0_i32_94 = arith.constant 0 : i32
        %205 = tpu.memref_slice %arg7[%10, %c6_i32_92, %145, %c0_i32_94] : memref<2x7x16x256xf32, #tpu.memory_space<vmem>> -> memref<1x1x1x256xf32, #tpu.memory_space<vmem>>
        %206 = tpu.memref_squeeze %205 : memref<1x1x1x256xf32, #tpu.memory_space<vmem>> -> memref<256xf32, #tpu.memory_space<vmem>>
        %207 = tpu.memref_slice %arg8[%10] : memref<2x!tpu.dma_semaphore, #tpu.memory_space<semaphore_mem>> -> memref<1x!tpu.dma_semaphore, #tpu.memory_space<semaphore_mem>>
        %208 = tpu.memref_squeeze %207 : memref<1x!tpu.dma_semaphore, #tpu.memory_space<semaphore_mem>> -> memref<!tpu.dma_semaphore, #tpu.memory_space<semaphore_mem>>
        tpu.enqueue_dma source(%204 : memref<256xf32, #tpu.memory_space<any>>) target(%206 : memref<256xf32, #tpu.memory_space<vmem>>) target_semaphore(%208 : memref<!tpu.dma_semaphore, #tpu.memory_space<semaphore_mem>>)
        %c4_i32_95 = arith.constant 4 : i32
        %209 = arith.muli %78, %c4_i32_95 : i32
        %c2_i32_96 = arith.constant 2 : i32
        %210 = arith.addi %209, %c2_i32_96 : i32
        %211 = arith.addi %75, %210 : i32
        %c5_i32_97 = arith.constant 5 : i32
        %212 = arith.muli %211, %c5_i32_97 : i32
        %213 = arith.index_cast %211 : i32 to index
        %214 = memref.load %arg1[%213] : memref<48xi32, #tpu.memory_space<smem>>
        %c0_i32_98 = arith.constant 0 : i32
        %c0_i32_99 = arith.constant 0 : i32
        %215 = tpu.memref_slice %arg4[%214, %c0_i32_99] : memref<64x256xf32, #tpu.memory_space<any>> -> memref<1x256xf32, #tpu.memory_space<any>>
        %216 = tpu.memref_squeeze %215 : memref<1x256xf32, #tpu.memory_space<any>> -> memref<256xf32, #tpu.memory_space<any>>
        %c0_i32_100 = arith.constant 0 : i32
        %217 = tpu.memref_slice %arg7[%10, %c0_i32_98, %210, %c0_i32_100] : memref<2x7x16x256xf32, #tpu.memory_space<vmem>> -> memref<1x1x1x256xf32, #tpu.memory_space<vmem>>
        %218 = tpu.memref_squeeze %217 : memref<1x1x1x256xf32, #tpu.memory_space<vmem>> -> memref<256xf32, #tpu.memory_space<vmem>>
        %219 = tpu.memref_slice %arg8[%10] : memref<2x!tpu.dma_semaphore, #tpu.memory_space<semaphore_mem>> -> memref<1x!tpu.dma_semaphore, #tpu.memory_space<semaphore_mem>>
        %220 = tpu.memref_squeeze %219 : memref<1x!tpu.dma_semaphore, #tpu.memory_space<semaphore_mem>> -> memref<!tpu.dma_semaphore, #tpu.memory_space<semaphore_mem>>
        tpu.enqueue_dma source(%216 : memref<256xf32, #tpu.memory_space<any>>) target(%218 : memref<256xf32, #tpu.memory_space<vmem>>) target_semaphore(%220 : memref<!tpu.dma_semaphore, #tpu.memory_space<semaphore_mem>>)
        %221 = arith.index_cast %211 : i32 to index
        %222 = memref.load %arg2[%221] : memref<48xi32, #tpu.memory_space<smem>>
        %c1_i32_101 = arith.constant 1 : i32
        %c0_i32_102 = arith.constant 0 : i32
        %223 = tpu.memref_slice %arg5[%222, %c0_i32_102] : memref<64x256xf32, #tpu.memory_space<any>> -> memref<1x256xf32, #tpu.memory_space<any>>
        %224 = tpu.memref_squeeze %223 : memref<1x256xf32, #tpu.memory_space<any>> -> memref<256xf32, #tpu.memory_space<any>>
        %c0_i32_103 = arith.constant 0 : i32
        %225 = tpu.memref_slice %arg7[%10, %c1_i32_101, %210, %c0_i32_103] : memref<2x7x16x256xf32, #tpu.memory_space<vmem>> -> memref<1x1x1x256xf32, #tpu.memory_space<vmem>>
        %226 = tpu.memref_squeeze %225 : memref<1x1x1x256xf32, #tpu.memory_space<vmem>> -> memref<256xf32, #tpu.memory_space<vmem>>
        %227 = tpu.memref_slice %arg8[%10] : memref<2x!tpu.dma_semaphore, #tpu.memory_space<semaphore_mem>> -> memref<1x!tpu.dma_semaphore, #tpu.memory_space<semaphore_mem>>
        %228 = tpu.memref_squeeze %227 : memref<1x!tpu.dma_semaphore, #tpu.memory_space<semaphore_mem>> -> memref<!tpu.dma_semaphore, #tpu.memory_space<semaphore_mem>>
        tpu.enqueue_dma source(%224 : memref<256xf32, #tpu.memory_space<any>>) target(%226 : memref<256xf32, #tpu.memory_space<vmem>>) target_semaphore(%228 : memref<!tpu.dma_semaphore, #tpu.memory_space<semaphore_mem>>)
        %c0_i32_104 = arith.constant 0 : i32
        %229 = arith.addi %212, %c0_i32_104 : i32
        %230 = arith.index_cast %229 : i32 to index
        %231 = memref.load %arg3[%230] : memref<240xi32, #tpu.memory_space<smem>>
        %c2_i32_105 = arith.constant 2 : i32
        %c0_i32_106 = arith.constant 0 : i32
        %232 = tpu.memref_slice %arg5[%231, %c0_i32_106] : memref<64x256xf32, #tpu.memory_space<any>> -> memref<1x256xf32, #tpu.memory_space<any>>
        %233 = tpu.memref_squeeze %232 : memref<1x256xf32, #tpu.memory_space<any>> -> memref<256xf32, #tpu.memory_space<any>>
        %c0_i32_107 = arith.constant 0 : i32
        %234 = tpu.memref_slice %arg7[%10, %c2_i32_105, %210, %c0_i32_107] : memref<2x7x16x256xf32, #tpu.memory_space<vmem>> -> memref<1x1x1x256xf32, #tpu.memory_space<vmem>>
        %235 = tpu.memref_squeeze %234 : memref<1x1x1x256xf32, #tpu.memory_space<vmem>> -> memref<256xf32, #tpu.memory_space<vmem>>
        %236 = tpu.memref_slice %arg8[%10] : memref<2x!tpu.dma_semaphore, #tpu.memory_space<semaphore_mem>> -> memref<1x!tpu.dma_semaphore, #tpu.memory_space<semaphore_mem>>
        %237 = tpu.memref_squeeze %236 : memref<1x!tpu.dma_semaphore, #tpu.memory_space<semaphore_mem>> -> memref<!tpu.dma_semaphore, #tpu.memory_space<semaphore_mem>>
        tpu.enqueue_dma source(%233 : memref<256xf32, #tpu.memory_space<any>>) target(%235 : memref<256xf32, #tpu.memory_space<vmem>>) target_semaphore(%237 : memref<!tpu.dma_semaphore, #tpu.memory_space<semaphore_mem>>)
        %c1_i32_108 = arith.constant 1 : i32
        %238 = arith.addi %212, %c1_i32_108 : i32
        %239 = arith.index_cast %238 : i32 to index
        %240 = memref.load %arg3[%239] : memref<240xi32, #tpu.memory_space<smem>>
        %c3_i32_109 = arith.constant 3 : i32
        %c0_i32_110 = arith.constant 0 : i32
        %241 = tpu.memref_slice %arg5[%240, %c0_i32_110] : memref<64x256xf32, #tpu.memory_space<any>> -> memref<1x256xf32, #tpu.memory_space<any>>
        %242 = tpu.memref_squeeze %241 : memref<1x256xf32, #tpu.memory_space<any>> -> memref<256xf32, #tpu.memory_space<any>>
        %c0_i32_111 = arith.constant 0 : i32
        %243 = tpu.memref_slice %arg7[%10, %c3_i32_109, %210, %c0_i32_111] : memref<2x7x16x256xf32, #tpu.memory_space<vmem>> -> memref<1x1x1x256xf32, #tpu.memory_space<vmem>>
        %244 = tpu.memref_squeeze %243 : memref<1x1x1x256xf32, #tpu.memory_space<vmem>> -> memref<256xf32, #tpu.memory_space<vmem>>
        %245 = tpu.memref_slice %arg8[%10] : memref<2x!tpu.dma_semaphore, #tpu.memory_space<semaphore_mem>> -> memref<1x!tpu.dma_semaphore, #tpu.memory_space<semaphore_mem>>
        %246 = tpu.memref_squeeze %245 : memref<1x!tpu.dma_semaphore, #tpu.memory_space<semaphore_mem>> -> memref<!tpu.dma_semaphore, #tpu.memory_space<semaphore_mem>>
        tpu.enqueue_dma source(%242 : memref<256xf32, #tpu.memory_space<any>>) target(%244 : memref<256xf32, #tpu.memory_space<vmem>>) target_semaphore(%246 : memref<!tpu.dma_semaphore, #tpu.memory_space<semaphore_mem>>)
        %c2_i32_112 = arith.constant 2 : i32
        %247 = arith.addi %212, %c2_i32_112 : i32
        %248 = arith.index_cast %247 : i32 to index
        %249 = memref.load %arg3[%248] : memref<240xi32, #tpu.memory_space<smem>>
        %c4_i32_113 = arith.constant 4 : i32
        %c0_i32_114 = arith.constant 0 : i32
        %250 = tpu.memref_slice %arg5[%249, %c0_i32_114] : memref<64x256xf32, #tpu.memory_space<any>> -> memref<1x256xf32, #tpu.memory_space<any>>
        %251 = tpu.memref_squeeze %250 : memref<1x256xf32, #tpu.memory_space<any>> -> memref<256xf32, #tpu.memory_space<any>>
        %c0_i32_115 = arith.constant 0 : i32
        %252 = tpu.memref_slice %arg7[%10, %c4_i32_113, %210, %c0_i32_115] : memref<2x7x16x256xf32, #tpu.memory_space<vmem>> -> memref<1x1x1x256xf32, #tpu.memory_space<vmem>>
        %253 = tpu.memref_squeeze %252 : memref<1x1x1x256xf32, #tpu.memory_space<vmem>> -> memref<256xf32, #tpu.memory_space<vmem>>
        %254 = tpu.memref_slice %arg8[%10] : memref<2x!tpu.dma_semaphore, #tpu.memory_space<semaphore_mem>> -> memref<1x!tpu.dma_semaphore, #tpu.memory_space<semaphore_mem>>
        %255 = tpu.memref_squeeze %254 : memref<1x!tpu.dma_semaphore, #tpu.memory_space<semaphore_mem>> -> memref<!tpu.dma_semaphore, #tpu.memory_space<semaphore_mem>>
        tpu.enqueue_dma source(%251 : memref<256xf32, #tpu.memory_space<any>>) target(%253 : memref<256xf32, #tpu.memory_space<vmem>>) target_semaphore(%255 : memref<!tpu.dma_semaphore, #tpu.memory_space<semaphore_mem>>)
        %c3_i32_116 = arith.constant 3 : i32
        %256 = arith.addi %212, %c3_i32_116 : i32
        %257 = arith.index_cast %256 : i32 to index
        %258 = memref.load %arg3[%257] : memref<240xi32, #tpu.memory_space<smem>>
        %c5_i32_117 = arith.constant 5 : i32
        %c0_i32_118 = arith.constant 0 : i32
        %259 = tpu.memref_slice %arg5[%258, %c0_i32_118] : memref<64x256xf32, #tpu.memory_space<any>> -> memref<1x256xf32, #tpu.memory_space<any>>
        %260 = tpu.memref_squeeze %259 : memref<1x256xf32, #tpu.memory_space<any>> -> memref<256xf32, #tpu.memory_space<any>>
        %c0_i32_119 = arith.constant 0 : i32
        %261 = tpu.memref_slice %arg7[%10, %c5_i32_117, %210, %c0_i32_119] : memref<2x7x16x256xf32, #tpu.memory_space<vmem>> -> memref<1x1x1x256xf32, #tpu.memory_space<vmem>>
        %262 = tpu.memref_squeeze %261 : memref<1x1x1x256xf32, #tpu.memory_space<vmem>> -> memref<256xf32, #tpu.memory_space<vmem>>
        %263 = tpu.memref_slice %arg8[%10] : memref<2x!tpu.dma_semaphore, #tpu.memory_space<semaphore_mem>> -> memref<1x!tpu.dma_semaphore, #tpu.memory_space<semaphore_mem>>
        %264 = tpu.memref_squeeze %263 : memref<1x!tpu.dma_semaphore, #tpu.memory_space<semaphore_mem>> -> memref<!tpu.dma_semaphore, #tpu.memory_space<semaphore_mem>>
        tpu.enqueue_dma source(%260 : memref<256xf32, #tpu.memory_space<any>>) target(%262 : memref<256xf32, #tpu.memory_space<vmem>>) target_semaphore(%264 : memref<!tpu.dma_semaphore, #tpu.memory_space<semaphore_mem>>)
        %c4_i32_120 = arith.constant 4 : i32
        %265 = arith.addi %212, %c4_i32_120 : i32
        %266 = arith.index_cast %265 : i32 to index
        %267 = memref.load %arg3[%266] : memref<240xi32, #tpu.memory_space<smem>>
        %c6_i32_121 = arith.constant 6 : i32
        %c0_i32_122 = arith.constant 0 : i32
        %268 = tpu.memref_slice %arg5[%267, %c0_i32_122] : memref<64x256xf32, #tpu.memory_space<any>> -> memref<1x256xf32, #tpu.memory_space<any>>
        %269 = tpu.memref_squeeze %268 : memref<1x256xf32, #tpu.memory_space<any>> -> memref<256xf32, #tpu.memory_space<any>>
        %c0_i32_123 = arith.constant 0 : i32
        %270 = tpu.memref_slice %arg7[%10, %c6_i32_121, %210, %c0_i32_123] : memref<2x7x16x256xf32, #tpu.memory_space<vmem>> -> memref<1x1x1x256xf32, #tpu.memory_space<vmem>>
        %271 = tpu.memref_squeeze %270 : memref<1x1x1x256xf32, #tpu.memory_space<vmem>> -> memref<256xf32, #tpu.memory_space<vmem>>
        %272 = tpu.memref_slice %arg8[%10] : memref<2x!tpu.dma_semaphore, #tpu.memory_space<semaphore_mem>> -> memref<1x!tpu.dma_semaphore, #tpu.memory_space<semaphore_mem>>
        %273 = tpu.memref_squeeze %272 : memref<1x!tpu.dma_semaphore, #tpu.memory_space<semaphore_mem>> -> memref<!tpu.dma_semaphore, #tpu.memory_space<semaphore_mem>>
        tpu.enqueue_dma source(%269 : memref<256xf32, #tpu.memory_space<any>>) target(%271 : memref<256xf32, #tpu.memory_space<vmem>>) target_semaphore(%273 : memref<!tpu.dma_semaphore, #tpu.memory_space<semaphore_mem>>)
        %c4_i32_124 = arith.constant 4 : i32
        %274 = arith.muli %78, %c4_i32_124 : i32
        %c3_i32_125 = arith.constant 3 : i32
        %275 = arith.addi %274, %c3_i32_125 : i32
        %276 = arith.addi %75, %275 : i32
        %c5_i32_126 = arith.constant 5 : i32
        %277 = arith.muli %276, %c5_i32_126 : i32
        %278 = arith.index_cast %276 : i32 to index
        %279 = memref.load %arg1[%278] : memref<48xi32, #tpu.memory_space<smem>>
        %c0_i32_127 = arith.constant 0 : i32
        %c0_i32_128 = arith.constant 0 : i32
        %280 = tpu.memref_slice %arg4[%279, %c0_i32_128] : memref<64x256xf32, #tpu.memory_space<any>> -> memref<1x256xf32, #tpu.memory_space<any>>
        %281 = tpu.memref_squeeze %280 : memref<1x256xf32, #tpu.memory_space<any>> -> memref<256xf32, #tpu.memory_space<any>>
        %c0_i32_129 = arith.constant 0 : i32
        %282 = tpu.memref_slice %arg7[%10, %c0_i32_127, %275, %c0_i32_129] : memref<2x7x16x256xf32, #tpu.memory_space<vmem>> -> memref<1x1x1x256xf32, #tpu.memory_space<vmem>>
        %283 = tpu.memref_squeeze %282 : memref<1x1x1x256xf32, #tpu.memory_space<vmem>> -> memref<256xf32, #tpu.memory_space<vmem>>
        %284 = tpu.memref_slice %arg8[%10] : memref<2x!tpu.dma_semaphore, #tpu.memory_space<semaphore_mem>> -> memref<1x!tpu.dma_semaphore, #tpu.memory_space<semaphore_mem>>
        %285 = tpu.memref_squeeze %284 : memref<1x!tpu.dma_semaphore, #tpu.memory_space<semaphore_mem>> -> memref<!tpu.dma_semaphore, #tpu.memory_space<semaphore_mem>>
        tpu.enqueue_dma source(%281 : memref<256xf32, #tpu.memory_space<any>>) target(%283 : memref<256xf32, #tpu.memory_space<vmem>>) target_semaphore(%285 : memref<!tpu.dma_semaphore, #tpu.memory_space<semaphore_mem>>)
        %286 = arith.index_cast %276 : i32 to index
        %287 = memref.load %arg2[%286] : memref<48xi32, #tpu.memory_space<smem>>
        %c1_i32_130 = arith.constant 1 : i32
        %c0_i32_131 = arith.constant 0 : i32
        %288 = tpu.memref_slice %arg5[%287, %c0_i32_131] : memref<64x256xf32, #tpu.memory_space<any>> -> memref<1x256xf32, #tpu.memory_space<any>>
        %289 = tpu.memref_squeeze %288 : memref<1x256xf32, #tpu.memory_space<any>> -> memref<256xf32, #tpu.memory_space<any>>
        %c0_i32_132 = arith.constant 0 : i32
        %290 = tpu.memref_slice %arg7[%10, %c1_i32_130, %275, %c0_i32_132] : memref<2x7x16x256xf32, #tpu.memory_space<vmem>> -> memref<1x1x1x256xf32, #tpu.memory_space<vmem>>
        %291 = tpu.memref_squeeze %290 : memref<1x1x1x256xf32, #tpu.memory_space<vmem>> -> memref<256xf32, #tpu.memory_space<vmem>>
        %292 = tpu.memref_slice %arg8[%10] : memref<2x!tpu.dma_semaphore, #tpu.memory_space<semaphore_mem>> -> memref<1x!tpu.dma_semaphore, #tpu.memory_space<semaphore_mem>>
        %293 = tpu.memref_squeeze %292 : memref<1x!tpu.dma_semaphore, #tpu.memory_space<semaphore_mem>> -> memref<!tpu.dma_semaphore, #tpu.memory_space<semaphore_mem>>
        tpu.enqueue_dma source(%289 : memref<256xf32, #tpu.memory_space<any>>) target(%291 : memref<256xf32, #tpu.memory_space<vmem>>) target_semaphore(%293 : memref<!tpu.dma_semaphore, #tpu.memory_space<semaphore_mem>>)
        %c0_i32_133 = arith.constant 0 : i32
        %294 = arith.addi %277, %c0_i32_133 : i32
        %295 = arith.index_cast %294 : i32 to index
        %296 = memref.load %arg3[%295] : memref<240xi32, #tpu.memory_space<smem>>
        %c2_i32_134 = arith.constant 2 : i32
        %c0_i32_135 = arith.constant 0 : i32
        %297 = tpu.memref_slice %arg5[%296, %c0_i32_135] : memref<64x256xf32, #tpu.memory_space<any>> -> memref<1x256xf32, #tpu.memory_space<any>>
        %298 = tpu.memref_squeeze %297 : memref<1x256xf32, #tpu.memory_space<any>> -> memref<256xf32, #tpu.memory_space<any>>
        %c0_i32_136 = arith.constant 0 : i32
        %299 = tpu.memref_slice %arg7[%10, %c2_i32_134, %275, %c0_i32_136] : memref<2x7x16x256xf32, #tpu.memory_space<vmem>> -> memref<1x1x1x256xf32, #tpu.memory_space<vmem>>
        %300 = tpu.memref_squeeze %299 : memref<1x1x1x256xf32, #tpu.memory_space<vmem>> -> memref<256xf32, #tpu.memory_space<vmem>>
        %301 = tpu.memref_slice %arg8[%10] : memref<2x!tpu.dma_semaphore, #tpu.memory_space<semaphore_mem>> -> memref<1x!tpu.dma_semaphore, #tpu.memory_space<semaphore_mem>>
        %302 = tpu.memref_squeeze %301 : memref<1x!tpu.dma_semaphore, #tpu.memory_space<semaphore_mem>> -> memref<!tpu.dma_semaphore, #tpu.memory_space<semaphore_mem>>
        tpu.enqueue_dma source(%298 : memref<256xf32, #tpu.memory_space<any>>) target(%300 : memref<256xf32, #tpu.memory_space<vmem>>) target_semaphore(%302 : memref<!tpu.dma_semaphore, #tpu.memory_space<semaphore_mem>>)
        %c1_i32_137 = arith.constant 1 : i32
        %303 = arith.addi %277, %c1_i32_137 : i32
        %304 = arith.index_cast %303 : i32 to index
        %305 = memref.load %arg3[%304] : memref<240xi32, #tpu.memory_space<smem>>
        %c3_i32_138 = arith.constant 3 : i32
        %c0_i32_139 = arith.constant 0 : i32
        %306 = tpu.memref_slice %arg5[%305, %c0_i32_139] : memref<64x256xf32, #tpu.memory_space<any>> -> memref<1x256xf32, #tpu.memory_space<any>>
        %307 = tpu.memref_squeeze %306 : memref<1x256xf32, #tpu.memory_space<any>> -> memref<256xf32, #tpu.memory_space<any>>
        %c0_i32_140 = arith.constant 0 : i32
        %308 = tpu.memref_slice %arg7[%10, %c3_i32_138, %275, %c0_i32_140] : memref<2x7x16x256xf32, #tpu.memory_space<vmem>> -> memref<1x1x1x256xf32, #tpu.memory_space<vmem>>
        %309 = tpu.memref_squeeze %308 : memref<1x1x1x256xf32, #tpu.memory_space<vmem>> -> memref<256xf32, #tpu.memory_space<vmem>>
        %310 = tpu.memref_slice %arg8[%10] : memref<2x!tpu.dma_semaphore, #tpu.memory_space<semaphore_mem>> -> memref<1x!tpu.dma_semaphore, #tpu.memory_space<semaphore_mem>>
        %311 = tpu.memref_squeeze %310 : memref<1x!tpu.dma_semaphore, #tpu.memory_space<semaphore_mem>> -> memref<!tpu.dma_semaphore, #tpu.memory_space<semaphore_mem>>
        tpu.enqueue_dma source(%307 : memref<256xf32, #tpu.memory_space<any>>) target(%309 : memref<256xf32, #tpu.memory_space<vmem>>) target_semaphore(%311 : memref<!tpu.dma_semaphore, #tpu.memory_space<semaphore_mem>>)
        %c2_i32_141 = arith.constant 2 : i32
        %312 = arith.addi %277, %c2_i32_141 : i32
        %313 = arith.index_cast %312 : i32 to index
        %314 = memref.load %arg3[%313] : memref<240xi32, #tpu.memory_space<smem>>
        %c4_i32_142 = arith.constant 4 : i32
        %c0_i32_143 = arith.constant 0 : i32
        %315 = tpu.memref_slice %arg5[%314, %c0_i32_143] : memref<64x256xf32, #tpu.memory_space<any>> -> memref<1x256xf32, #tpu.memory_space<any>>
        %316 = tpu.memref_squeeze %315 : memref<1x256xf32, #tpu.memory_space<any>> -> memref<256xf32, #tpu.memory_space<any>>
        %c0_i32_144 = arith.constant 0 : i32
        %317 = tpu.memref_slice %arg7[%10, %c4_i32_142, %275, %c0_i32_144] : memref<2x7x16x256xf32, #tpu.memory_space<vmem>> -> memref<1x1x1x256xf32, #tpu.memory_space<vmem>>
        %318 = tpu.memref_squeeze %317 : memref<1x1x1x256xf32, #tpu.memory_space<vmem>> -> memref<256xf32, #tpu.memory_space<vmem>>
        %319 = tpu.memref_slice %arg8[%10] : memref<2x!tpu.dma_semaphore, #tpu.memory_space<semaphore_mem>> -> memref<1x!tpu.dma_semaphore, #tpu.memory_space<semaphore_mem>>
        %320 = tpu.memref_squeeze %319 : memref<1x!tpu.dma_semaphore, #tpu.memory_space<semaphore_mem>> -> memref<!tpu.dma_semaphore, #tpu.memory_space<semaphore_mem>>
        tpu.enqueue_dma source(%316 : memref<256xf32, #tpu.memory_space<any>>) target(%318 : memref<256xf32, #tpu.memory_space<vmem>>) target_semaphore(%320 : memref<!tpu.dma_semaphore, #tpu.memory_space<semaphore_mem>>)
        %c3_i32_145 = arith.constant 3 : i32
        %321 = arith.addi %277, %c3_i32_145 : i32
        %322 = arith.index_cast %321 : i32 to index
        %323 = memref.load %arg3[%322] : memref<240xi32, #tpu.memory_space<smem>>
        %c5_i32_146 = arith.constant 5 : i32
        %c0_i32_147 = arith.constant 0 : i32
        %324 = tpu.memref_slice %arg5[%323, %c0_i32_147] : memref<64x256xf32, #tpu.memory_space<any>> -> memref<1x256xf32, #tpu.memory_space<any>>
        %325 = tpu.memref_squeeze %324 : memref<1x256xf32, #tpu.memory_space<any>> -> memref<256xf32, #tpu.memory_space<any>>
        %c0_i32_148 = arith.constant 0 : i32
        %326 = tpu.memref_slice %arg7[%10, %c5_i32_146, %275, %c0_i32_148] : memref<2x7x16x256xf32, #tpu.memory_space<vmem>> -> memref<1x1x1x256xf32, #tpu.memory_space<vmem>>
        %327 = tpu.memref_squeeze %326 : memref<1x1x1x256xf32, #tpu.memory_space<vmem>> -> memref<256xf32, #tpu.memory_space<vmem>>
        %328 = tpu.memref_slice %arg8[%10] : memref<2x!tpu.dma_semaphore, #tpu.memory_space<semaphore_mem>> -> memref<1x!tpu.dma_semaphore, #tpu.memory_space<semaphore_mem>>
        %329 = tpu.memref_squeeze %328 : memref<1x!tpu.dma_semaphore, #tpu.memory_space<semaphore_mem>> -> memref<!tpu.dma_semaphore, #tpu.memory_space<semaphore_mem>>
        tpu.enqueue_dma source(%325 : memref<256xf32, #tpu.memory_space<any>>) target(%327 : memref<256xf32, #tpu.memory_space<vmem>>) target_semaphore(%329 : memref<!tpu.dma_semaphore, #tpu.memory_space<semaphore_mem>>)
        %c4_i32_149 = arith.constant 4 : i32
        %330 = arith.addi %277, %c4_i32_149 : i32
        %331 = arith.index_cast %330 : i32 to index
        %332 = memref.load %arg3[%331] : memref<240xi32, #tpu.memory_space<smem>>
        %c6_i32_150 = arith.constant 6 : i32
        %c0_i32_151 = arith.constant 0 : i32
        %333 = tpu.memref_slice %arg5[%332, %c0_i32_151] : memref<64x256xf32, #tpu.memory_space<any>> -> memref<1x256xf32, #tpu.memory_space<any>>
        %334 = tpu.memref_squeeze %333 : memref<1x256xf32, #tpu.memory_space<any>> -> memref<256xf32, #tpu.memory_space<any>>
        %c0_i32_152 = arith.constant 0 : i32
        %335 = tpu.memref_slice %arg7[%10, %c6_i32_150, %275, %c0_i32_152] : memref<2x7x16x256xf32, #tpu.memory_space<vmem>> -> memref<1x1x1x256xf32, #tpu.memory_space<vmem>>
        %336 = tpu.memref_squeeze %335 : memref<1x1x1x256xf32, #tpu.memory_space<vmem>> -> memref<256xf32, #tpu.memory_space<vmem>>
        %337 = tpu.memref_slice %arg8[%10] : memref<2x!tpu.dma_semaphore, #tpu.memory_space<semaphore_mem>> -> memref<1x!tpu.dma_semaphore, #tpu.memory_space<semaphore_mem>>
        %338 = tpu.memref_squeeze %337 : memref<1x!tpu.dma_semaphore, #tpu.memory_space<semaphore_mem>> -> memref<!tpu.dma_semaphore, #tpu.memory_space<semaphore_mem>>
        tpu.enqueue_dma source(%334 : memref<256xf32, #tpu.memory_space<any>>) target(%336 : memref<256xf32, #tpu.memory_space<vmem>>) target_semaphore(%338 : memref<!tpu.dma_semaphore, #tpu.memory_space<semaphore_mem>>)
      }
      %c4_i32_36 = arith.constant 4 : i32
    } else {
    }
    %c0_i32_8 = arith.constant 0 : i32
    %c0_i32_9 = arith.constant 0 : i32
    %c0_i32_10 = arith.constant 0 : i32
    %18 = tpu.memref_slice %arg7[%9, %c0_i32_8, %c0_i32_9, %c0_i32_10] : memref<2x7x16x256xf32, #tpu.memory_space<vmem>> -> memref<1x7x16x256xf32, #tpu.memory_space<vmem>>
    %19 = tpu.memref_squeeze %18 : memref<1x7x16x256xf32, #tpu.memory_space<vmem>> -> memref<7x16x256xf32, #tpu.memory_space<vmem>>
    %c0_i32_11 = arith.constant 0 : i32
    %c0_i32_12 = arith.constant 0 : i32
    %c0_i32_13 = arith.constant 0 : i32
    %20 = tpu.memref_slice %arg7[%9, %c0_i32_11, %c0_i32_12, %c0_i32_13] : memref<2x7x16x256xf32, #tpu.memory_space<vmem>> -> memref<1x7x16x256xf32, #tpu.memory_space<vmem>>
    %21 = tpu.memref_squeeze %20 : memref<1x7x16x256xf32, #tpu.memory_space<vmem>> -> memref<7x16x256xf32, #tpu.memory_space<vmem>>
    %22 = tpu.memref_slice %arg8[%9] : memref<2x!tpu.dma_semaphore, #tpu.memory_space<semaphore_mem>> -> memref<1x!tpu.dma_semaphore, #tpu.memory_space<semaphore_mem>>
    %23 = tpu.memref_squeeze %22 : memref<1x!tpu.dma_semaphore, #tpu.memory_space<semaphore_mem>> -> memref<!tpu.dma_semaphore, #tpu.memory_space<semaphore_mem>>
    tpu.wait_dma2 semaphore(%23 : memref<!tpu.dma_semaphore, #tpu.memory_space<semaphore_mem>>) src(%19 : memref<7x16x256xf32, #tpu.memory_space<vmem>>) dst(%21 : memref<7x16x256xf32, #tpu.memory_space<vmem>>)
    %24 = arith.index_cast %9 : i32 to index
    %c0 = arith.constant 0 : index
    %c0_14 = arith.constant 0 : index
    %c0_15 = arith.constant 0 : index
    %25 = vector.load %arg7[%24, %c0, %c0_14, %c0_15] : memref<2x7x16x256xf32, #tpu.memory_space<vmem>>, vector<1x7x16x256xf32>
    %26 = vector.shape_cast %25 : vector<1x7x16x256xf32> to vector<7x16x256xf32>
    %27 = vector.extract_strided_slice %26 {offsets = [0, 0, 0], sizes = [1, 16, 256], strides = [1, 1, 1]} : vector<7x16x256xf32> to vector<1x16x256xf32>
    %28 = vector.shape_cast %27 : vector<1x16x256xf32> to vector<16x256xf32>
    %29 = vector.shape_cast %28 : vector<16x256xf32> to vector<1x16x256xf32>
    %30 = vector.broadcast %29 : vector<1x16x256xf32> to vector<7x16x256xf32>
    %31 = arith.mulf %26, %30 : vector<7x16x256xf32>
    %cst = arith.constant dense<0.000000e+00> : vector<7x16xf32>
    %32 = vector.multi_reduction <add>, %31, %cst [2] : vector<7x16x256xf32> to vector<7x16xf32>
    %33 = tpu.iota {dimensions = array<i32: 0>} : vector<7x16xi32>
    %c16_i32 = arith.constant 16 : i32
    %34 = arith.muli %arg0, %c16_i32 : i32
    %35 = tpu.iota {dimensions = array<i32: 1>} : vector<7x16xi32>
    %36 = vector.broadcast %34 : i32 to vector<7x16xi32>
    %37 = arith.addi %36, %35 : vector<7x16xi32>
    %c1_i32_16 = arith.constant 1 : i32
    %38 = vector.broadcast %c1_i32_16 : i32 to vector<7x16xi32>
    %39 = arith.cmpi eq, %33, %38 : vector<7x16xi32>
    %cst_17 = arith.constant 0.000000e+00 : f32
    %40 = vector.broadcast %cst_17 : f32 to vector<7x16xf32>
    %41 = arith.subf %40, %32 : vector<7x16xf32>
    %42 = arith.select %39, %32, %41 : vector<7x16xi1>, vector<7x16xf32>
    %43 = math.absf %42 : vector<7x16xf32>
    %cst_18 = arith.constant 0.000000e+00 : f32
    %44 = vector.broadcast %cst_18 : f32 to vector<7x16xf32>
    %45 = arith.subf %44, %43 : vector<7x16xf32>
    %46 = math.exp %45 : vector<7x16xf32>
    %cst_19 = arith.constant 9.99999974E-6 : f32
    %47 = vector.broadcast %cst_19 : f32 to vector<7x16xf32>
    %48 = arith.cmpf olt, %46, %47 : vector<7x16xf32>
    %cst_20 = arith.constant 5.000000e-01 : f32
    %49 = vector.broadcast %cst_20 : f32 to vector<7x16xf32>
    %50 = arith.mulf %49, %46 : vector<7x16xf32>
    %cst_21 = arith.constant 1.000000e+00 : f32
    %51 = vector.broadcast %cst_21 : f32 to vector<7x16xf32>
    %52 = arith.subf %51, %50 : vector<7x16xf32>
    %53 = arith.mulf %46, %52 : vector<7x16xf32>
    %cst_22 = arith.constant 1.000000e+00 : f32
    %54 = vector.broadcast %cst_22 : f32 to vector<7x16xf32>
    %55 = arith.addf %54, %46 : vector<7x16xf32>
    %56 = math.log %55 : vector<7x16xf32>
    %57 = arith.select %48, %53, %56 : vector<7x16xi1>, vector<7x16xf32>
    %cst_23 = arith.constant 0.000000e+00 : f32
    %58 = vector.broadcast %cst_23 : f32 to vector<7x16xf32>
    %59 = arith.minimumf %42, %58 : vector<7x16xf32>
    %60 = arith.subf %59, %57 : vector<7x16xf32>
    %c1_i32_24 = arith.constant 1 : i32
    %61 = vector.broadcast %c1_i32_24 : i32 to vector<7x16xi32>
    %62 = arith.cmpi sge, %33, %61 : vector<7x16xi32>
    %c40_i32 = arith.constant 40 : i32
    %63 = vector.broadcast %c40_i32 : i32 to vector<7x16xi32>
    %64 = arith.cmpi slt, %37, %63 : vector<7x16xi32>
    %65 = arith.andi %62, %64 : vector<7x16xi1>
    %c0_25 = arith.constant 0 : index
    %c0_26 = arith.constant 0 : index
    %66 = vector.load %arg9[%c0_25, %c0_26] : memref<7x16xf32, #tpu.memory_space<vmem>>, vector<7x16xf32>
    %cst_27 = arith.constant 0.000000e+00 : f32
    %67 = vector.broadcast %cst_27 : f32 to vector<7x16xf32>
    %68 = arith.select %65, %60, %67 : vector<7x16xi1>, vector<7x16xf32>
    %69 = arith.addf %66, %68 : vector<7x16xf32>
    %c0_28 = arith.constant 0 : index
    %c0_29 = arith.constant 0 : index
    %70 = vector.load %arg9[%c0_28, %c0_29] : memref<7x16xf32, #tpu.memory_space<vmem>>, vector<7x16xf32>
    tpu.vector_store %arg9[%c0_28, %c0_29], %69 {strides = array<i32>} : memref<7x16xf32, #tpu.memory_space<vmem>>, vector<7x16xf32>,
    %c2_i32_30 = arith.constant 2 : i32
    %71 = arith.cmpi eq, %arg0, %c2_i32_30 : i32
    %72 = arith.extui %71 : i1 to i32
    %c0_i32_31 = arith.constant 0 : i32
    %73 = arith.cmpi ne, %72, %c0_i32_31 : i32
    scf.if %73 {
      %c0_32 = arith.constant 0 : index
      %c0_33 = arith.constant 0 : index
      %74 = vector.load %arg9[%c0_32, %c0_33] : memref<7x16xf32, #tpu.memory_space<vmem>>, vector<7x16xf32>
      %75 = vector.shape_cast %74 : vector<7x16xf32> to vector<1x7x16xf32>
      %cst_34 = arith.constant dense<0.000000e+00> : vector<1xf32>
      %76 = vector.multi_reduction <add>, %75, %cst_34 [1, 2] : vector<1x7x16xf32> to vector<1xf32>
      %77 = vector.shape_cast %76 : vector<1xf32> to vector<1x1x1xf32>
      %78 = vector.extract %77[0, 0, 0] : f32 from vector<1x1x1xf32>
      %79 = vector.broadcast %78 : f32 to vector<1x1xf32>
      %cst_35 = arith.constant 0.000000e+00 : f32
      %80 = vector.broadcast %cst_35 : f32 to vector<1x1xf32>
      %81 = arith.subf %80, %79 : vector<1x1xf32>
      %c0_36 = arith.constant 0 : index
      %c0_37 = arith.constant 0 : index
      %82 = vector.load %arg6[%c0_36, %c0_37] : memref<1x1xf32, #tpu.memory_space<vmem>>, vector<1x1xf32>
      tpu.vector_store %arg6[%c0_36, %c0_37], %81 {strides = array<i32>} : memref<1x1xf32, #tpu.memory_space<vmem>>, vector<1x1xf32>,
    } else {
    }
    return
  }
  func.func @transform_2(%arg0: i32, %arg1: memref<48xi32, #tpu.memory_space<smem>>, %arg2: memref<48xi32, #tpu.memory_space<smem>>, %arg3: memref<240xi32, #tpu.memory_space<smem>>) -> (i32, i32) {
    %c0_i32 = arith.constant 0 : i32
    %c0_i32_0 = arith.constant 0 : i32
    %c0_i32_1 = arith.constant 0 : i32
    return %c0_i32, %c0_i32_0 : i32, i32
  }
}

</mosaic_0001>

<llo_original>
// kernel: tpu_custom_call.1
$region0: #{tpu_custom_call.1}
  #allocation0 [shape = 'u32[]', space=smem, size = 0x4, offset = 0x4, fixed_abs, tag = 'smem constant byte address 0x4 - core index']
  #allocation1 [shape = 'u32[72,128]{1,0:T(1,128)}', space=vmem, size = 0x9000, scoped, tag = 'internal scratch']
  #allocation2 [shape = 'f32[2,7,16,256]{3,2,1,0:T(8,128)}', space=vmem, size = 0x38000, scoped, tag = 'scratch operand']
  #allocation3 [shape = 's32[2]{0}', space=sflag, size = 0x8, scoped, tag = 'scratch operand']
  #allocation4 [shape = 'f32[7,16]{1,0:T(8,128)}', space=vmem, size = 0x1000, scoped, tag = 'scratch operand']
  #allocation5 [shape = 's32[1]{0}', space=sflag, size = 0x4, scoped, tag = 'scoped memory for tpu_custom_call.1']
  #allocation6 [shape = 'u8[512]{0}', space=smem, size = 0x200, scoped, tag = 'prefetched SMEM operand 0']
  #allocation7 [shape = 'u8[512]{0}', space=smem, size = 0x200, scoped, tag = 'prefetched SMEM operand 1']
  #allocation8 [shape = 'u8[1024]{0}', space=smem, size = 0x400, scoped, tag = 'prefetched SMEM operand 2']
  #allocation11 [shape = 's32[]', space=sflag, size = 0x4, offset = 0, fixed_abs, tag = 'sflag constant byte address 0x0 - dummy sync flag']
  #allocation12 [shape = 's32[]', space=sflag, size = 0x4, offset = 0, fixed_abs, tag = 'sflag constant byte address 0x0 - dummy sync flag']
  #allocation13 [shape = 's32[]', space=sflag, size = 0x4, offset = 0, fixed_abs, tag = 'sflag constant byte address 0x0 - dummy sync flag']
  #allocation14 [shape = 's32[]', space=sflag, size = 0x4, offset = 0, fixed_abs, tag = 'sflag constant byte address 0x0 - dummy sync flag']
  #allocation15 [shape = 's32[]', space=sflag, size = 0x4, offset = 0, fixed_abs, tag = 'sflag constant byte address 0x0 - dummy sync flag']
  #allocation16 [shape = 's32[]', space=sflag, size = 0x4, offset = 0, fixed_abs, tag = 'sflag constant byte address 0x0 - dummy sync flag']
  #allocation17 [shape = 's32[]', space=sflag, size = 0x4, offset = 0, fixed_abs, tag = 'sflag constant byte address 0x0 - dummy sync flag']
  #allocation18 [shape = 's32[]', space=sflag, size = 0x4, offset = 0, fixed_abs, tag = 'sflag constant byte address 0x0 - dummy sync flag']
  #allocation19 [shape = 's32[]', space=sflag, size = 0x4, offset = 0, fixed_abs, tag = 'sflag constant byte address 0x0 - dummy sync flag']
  #allocation20 [shape = 's32[]', space=sflag, size = 0x4, offset = 0, fixed_abs, tag = 'sflag constant byte address 0x0 - dummy sync flag']
  #allocation21 [shape = 's32[]', space=sflag, size = 0x4, offset = 0, fixed_abs, tag = 'sflag constant byte address 0x0 - dummy sync flag']
  #allocation22 [shape = 's32[]', space=sflag, size = 0x4, offset = 0, fixed_abs, tag = 'sflag constant byte address 0x0 - dummy sync flag']
  #allocation23 [shape = 's32[]', space=sflag, size = 0x4, offset = 0, fixed_abs, tag = 'sflag constant byte address 0x0 - dummy sync flag']
  #allocation24 [shape = 's32[]', space=sflag, size = 0x4, offset = 0, fixed_abs, tag = 'sflag constant byte address 0x0 - dummy sync flag']
  #allocation25 [shape = 's32[]', space=sflag, size = 0x4, offset = 0, fixed_abs, tag = 'sflag constant byte address 0x0 - dummy sync flag']
  #allocation26 [shape = 's32[]', space=sflag, size = 0x4, offset = 0, fixed_abs, tag = 'sflag constant byte address 0x0 - dummy sync flag']
  #allocation27 [shape = 's32[]', space=sflag, size = 0x4, offset = 0, fixed_abs, tag = 'sflag constant byte address 0x0 - dummy sync flag']
  #allocation28 [shape = 's32[]', space=sflag, size = 0x4, offset = 0, fixed_abs, tag = 'sflag constant byte address 0x0 - dummy sync flag']
  #allocation29 [shape = 's32[]', space=sflag, size = 0x4, offset = 0, fixed_abs, tag = 'sflag constant byte address 0x0 - dummy sync flag']
  #allocation30 [shape = 's32[]', space=sflag, size = 0x4, offset = 0, fixed_abs, tag = 'sflag constant byte address 0x0 - dummy sync flag']
  #allocation31 [shape = 's32[]', space=sflag, size = 0x4, offset = 0, fixed_abs, tag = 'sflag constant byte address 0x0 - dummy sync flag']
  #allocation32 [shape = 's32[]', space=sflag, size = 0x4, offset = 0, fixed_abs, tag = 'sflag constant byte address 0x0 - dummy sync flag']
  #allocation33 [shape = 's32[]', space=sflag, size = 0x4, offset = 0, fixed_abs, tag = 'sflag constant byte address 0x0 - dummy sync flag']
  #allocation34 [shape = 's32[]', space=sflag, size = 0x4, offset = 0, fixed_abs, tag = 'sflag constant byte address 0x0 - dummy sync flag']
  #allocation35 [shape = 's32[]', space=sflag, size = 0x4, offset = 0, fixed_abs, tag = 'sflag constant byte address 0x0 - dummy sync flag']
  #allocation36 [shape = 's32[]', space=sflag, size = 0x4, offset = 0, fixed_abs, tag = 'sflag constant byte address 0x0 - dummy sync flag']
  #allocation37 [shape = 's32[]', space=sflag, size = 0x4, offset = 0, fixed_abs, tag = 'sflag constant byte address 0x0 - dummy sync flag']
  #allocation38 [shape = 's32[]', space=sflag, size = 0x4, offset = 0, fixed_abs, tag = 'sflag constant byte address 0x0 - dummy sync flag']
  #allocation39 [shape = 's32[]', space=sflag, size = 0x4, offset = 0, fixed_abs, tag = 'sflag constant byte address 0x0 - dummy sync flag']
  #allocation40 [shape = 's32[]', space=sflag, size = 0x4, offset = 0, fixed_abs, tag = 'sflag constant byte address 0x0 - dummy sync flag']
  #allocation41 [shape = 's32[]', space=sflag, size = 0x4, offset = 0, fixed_abs, tag = 'sflag constant byte address 0x0 - dummy sync flag']
  #allocation42 [shape = 's32[]', space=sflag, size = 0x4, offset = 0, fixed_abs, tag = 'sflag constant byte address 0x0 - dummy sync flag']
  #allocation43 [shape = 's32[]', space=sflag, size = 0x4, offset = 0, fixed_abs, tag = 'sflag constant byte address 0x0 - dummy sync flag']
  #allocation44 [shape = 's32[]', space=sflag, size = 0x4, offset = 0, fixed_abs, tag = 'sflag constant byte address 0x0 - dummy sync flag']
  #allocation45 [shape = 's32[]', space=sflag, size = 0x4, offset = 0, fixed_abs, tag = 'sflag constant byte address 0x0 - dummy sync flag']
  #allocation46 [shape = 's32[]', space=sflag, size = 0x4, offset = 0, fixed_abs, tag = 'sflag constant byte address 0x0 - dummy sync flag']
  #allocation47 [shape = 's32[]', space=sflag, size = 0x4, offset = 0, fixed_abs, tag = 'sflag constant byte address 0x0 - dummy sync flag']
  #allocation48 [shape = 's32[]', space=sflag, size = 0x4, offset = 0, fixed_abs, tag = 'sflag constant byte address 0x0 - dummy sync flag']
  #allocation49 [shape = 's32[]', space=sflag, size = 0x4, offset = 0, fixed_abs, tag = 'sflag constant byte address 0x0 - dummy sync flag']
  #allocation50 [shape = 's32[]', space=sflag, size = 0x4, offset = 0, fixed_abs, tag = 'sflag constant byte address 0x0 - dummy sync flag']
  #allocation51 [shape = 's32[]', space=sflag, size = 0x4, offset = 0, fixed_abs, tag = 'sflag constant byte address 0x0 - dummy sync flag']
  #allocation52 [shape = 's32[]', space=sflag, size = 0x4, offset = 0, fixed_abs, tag = 'sflag constant byte address 0x0 - dummy sync flag']
  #allocation53 [shape = 's32[]', space=sflag, size = 0x4, offset = 0, fixed_abs, tag = 'sflag constant byte address 0x0 - dummy sync flag']
  #allocation54 [shape = 's32[]', space=sflag, size = 0x4, offset = 0, fixed_abs, tag = 'sflag constant byte address 0x0 - dummy sync flag']
  #allocation55 [shape = 's32[]', space=sflag, size = 0x4, offset = 0, fixed_abs, tag = 'sflag constant byte address 0x0 - dummy sync flag']
  #allocation56 [shape = 's32[]', space=sflag, size = 0x4, offset = 0, fixed_abs, tag = 'sflag constant byte address 0x0 - dummy sync flag']
  #allocation57 [shape = 's32[]', space=sflag, size = 0x4, offset = 0, fixed_abs, tag = 'sflag constant byte address 0x0 - dummy sync flag']
  #allocation58 [shape = 's32[]', space=sflag, size = 0x4, offset = 0, fixed_abs, tag = 'sflag constant byte address 0x0 - dummy sync flag']
  #allocation59 [shape = 's32[]', space=sflag, size = 0x4, offset = 0, fixed_abs, tag = 'sflag constant byte address 0x0 - dummy sync flag']
  #allocation60 [shape = 's32[]', space=sflag, size = 0x4, offset = 0, fixed_abs, tag = 'sflag constant byte address 0x0 - dummy sync flag']
  #allocation61 [shape = 's32[]', space=sflag, size = 0x4, offset = 0, fixed_abs, tag = 'sflag constant byte address 0x0 - dummy sync flag']
  #allocation62 [shape = 's32[]', space=sflag, size = 0x4, offset = 0, fixed_abs, tag = 'sflag constant byte address 0x0 - dummy sync flag']
  #allocation63 [shape = 's32[]', space=sflag, size = 0x4, offset = 0, fixed_abs, tag = 'sflag constant byte address 0x0 - dummy sync flag']
  #allocation64 [shape = 's32[]', space=sflag, size = 0x4, offset = 0, fixed_abs, tag = 'sflag constant byte address 0x0 - dummy sync flag']
  #allocation65 [shape = 's32[]', space=sflag, size = 0x4, offset = 0, fixed_abs, tag = 'sflag constant byte address 0x0 - dummy sync flag']
  #allocation66 [shape = 's32[]', space=sflag, size = 0x4, offset = 0, fixed_abs, tag = 'sflag constant byte address 0x0 - dummy sync flag']
  %s0 = inlined_call_operand.hbm [shape: s32[48], index: 0, kind: input, shape index: {}]
  %s1 = inlined_call_operand.hbm [shape: s32[48], index: 1, kind: input, shape index: {}]
  %s2 = inlined_call_operand.hbm [shape: s32[240], index: 2, kind: input, shape index: {}]
  %s3 = inlined_call_operand.hbm [shape: f32[64,256], index: 3, kind: input, shape index: {}]
  %s4 = inlined_call_operand.hbm [shape: f32[64,256], index: 4, kind: input, shape index: {}]
  %s5 = inlined_call_operand.hbm [shape: f32[1,1], index: 5, kind: output, shape index: {}]
  %s6 = sld [smem:[#allocation0]]
  $region51: #{tpu_custom_call.1} parent=0
    _
  %s8 = ssub.s32 1, %s6
  %s9 = scalar_select 0, %s8, %s6
  %s11 = sshll.u32 %s0, 4
  %s12 = int_to_ptr.hbm [resolvable:$true] %s11
  %14 = dma.hbm_to_smem %s12, 16, [#allocation6], [#allocation5]
  %s16 = sshll.u32 %s1, 4
  %s17 = int_to_ptr.hbm [resolvable:$true] %s16
  %19 = dma.hbm_to_smem %s17, 16, [#allocation7], [#allocation5]
  %s21 = sshll.u32 %s2, 4
  %s22 = int_to_ptr.hbm [resolvable:$true] %s21
  %24 = dma.hbm_to_smem %s22, 32, [#allocation8], [#allocation5]
  %26 = dma.done [#allocation5], 64
  %27 = sfence
  $region1: #{tpu_custom_call.1} parent=0
    #allocation9 [shape = 'u8[512]{0}', space=vmem, size = 0x400, scoped, tag = 'output window, operand 0, single buffered']
    #allocation10 [shape = 's32[2]{0}', space=sflag, size = 0x8, scoped, tag = 'scoped memory for tpu_custom_call.1']
    %28 = vsyncpa [#allocation10], 0
    loop: start=0, step=1, limit=4
    $region2: #{tpu_custom_call.1} parent=1 // loop_pre_header
      _
    $region3: #{tpu_custom_call.1} parent=1 // loop_header
      %s30 = sphi 0, %s34
      %p31 = scmp.ge.s32.totalorder %s30, 4
      %s37 = sphi 0, %s37
      %s39 = sphi 0, %s37
      %s47 = sphi 0, %s39
    $region4: #{tpu_custom_call.1} parent=1 // loop_header_branch
      %33 = sbr.rel (%p31) target = $region8
    $region5: #{tpu_custom_call.1} parent=1 // loop_body
      %s35 = ssub.s32 %s30, 1
      %s36 = sadd.s32 %s30, 1
      %s38 = sadd.s32 %s37, 1
      %p40 = scmp.eq.s32.totalorder %s30, 2
      %p41 = scmp.ne.s32.totalorder %s37, %s39
      %p42 = scmp.eq.s32.totalorder %s30, 0
      %p43 = por %p41, %p42
      %p44 = scmp.ne.s32.totalorder %s37, %s39
      %p45 = scmp.eq.s32.totalorder %s35, 2
      %p46 = por %p44, %p45
      %p48 = scmp.ne.s32.totalorder %s39, %s47
      %p49 = scmp.eq.s32.totalorder %s35, 0
      %p50 = por %p48, %p49
      %p51 = scmp.lt.s32.totalorder %s30, 3
      // Predicated region
      $region9: #{tpu_custom_call.1} parent=5 // pred_check
        %p52 = pneg %p51
      $region10: #{tpu_custom_call.1} parent=5 // pred_check_branch
        %54 = sbr.rel (%p52) target = $region12
      $region11: #{tpu_custom_call.1} parent=5 // pred_region
        %p55 = pneg %p43
        %p56 = pneg %p40
        %p57 = scmp.lt.s32.totalorder %s30, 0
        %s58 = ssub.s32 0, %s30
        %s59 = scalar_select %p57, %s58, %s30
        %s60 = sand.u32 %s59, 1
        %s61 = ssub.s32 0, %s60
        %s62 = scalar_select %p57, %s61, %s60
        %p63 = scmp.ne.s32.totalorder %s62, 0
        %p64 = scmp.lt.s32.totalorder %s62, 0
        %p65 = pnand %p64, %p63
        %p66 = pneg %p65
        %s67 = sadd.s32 %s62, 2
        %s68 = scalar_select %p66, %s67, %s62
        %s69 = ssub.s32 1, %s68
        %p70 = scmp.eq.s32.totalorder %s30, 0
        // Predicated region
        $region13: #{tpu_custom_call.1} parent=11 // pred_check
          %p71 = pneg %p70
        $region14: #{tpu_custom_call.1} parent=11 // pred_check_branch
          %73 = sbr.rel (%p71) target = $region16
        $region15: #{tpu_custom_call.1} parent=11 // pred_region
          %vm74 = vcmask 129024
          %75 = vst.msk [vmem:[#allocation4] sm:$0x7f] %vm74, 0.0
          loop: start=0, step=1, limit=4
          $region17: #{tpu_custom_call.1} parent=15 // loop_pre_header
            _
          $region18: #{tpu_custom_call.1} parent=15 // loop_header
            %s77 = sphi 0, %s81
            %p78 = scmp.ge.s32.totalorder %s77, 4
          $region19: #{tpu_custom_call.1} parent=15 // loop_header_branch
            %80 = sbr.rel (%p78) target = $region23
          $region20: #{tpu_custom_call.1} parent=15 // loop_body
            %s82 = smul.u32 %s77, 4
            %s83 = smul.u32 %s77, 20
            %s84 = sld [smem:[#allocation6 + %s82]]
            %s85 = sshrl.u32 %s84, 3
            %s86 = sand.u32 %s84, 7
            %s87 = smul.u32 %s85, 16
            %s88 = sadd.s32 %s86, %s87
            %s89 = scalar_lea.hbm %s3, %s88
            %s90 = sshrl.u32 %s82, 3
            %s91 = sand.u32 %s82, 7
            %s92 = smul.u32 %s90, 16
            %s93 = sadd.s32 %s91, %s92
            %s94 = scalar_lea.vmem [#allocation2], %s93
            %s95 = sshll.u32 %s89, 4
            %s96 = int_to_ptr.hbm [resolvable:$true] %s95
            %s97 = sshll.u32 %s94, 4
            %s98 = int_to_ptr.vmem [resolvable:$true] %s97
            %102 = dma.hbm_to_vmem [thread:$0]  %s96, 32, %s98, [#allocation3], 128, 128, 1
            %s103 = sld [smem:[#allocation7 + %s82]]
            %s104 = sshrl.u32 %s103, 3
            %s105 = sand.u32 %s103, 7
            %s106 = smul.u32 %s104, 16
            %s107 = sadd.s32 %s105, %s106
            %s108 = scalar_lea.hbm %s4, %s107
            %s109 = sadd.s32 %s93, 32
            %s110 = scalar_lea.vmem [#allocation2], %s109
            %s111 = sshll.u32 %s108, 4
            %s112 = int_to_ptr.hbm [resolvable:$true] %s111
            %s113 = sshll.u32 %s110, 4
            %s114 = int_to_ptr.vmem [resolvable:$true] %s113
            %118 = dma.hbm_to_vmem [thread:$0]  %s112, 32, %s114, [#allocation3], 128, 128, 1
            %s119 = sld [smem:[#allocation8 + %s83]]
            %s120 = sshrl.u32 %s119, 3
            %s121 = sand.u32 %s119, 7
            %s122 = smul.u32 %s120, 16
            %s123 = sadd.s32 %s121, %s122
            %s124 = scalar_lea.hbm %s4, %s123
            %s125 = sadd.s32 %s93, 64
            %s126 = scalar_lea.vmem [#allocation2], %s125
            %s127 = sshll.u32 %s124, 4
            %s128 = int_to_ptr.hbm [resolvable:$true] %s127
            %s129 = sshll.u32 %s126, 4
            %s130 = int_to_ptr.vmem [resolvable:$true] %s129
            %134 = dma.hbm_to_vmem [thread:$0]  %s128, 32, %s130, [#allocation3], 128, 128, 1
            %s135 = sadd.s32 %s83, 1
            %s136 = sld [smem:[#allocation8 + %s135]]
            %s137 = sshrl.u32 %s136, 3
            %s138 = sand.u32 %s136, 7
            %s139 = smul.u32 %s137, 16
            %s140 = sadd.s32 %s138, %s139
            %s141 = scalar_lea.hbm %s4, %s140
            %s142 = sadd.s32 %s93, 96
            %s143 = scalar_lea.vmem [#allocation2], %s142
            %s144 = sshll.u32 %s141, 4
            %s145 = int_to_ptr.hbm [resolvable:$true] %s144
            %s146 = sshll.u32 %s143, 4
            %s147 = int_to_ptr.vmem [resolvable:$true] %s146
            %151 = dma.hbm_to_vmem [thread:$0]  %s145, 32, %s147, [#allocation3], 128, 128, 1
            %s152 = sadd.s32 %s83, 2
            %s153 = sld [smem:[#allocation8 + %s152]]
            %s154 = sshrl.u32 %s153, 3
            %s155 = sand.u32 %s153, 7
            %s156 = smul.u32 %s154, 16
            %s157 = sadd.s32 %s155, %s156
            %s158 = scalar_lea.hbm %s4, %s157
            %s159 = sadd.s32 %s93, 128
            %s160 = scalar_lea.vmem [#allocation2], %s159
            %s161 = sshll.u32 %s158, 4
            %s162 = int_to_ptr.hbm [resolvable:$true] %s161
            %s163 = sshll.u32 %s160, 4
            %s164 = int_to_ptr.vmem [resolvable:$true] %s163
            %168 = dma.hbm_to_vmem [thread:$0]  %s162, 32, %s164, [#allocation3], 128, 128, 1
            %s169 = sadd.s32 %s83, 3
            %s170 = sld [smem:[#allocation8 + %s169]]
            %s171 = sshrl.u32 %s170, 3
            %s172 = sand.u32 %s170, 7
            %s173 = smul.u32 %s171, 16
            %s174 = sadd.s32 %s172, %s173
            %s175 = scalar_lea.hbm %s4, %s174
            %s176 = sadd.s32 %s93, 160
            %s177 = scalar_lea.vmem [#allocation2], %s176
            %s178 = sshll.u32 %s175, 4
            %s179 = int_to_ptr.hbm [resolvable:$true] %s178
            %s180 = sshll.u32 %s177, 4
            %s181 = int_to_ptr.vmem [resolvable:$true] %s180
            %185 = dma.hbm_to_vmem [thread:$0]  %s179, 32, %s181, [#allocation3], 128, 128, 1
            %s186 = sadd.s32 %s83, 4
            %s187 = sld [smem:[#allocation8 + %s186]]
            %s188 = sshrl.u32 %s187, 3
            %s189 = sand.u32 %s187, 7
            %s190 = smul.u32 %s188, 16
            %s191 = sadd.s32 %s189, %s190
            %s192 = scalar_lea.hbm %s4, %s191
            %s193 = sadd.s32 %s93, 192
            %s194 = scalar_lea.vmem [#allocation2], %s193
            %s195 = sshll.u32 %s192, 4
            %s196 = int_to_ptr.hbm [resolvable:$true] %s195
            %s197 = sshll.u32 %s194, 4
            %s198 = int_to_ptr.vmem [resolvable:$true] %s197
            %202 = dma.hbm_to_vmem [thread:$0]  %s196, 32, %s198, [#allocation3], 128, 128, 1
            %s203 = sadd.s32 %s82, 1
            %s204 = smul.u32 %s203, 5
            %s205 = sld [smem:[#allocation6 + %s203]]
            %s206 = sshrl.u32 %s205, 3
            %s207 = sand.u32 %s205, 7
            %s208 = smul.u32 %s206, 16
            %s209 = sadd.s32 %s207, %s208
            %s210 = scalar_lea.hbm %s3, %s209
            %s211 = sshrl.u32 %s203, 3
            %s212 = sand.u32 %s203, 7
            %s213 = smul.u32 %s211, 16
            %s214 = sadd.s32 %s212, %s213
            %s215 = scalar_lea.vmem [#allocation2], %s214
            %s216 = sshll.u32 %s210, 4
            %s217 = int_to_ptr.hbm [resolvable:$true] %s216
            %s218 = sshll.u32 %s215, 4
            %s219 = int_to_ptr.vmem [resolvable:$true] %s218
            %223 = dma.hbm_to_vmem [thread:$0]  %s217, 32, %s219, [#allocation3], 128, 128, 1
            %s224 = sld [smem:[#allocation7 + %s203]]
            %s225 = sshrl.u32 %s224, 3
            %s226 = sand.u32 %s224, 7
            %s227 = smul.u32 %s225, 16
            %s228 = sadd.s32 %s226, %s227
            %s229 = scalar_lea.hbm %s4, %s228
            %s230 = sadd.s32 %s214, 32
            %s231 = scalar_lea.vmem [#allocation2], %s230
            %s232 = sshll.u32 %s229, 4
            %s233 = int_to_ptr.hbm [resolvable:$true] %s232
            %s234 = sshll.u32 %s231, 4
            %s235 = int_to_ptr.vmem [resolvable:$true] %s234
            %239 = dma.hbm_to_vmem [thread:$0]  %s233, 32, %s235, [#allocation3], 128, 128, 1
            %s240 = sld [smem:[#allocation8 + %s204]]
            %s241 = sshrl.u32 %s240, 3
            %s242 = sand.u32 %s240, 7
            %s243 = smul.u32 %s241, 16
            %s244 = sadd.s32 %s242, %s243
            %s245 = scalar_lea.hbm %s4, %s244
            %s246 = sadd.s32 %s214, 64
            %s247 = scalar_lea.vmem [#allocation2], %s246
            %s248 = sshll.u32 %s245, 4
            %s249 = int_to_ptr.hbm [resolvable:$true] %s248
            %s250 = sshll.u32 %s247, 4
            %s251 = int_to_ptr.vmem [resolvable:$true] %s250
            %255 = dma.hbm_to_vmem [thread:$0]  %s249, 32, %s251, [#allocation3], 128, 128, 1
            %s256 = sadd.s32 %s204, 1
            %s257 = sld [smem:[#allocation8 + %s256]]
            %s258 = sshrl.u32 %s257, 3
            %s259 = sand.u32 %s257, 7
            %s260 = smul.u32 %s258, 16
            %s261 = sadd.s32 %s259, %s260
            %s262 = scalar_lea.hbm %s4, %s261
            %s263 = sadd.s32 %s214, 96
            %s264 = scalar_lea.vmem [#allocation2], %s263
            %s265 = sshll.u32 %s262, 4
            %s266 = int_to_ptr.hbm [resolvable:$true] %s265
            %s267 = sshll.u32 %s264, 4
            %s268 = int_to_ptr.vmem [resolvable:$true] %s267
            %272 = dma.hbm_to_vmem [thread:$0]  %s266, 32, %s268, [#allocation3], 128, 128, 1
            %s273 = sadd.s32 %s204, 2
            %s274 = sld [smem:[#allocation8 + %s273]]
            %s275 = sshrl.u32 %s274, 3
            %s276 = sand.u32 %s274, 7
            %s277 = smul.u32 %s275, 16
            %s278 = sadd.s32 %s276, %s277
            %s279 = scalar_lea.hbm %s4, %s278
            %s280 = sadd.s32 %s214, 128
            %s281 = scalar_lea.vmem [#allocation2], %s280
            %s282 = sshll.u32 %s279, 4
            %s283 = int_to_ptr.hbm [resolvable:$true] %s282
            %s284 = sshll.u32 %s281, 4
            %s285 = int_to_ptr.vmem [resolvable:$true] %s284
            %289 = dma.hbm_to_vmem [thread:$0]  %s283, 32, %s285, [#allocation3], 128, 128, 1
            %s290 = sadd.s32 %s204, 3
            %s291 = sld [smem:[#allocation8 + %s290]]
            %s292 = sshrl.u32 %s291, 3
            %s293 = sand.u32 %s291, 7
            %s294 = smul.u32 %s292, 16
            %s295 = sadd.s32 %s293, %s294
            %s296 = scalar_lea.hbm %s4, %s295
            %s297 = sadd.s32 %s214, 160
            %s298 = scalar_lea.vmem [#allocation2], %s297
            %s299 = sshll.u32 %s296, 4
            %s300 = int_to_ptr.hbm [resolvable:$true] %s299
            %s301 = sshll.u32 %s298, 4
            %s302 = int_to_ptr.vmem [resolvable:$true] %s301
            %306 = dma.hbm_to_vmem [thread:$0]  %s300, 32, %s302, [#allocation3], 128, 128, 1
            %s307 = sadd.s32 %s204, 4
            %s308 = sld [smem:[#allocation8 + %s307]]
            %s309 = sshrl.u32 %s308, 3
            %s310 = sand.u32 %s308, 7
            %s311 = smul.u32 %s309, 16
            %s312 = sadd.s32 %s310, %s311
            %s313 = scalar_lea.hbm %s4, %s312
            %s314 = sadd.s32 %s214, 192
            %s315 = scalar_lea.vmem [#allocation2], %s314
            %s316 = sshll.u32 %s313, 4
            %s317 = int_to_ptr.hbm [resolvable:$true] %s316
            %s318 = sshll.u32 %s315, 4
            %s319 = int_to_ptr.vmem [resolvable:$true] %s318
            %323 = dma.hbm_to_vmem [thread:$0]  %s317, 32, %s319, [#allocation3], 128, 128, 1
            %s324 = sadd.s32 %s82, 2
            %s325 = smul.u32 %s324, 5
            %s326 = sld [smem:[#allocation6 + %s324]]
            %s327 = sshrl.u32 %s326, 3
            %s328 = sand.u32 %s326, 7
            %s329 = smul.u32 %s327, 16
            %s330 = sadd.s32 %s328, %s329
            %s331 = scalar_lea.hbm %s3, %s330
            %s332 = sshrl.u32 %s324, 3
            %s333 = sand.u32 %s324, 7
            %s334 = smul.u32 %s332, 16
            %s335 = sadd.s32 %s333, %s334
            %s336 = scalar_lea.vmem [#allocation2], %s335
            %s337 = sshll.u32 %s331, 4
            %s338 = int_to_ptr.hbm [resolvable:$true] %s337
            %s339 = sshll.u32 %s336, 4
            %s340 = int_to_ptr.vmem [resolvable:$true] %s339
            %344 = dma.hbm_to_vmem [thread:$0]  %s338, 32, %s340, [#allocation3], 128, 128, 1
            %s345 = sld [smem:[#allocation7 + %s324]]
            %s346 = sshrl.u32 %s345, 3
            %s347 = sand.u32 %s345, 7
            %s348 = smul.u32 %s346, 16
            %s349 = sadd.s32 %s347, %s348
            %s350 = scalar_lea.hbm %s4, %s349
            %s351 = sadd.s32 %s335, 32
            %s352 = scalar_lea.vmem [#allocation2], %s351
            %s353 = sshll.u32 %s350, 4
            %s354 = int_to_ptr.hbm [resolvable:$true] %s353
            %s355 = sshll.u32 %s352, 4
            %s356 = int_to_ptr.vmem [resolvable:$true] %s355
            %360 = dma.hbm_to_vmem [thread:$0]  %s354, 32, %s356, [#allocation3], 128, 128, 1
            %s361 = sld [smem:[#allocation8 + %s325]]
            %s362 = sshrl.u32 %s361, 3
            %s363 = sand.u32 %s361, 7
            %s364 = smul.u32 %s362, 16
            %s365 = sadd.s32 %s363, %s364
            %s366 = scalar_lea.hbm %s4, %s365
            %s367 = sadd.s32 %s335, 64
            %s368 = scalar_lea.vmem [#allocation2], %s367
            %s369 = sshll.u32 %s366, 4
            %s370 = int_to_ptr.hbm [resolvable:$true] %s369
            %s371 = sshll.u32 %s368, 4
            %s372 = int_to_ptr.vmem [resolvable:$true] %s371
            %376 = dma.hbm_to_vmem [thread:$0]  %s370, 32, %s372, [#allocation3], 128, 128, 1
            %s377 = sadd.s32 %s325, 1
            %s378 = sld [smem:[#allocation8 + %s377]]
            %s379 = sshrl.u32 %s378, 3
            %s380 = sand.u32 %s378, 7
            %s381 = smul.u32 %s379, 16
            %s382 = sadd.s32 %s380, %s381
            %s383 = scalar_lea.hbm %s4, %s382
            %s384 = sadd.s32 %s335, 96
            %s385 = scalar_lea.vmem [#allocation2], %s384
            %s386 = sshll.u32 %s383, 4
            %s387 = int_to_ptr.hbm [resolvable:$true] %s386
            %s388 = sshll.u32 %s385, 4
            %s389 = int_to_ptr.vmem [resolvable:$true] %s388
            %393 = dma.hbm_to_vmem [thread:$0]  %s387, 32, %s389, [#allocation3], 128, 128, 1
            %s394 = sadd.s32 %s325, 2
            %s395 = sld [smem:[#allocation8 + %s394]]
            %s396 = sshrl.u32 %s395, 3
            %s397 = sand.u32 %s395, 7
            %s398 = smul.u32 %s396, 16
            %s399 = sadd.s32 %s397, %s398
            %s400 = scalar_lea.hbm %s4, %s399
            %s401 = sadd.s32 %s335, 128
            %s402 = scalar_lea.vmem [#allocation2], %s401
            %s403 = sshll.u32 %s400, 4
            %s404 = int_to_ptr.hbm [resolvable:$true] %s403
            %s405 = sshll.u32 %s402, 4
            %s406 = int_to_ptr.vmem [resolvable:$true] %s405
            %410 = dma.hbm_to_vmem [thread:$0]  %s404, 32, %s406, [#allocation3], 128, 128, 1
            %s411 = sadd.s32 %s325, 3
            %s412 = sld [smem:[#allocation8 + %s411]]
            %s413 = sshrl.u32 %s412, 3
            %s414 = sand.u32 %s412, 7
            %s415 = smul.u32 %s413, 16
            %s416 = sadd.s32 %s414, %s415
            %s417 = scalar_lea.hbm %s4, %s416
            %s418 = sadd.s32 %s335, 160
            %s419 = scalar_lea.vmem [#allocation2], %s418
            %s420 = sshll.u32 %s417, 4
            %s421 = int_to_ptr.hbm [resolvable:$true] %s420
            %s422 = sshll.u32 %s419, 4
            %s423 = int_to_ptr.vmem [resolvable:$true] %s422
            %427 = dma.hbm_to_vmem [thread:$0]  %s421, 32, %s423, [#allocation3], 128, 128, 1
            %s428 = sadd.s32 %s325, 4
            %s429 = sld [smem:[#allocation8 + %s428]]
            %s430 = sshrl.u32 %s429, 3
            %s431 = sand.u32 %s429, 7
            %s432 = smul.u32 %s430, 16
            %s433 = sadd.s32 %s431, %s432
            %s434 = scalar_lea.hbm %s4, %s433
            %s435 = sadd.s32 %s335, 192
            %s436 = scalar_lea.vmem [#allocation2], %s435
            %s437 = sshll.u32 %s434, 4
            %s438 = int_to_ptr.hbm [resolvable:$true] %s437
            %s439 = sshll.u32 %s436, 4
            %s440 = int_to_ptr.vmem [resolvable:$true] %s439
            %444 = dma.hbm_to_vmem [thread:$0]  %s438, 32, %s440, [#allocation3], 128, 128, 1
            %s445 = sadd.s32 %s82, 3
            %s446 = smul.u32 %s445, 5
            %s447 = sld [smem:[#allocation6 + %s445]]
            %s448 = sshrl.u32 %s447, 3
            %s449 = sand.u32 %s447, 7
            %s450 = smul.u32 %s448, 16
            %s451 = sadd.s32 %s449, %s450
            %s452 = scalar_lea.hbm %s3, %s451
            %s453 = sshrl.u32 %s445, 3
            %s454 = sand.u32 %s445, 7
            %s455 = smul.u32 %s453, 16
            %s456 = sadd.s32 %s454, %s455
            %s457 = scalar_lea.vmem [#allocation2], %s456
            %s458 = sshll.u32 %s452, 4
            %s459 = int_to_ptr.hbm [resolvable:$true] %s458
            %s460 = sshll.u32 %s457, 4
            %s461 = int_to_ptr.vmem [resolvable:$true] %s460
            %465 = dma.hbm_to_vmem [thread:$0]  %s459, 32, %s461, [#allocation3], 128, 128, 1
            %s466 = sld [smem:[#allocation7 + %s445]]
            %s467 = sshrl.u32 %s466, 3
            %s468 = sand.u32 %s466, 7
            %s469 = smul.u32 %s467, 16
            %s470 = sadd.s32 %s468, %s469
            %s471 = scalar_lea.hbm %s4, %s470
            %s472 = sadd.s32 %s456, 32
            %s473 = scalar_lea.vmem [#allocation2], %s472
            %s474 = sshll.u32 %s471, 4
            %s475 = int_to_ptr.hbm [resolvable:$true] %s474
            %s476 = sshll.u32 %s473, 4
            %s477 = int_to_ptr.vmem [resolvable:$true] %s476
            %481 = dma.hbm_to_vmem [thread:$0]  %s475, 32, %s477, [#allocation3], 128, 128, 1
            %s482 = sld [smem:[#allocation8 + %s446]]
            %s483 = sshrl.u32 %s482, 3
            %s484 = sand.u32 %s482, 7
            %s485 = smul.u32 %s483, 16
            %s486 = sadd.s32 %s484, %s485
            %s487 = scalar_lea.hbm %s4, %s486
            %s488 = sadd.s32 %s456, 64
            %s489 = scalar_lea.vmem [#allocation2], %s488
            %s490 = sshll.u32 %s487, 4
            %s491 = int_to_ptr.hbm [resolvable:$true] %s490
            %s492 = sshll.u32 %s489, 4
            %s493 = int_to_ptr.vmem [resolvable:$true] %s492
            %497 = dma.hbm_to_vmem [thread:$0]  %s491, 32, %s493, [#allocation3], 128, 128, 1
            %s498 = sadd.s32 %s446, 1
            %s499 = sld [smem:[#allocation8 + %s498]]
            %s500 = sshrl.u32 %s499, 3
            %s501 = sand.u32 %s499, 7
            %s502 = smul.u32 %s500, 16
            %s503 = sadd.s32 %s501, %s502
            %s504 = scalar_lea.hbm %s4, %s503
            %s505 = sadd.s32 %s456, 96
            %s506 = scalar_lea.vmem [#allocation2], %s505
            %s507 = sshll.u32 %s504, 4
            %s508 = int_to_ptr.hbm [resolvable:$true] %s507
            %s509 = sshll.u32 %s506, 4
            %s510 = int_to_ptr.vmem [resolvable:$true] %s509
            %514 = dma.hbm_to_vmem [thread:$0]  %s508, 32, %s510, [#allocation3], 128, 128, 1
            %s515 = sadd.s32 %s446, 2
            %s516 = sld [smem:[#allocation8 + %s515]]
            %s517 = sshrl.u32 %s516, 3
            %s518 = sand.u32 %s516, 7
            %s519 = smul.u32 %s517, 16
            %s520 = sadd.s32 %s518, %s519
            %s521 = scalar_lea.hbm %s4, %s520
            %s522 = sadd.s32 %s456, 128
            %s523 = scalar_lea.vmem [#allocation2], %s522
            %s524 = sshll.u32 %s521, 4
            %s525 = int_to_ptr.hbm [resolvable:$true] %s524
            %s526 = sshll.u32 %s523, 4
            %s527 = int_to_ptr.vmem [resolvable:$true] %s526
            %531 = dma.hbm_to_vmem [thread:$0]  %s525, 32, %s527, [#allocation3], 128, 128, 1
            %s532 = sadd.s32 %s446, 3
            %s533 = sld [smem:[#allocation8 + %s532]]
            %s534 = sshrl.u32 %s533, 3
            %s535 = sand.u32 %s533, 7
            %s536 = smul.u32 %s534, 16
            %s537 = sadd.s32 %s535, %s536
            %s538 = scalar_lea.hbm %s4, %s537
            %s539 = sadd.s32 %s456, 160
            %s540 = scalar_lea.vmem [#allocation2], %s539
            %s541 = sshll.u32 %s538, 4
            %s542 = int_to_ptr.hbm [resolvable:$true] %s541
            %s543 = sshll.u32 %s540, 4
            %s544 = int_to_ptr.vmem [resolvable:$true] %s543
            %548 = dma.hbm_to_vmem [thread:$0]  %s542, 32, %s544, [#allocation3], 128, 128, 1
            %s549 = sadd.s32 %s446, 4
            %s550 = sld [smem:[#allocation8 + %s549]]
            %s551 = sshrl.u32 %s550, 3
            %s552 = sand.u32 %s550, 7
            %s553 = smul.u32 %s551, 16
            %s554 = sadd.s32 %s552, %s553
            %s555 = scalar_lea.hbm %s4, %s554
            %s556 = sadd.s32 %s456, 192
            %s557 = scalar_lea.vmem [#allocation2], %s556
            %s558 = sshll.u32 %s555, 4
            %s559 = int_to_ptr.hbm [resolvable:$true] %s558
            %s560 = sshll.u32 %s557, 4
            %s561 = int_to_ptr.vmem [resolvable:$true] %s560
            %565 = dma.hbm_to_vmem [thread:$0]  %s559, 32, %s561, [#allocation3], 128, 128, 1
          $region21: #{tpu_custom_call.1} parent=15 // loop_footer
            %s81 = sadd.s32 1, %s77
          $region22: #{tpu_custom_call.1} parent=15 // loop_footer_branch
            %76 = sbr.rel target = $region18
          $region23: #{tpu_custom_call.1} parent=15 // loop_exit
            _
        $region16: #{tpu_custom_call.1} parent=11 // pred_fallthru
          _
        %s566 = sadd.s32 %s30, 1
        %p567 = scmp.lt.s32.totalorder %s566, 3
        // Predicated region
        $region24: #{tpu_custom_call.1} parent=11 // pred_check
          %p568 = pneg %p567
        $region25: #{tpu_custom_call.1} parent=11 // pred_check_branch
          %570 = sbr.rel (%p568) target = $region27
        $region26: #{tpu_custom_call.1} parent=11 // pred_region
          %s571 = smul.u32 %s566, 16
          loop: start=0, step=1, limit=4
          $region28: #{tpu_custom_call.1} parent=26 // loop_pre_header
            _
          $region29: #{tpu_custom_call.1} parent=26 // loop_header
            %s573 = sphi 0, %s577
            %p574 = scmp.ge.s32.totalorder %s573, 4
          $region30: #{tpu_custom_call.1} parent=26 // loop_header_branch
            %576 = sbr.rel (%p574) target = $region34
          $region31: #{tpu_custom_call.1} parent=26 // loop_body
            %s578 = smul.u32 %s573, 4
            %s579 = sadd.s32 %s571, %s578
            %s580 = smul.u32 %s579, 5
            %s581 = sld [smem:[#allocation6 + %s579]]
            %s582 = sshrl.u32 %s581, 3
            %s583 = sand.u32 %s581, 7
            %s584 = smul.u32 %s582, 16
            %s585 = sadd.s32 %s583, %s584
            %s586 = scalar_lea.hbm %s3, %s585
            %s587 = sshrl.u32 %s578, 3
            %s588 = sand.u32 %s578, 7
            %s589 = smul.u32 %s587, 16
            %s590 = sadd.s32 %s588, %s589
            %s591 = smul.u32 %s69, 224
            %s592 = sadd.s32 %s590, %s591
            %s593 = scalar_lea.vmem [#allocation2], %s592
            %s594 = scalar_lea.sflag [#allocation3], %s69
            %s595 = sshll.u32 %s586, 4
            %s596 = int_to_ptr.hbm [resolvable:$true] %s595
            %s597 = sshll.u32 %s593, 4
            %s598 = int_to_ptr.vmem [resolvable:$true] %s597
            %602 = dma.hbm_to_vmem [thread:$0]  %s596, 32, %s598, %s594, 128, 128, 1
            %s603 = sld [smem:[#allocation7 + %s579]]
            %s604 = sshrl.u32 %s603, 3
            %s605 = sand.u32 %s603, 7
            %s606 = smul.u32 %s604, 16
            %s607 = sadd.s32 %s605, %s606
            %s608 = scalar_lea.hbm %s4, %s607
            %s609 = sadd.s32 %s590, 32
            %s610 = sadd.s32 %s609, %s591
            %s611 = scalar_lea.vmem [#allocation2], %s610
            %s612 = sshll.u32 %s608, 4
            %s613 = int_to_ptr.hbm [resolvable:$true] %s612
            %s614 = sshll.u32 %s611, 4
            %s615 = int_to_ptr.vmem [resolvable:$true] %s614
            %619 = dma.hbm_to_vmem [thread:$0]  %s613, 32, %s615, %s594, 128, 128, 1
            %s620 = sld [smem:[#allocation8 + %s580]]
            %s621 = sshrl.u32 %s620, 3
            %s622 = sand.u32 %s620, 7
            %s623 = smul.u32 %s621, 16
            %s624 = sadd.s32 %s622, %s623
            %s625 = scalar_lea.hbm %s4, %s624
            %s626 = sadd.s32 %s590, 64
            %s627 = sadd.s32 %s626, %s591
            %s628 = scalar_lea.vmem [#allocation2], %s627
            %s629 = sshll.u32 %s625, 4
            %s630 = int_to_ptr.hbm [resolvable:$true] %s629
            %s631 = sshll.u32 %s628, 4
            %s632 = int_to_ptr.vmem [resolvable:$true] %s631
            %636 = dma.hbm_to_vmem [thread:$0]  %s630, 32, %s632, %s594, 128, 128, 1
            %s637 = sadd.s32 %s580, 1
            %s638 = sld [smem:[#allocation8 + %s637]]
            %s639 = sshrl.u32 %s638, 3
            %s640 = sand.u32 %s638, 7
            %s641 = smul.u32 %s639, 16
            %s642 = sadd.s32 %s640, %s641
            %s643 = scalar_lea.hbm %s4, %s642
            %s644 = sadd.s32 %s590, 96
            %s645 = sadd.s32 %s644, %s591
            %s646 = scalar_lea.vmem [#allocation2], %s645
            %s647 = sshll.u32 %s643, 4
            %s648 = int_to_ptr.hbm [resolvable:$true] %s647
            %s649 = sshll.u32 %s646, 4
            %s650 = int_to_ptr.vmem [resolvable:$true] %s649
            %654 = dma.hbm_to_vmem [thread:$0]  %s648, 32, %s650, %s594, 128, 128, 1
            %s655 = sadd.s32 %s580, 2
            %s656 = sld [smem:[#allocation8 + %s655]]
            %s657 = sshrl.u32 %s656, 3
            %s658 = sand.u32 %s656, 7
            %s659 = smul.u32 %s657, 16
            %s660 = sadd.s32 %s658, %s659
            %s661 = scalar_lea.hbm %s4, %s660
            %s662 = sadd.s32 %s590, 128
            %s663 = sadd.s32 %s662, %s591
            %s664 = scalar_lea.vmem [#allocation2], %s663
            %s665 = sshll.u32 %s661, 4
            %s666 = int_to_ptr.hbm [resolvable:$true] %s665
            %s667 = sshll.u32 %s664, 4
            %s668 = int_to_ptr.vmem [resolvable:$true] %s667
            %672 = dma.hbm_to_vmem [thread:$0]  %s666, 32, %s668, %s594, 128, 128, 1
            %s673 = sadd.s32 %s580, 3
            %s674 = sld [smem:[#allocation8 + %s673]]
            %s675 = sshrl.u32 %s674, 3
            %s676 = sand.u32 %s674, 7
            %s677 = smul.u32 %s675, 16
            %s678 = sadd.s32 %s676, %s677
            %s679 = scalar_lea.hbm %s4, %s678
            %s680 = sadd.s32 %s590, 160
            %s681 = sadd.s32 %s680, %s591
            %s682 = scalar_lea.vmem [#allocation2], %s681
            %s683 = sshll.u32 %s679, 4
            %s684 = int_to_ptr.hbm [resolvable:$true] %s683
            %s685 = sshll.u32 %s682, 4
            %s686 = int_to_ptr.vmem [resolvable:$true] %s685
            %690 = dma.hbm_to_vmem [thread:$0]  %s684, 32, %s686, %s594, 128, 128, 1
            %s691 = sadd.s32 %s580, 4
            %s692 = sld [smem:[#allocation8 + %s691]]
            %s693 = sshrl.u32 %s692, 3
            %s694 = sand.u32 %s692, 7
            %s695 = smul.u32 %s693, 16
            %s696 = sadd.s32 %s694, %s695
            %s697 = scalar_lea.hbm %s4, %s696
            %s698 = sadd.s32 %s590, 192
            %s699 = sadd.s32 %s698, %s591
            %s700 = scalar_lea.vmem [#allocation2], %s699
            %s701 = sshll.u32 %s697, 4
            %s702 = int_to_ptr.hbm [resolvable:$true] %s701
            %s703 = sshll.u32 %s700, 4
            %s704 = int_to_ptr.vmem [resolvable:$true] %s703
            %708 = dma.hbm_to_vmem [thread:$0]  %s702, 32, %s704, %s594, 128, 128, 1
            %s709 = sadd.s32 %s578, 1
            %s710 = sadd.s32 %s571, %s709
            %s711 = smul.u32 %s710, 5
            %s712 = sld [smem:[#allocation6 + %s710]]
            %s713 = sshrl.u32 %s712, 3
            %s714 = sand.u32 %s712, 7
            %s715 = smul.u32 %s713, 16
            %s716 = sadd.s32 %s714, %s715
            %s717 = scalar_lea.hbm %s3, %s716
            %s718 = sshrl.u32 %s709, 3
            %s719 = sand.u32 %s709, 7
            %s720 = smul.u32 %s718, 16
            %s721 = sadd.s32 %s719, %s720
            %s722 = sadd.s32 %s721, %s591
            %s723 = scalar_lea.vmem [#allocation2], %s722
            %s724 = sshll.u32 %s717, 4
            %s725 = int_to_ptr.hbm [resolvable:$true] %s724
            %s726 = sshll.u32 %s723, 4
            %s727 = int_to_ptr.vmem [resolvable:$true] %s726
            %731 = dma.hbm_to_vmem [thread:$0]  %s725, 32, %s727, %s594, 128, 128, 1
            %s732 = sld [smem:[#allocation7 + %s710]]
            %s733 = sshrl.u32 %s732, 3
            %s734 = sand.u32 %s732, 7
            %s735 = smul.u32 %s733, 16
            %s736 = sadd.s32 %s734, %s735
            %s737 = scalar_lea.hbm %s4, %s736
            %s738 = sadd.s32 %s721, 32
            %s739 = sadd.s32 %s738, %s591
            %s740 = scalar_lea.vmem [#allocation2], %s739
            %s741 = sshll.u32 %s737, 4
            %s742 = int_to_ptr.hbm [resolvable:$true] %s741
            %s743 = sshll.u32 %s740, 4
            %s744 = int_to_ptr.vmem [resolvable:$true] %s743
            %748 = dma.hbm_to_vmem [thread:$0]  %s742, 32, %s744, %s594, 128, 128, 1
            %s749 = sld [smem:[#allocation8 + %s711]]
            %s750 = sshrl.u32 %s749, 3
            %s751 = sand.u32 %s749, 7
            %s752 = smul.u32 %s750, 16
            %s753 = sadd.s32 %s751, %s752
            %s754 = scalar_lea.hbm %s4, %s753
            %s755 = sadd.s32 %s721, 64
            %s756 = sadd.s32 %s755, %s591
            %s757 = scalar_lea.vmem [#allocation2], %s756
            %s758 = sshll.u32 %s754, 4
            %s759 = int_to_ptr.hbm [resolvable:$true] %s758
            %s760 = sshll.u32 %s757, 4
            %s761 = int_to_ptr.vmem [resolvable:$true] %s760
            %765 = dma.hbm_to_vmem [thread:$0]  %s759, 32, %s761, %s594, 128, 128, 1
            %s766 = sadd.s32 %s711, 1
            %s767 = sld [smem:[#allocation8 + %s766]]
            %s768 = sshrl.u32 %s767, 3
            %s769 = sand.u32 %s767, 7
            %s770 = smul.u32 %s768, 16
            %s771 = sadd.s32 %s769, %s770
            %s772 = scalar_lea.hbm %s4, %s771
            %s773 = sadd.s32 %s721, 96
            %s774 = sadd.s32 %s773, %s591
            %s775 = scalar_lea.vmem [#allocation2], %s774
            %s776 = sshll.u32 %s772, 4
            %s777 = int_to_ptr.hbm [resolvable:$true] %s776
            %s778 = sshll.u32 %s775, 4
            %s779 = int_to_ptr.vmem [resolvable:$true] %s778
            %783 = dma.hbm_to_vmem [thread:$0]  %s777, 32, %s779, %s594, 128, 128, 1
            %s784 = sadd.s32 %s711, 2
            %s785 = sld [smem:[#allocation8 + %s784]]
            %s786 = sshrl.u32 %s785, 3
            %s787 = sand.u32 %s785, 7
            %s788 = smul.u32 %s786, 16
            %s789 = sadd.s32 %s787, %s788
            %s790 = scalar_lea.hbm %s4, %s789
            %s791 = sadd.s32 %s721, 128
            %s792 = sadd.s32 %s791, %s591
            %s793 = scalar_lea.vmem [#allocation2], %s792
            %s794 = sshll.u32 %s790, 4
            %s795 = int_to_ptr.hbm [resolvable:$true] %s794
            %s796 = sshll.u32 %s793, 4
            %s797 = int_to_ptr.vmem [resolvable:$true] %s796
            %801 = dma.hbm_to_vmem [thread:$0]  %s795, 32, %s797, %s594, 128, 128, 1
            %s802 = sadd.s32 %s711, 3
            %s803 = sld [smem:[#allocation8 + %s802]]
            %s804 = sshrl.u32 %s803, 3
            %s805 = sand.u32 %s803, 7
            %s806 = smul.u32 %s804, 16
            %s807 = sadd.s32 %s805, %s806
            %s808 = scalar_lea.hbm %s4, %s807
            %s809 = sadd.s32 %s721, 160
            %s810 = sadd.s32 %s809, %s591
            %s811 = scalar_lea.vmem [#allocation2], %s810
            %s812 = sshll.u32 %s808, 4
            %s813 = int_to_ptr.hbm [resolvable:$true] %s812
            %s814 = sshll.u32 %s811, 4
            %s815 = int_to_ptr.vmem [resolvable:$true] %s814
            %819 = dma.hbm_to_vmem [thread:$0]  %s813, 32, %s815, %s594, 128, 128, 1
            %s820 = sadd.s32 %s711, 4
            %s821 = sld [smem:[#allocation8 + %s820]]
            %s822 = sshrl.u32 %s821, 3
            %s823 = sand.u32 %s821, 7
            %s824 = smul.u32 %s822, 16
            %s825 = sadd.s32 %s823, %s824
            %s826 = scalar_lea.hbm %s4, %s825
            %s827 = sadd.s32 %s721, 192
            %s828 = sadd.s32 %s827, %s591
            %s829 = scalar_lea.vmem [#allocation2], %s828
            %s830 = sshll.u32 %s826, 4
            %s831 = int_to_ptr.hbm [resolvable:$true] %s830
            %s832 = sshll.u32 %s829, 4
            %s833 = int_to_ptr.vmem [resolvable:$true] %s832
            %837 = dma.hbm_to_vmem [thread:$0]  %s831, 32, %s833, %s594, 128, 128, 1
            %s838 = sadd.s32 %s578, 2
            %s839 = sadd.s32 %s571, %s838
            %s840 = smul.u32 %s839, 5
            %s841 = sld [smem:[#allocation6 + %s839]]
            %s842 = sshrl.u32 %s841, 3
            %s843 = sand.u32 %s841, 7
            %s844 = smul.u32 %s842, 16
            %s845 = sadd.s32 %s843, %s844
            %s846 = scalar_lea.hbm %s3, %s845
            %s847 = sshrl.u32 %s838, 3
            %s848 = sand.u32 %s838, 7
            %s849 = smul.u32 %s847, 16
            %s850 = sadd.s32 %s848, %s849
            %s851 = sadd.s32 %s850, %s591
            %s852 = scalar_lea.vmem [#allocation2], %s851
            %s853 = sshll.u32 %s846, 4
            %s854 = int_to_ptr.hbm [resolvable:$true] %s853
            %s855 = sshll.u32 %s852, 4
            %s856 = int_to_ptr.vmem [resolvable:$true] %s855
            %860 = dma.hbm_to_vmem [thread:$0]  %s854, 32, %s856, %s594, 128, 128, 1
            %s861 = sld [smem:[#allocation7 + %s839]]
            %s862 = sshrl.u32 %s861, 3
            %s863 = sand.u32 %s861, 7
            %s864 = smul.u32 %s862, 16
            %s865 = sadd.s32 %s863, %s864
            %s866 = scalar_lea.hbm %s4, %s865
            %s867 = sadd.s32 %s850, 32
            %s868 = sadd.s32 %s867, %s591
            %s869 = scalar_lea.vmem [#allocation2], %s868
            %s870 = sshll.u32 %s866, 4
            %s871 = int_to_ptr.hbm [resolvable:$true] %s870
            %s872 = sshll.u32 %s869, 4
            %s873 = int_to_ptr.vmem [resolvable:$true] %s872
            %877 = dma.hbm_to_vmem [thread:$0]  %s871, 32, %s873, %s594, 128, 128, 1
            %s878 = sld [smem:[#allocation8 + %s840]]
            %s879 = sshrl.u32 %s878, 3
            %s880 = sand.u32 %s878, 7
            %s881 = smul.u32 %s879, 16
            %s882 = sadd.s32 %s880, %s881
            %s883 = scalar_lea.hbm %s4, %s882
            %s884 = sadd.s32 %s850, 64
            %s885 = sadd.s32 %s884, %s591
            %s886 = scalar_lea.vmem [#allocation2], %s885
            %s887 = sshll.u32 %s883, 4
            %s888 = int_to_ptr.hbm [resolvable:$true] %s887
            %s889 = sshll.u32 %s886, 4
            %s890 = int_to_ptr.vmem [resolvable:$true] %s889
            %894 = dma.hbm_to_vmem [thread:$0]  %s888, 32, %s890, %s594, 128, 128, 1
            %s895 = sadd.s32 %s840, 1
            %s896 = sld [smem:[#allocation8 + %s895]]
            %s897 = sshrl.u32 %s896, 3
            %s898 = sand.u32 %s896, 7
            %s899 = smul.u32 %s897, 16
            %s900 = sadd.s32 %s898, %s899
            %s901 = scalar_lea.hbm %s4, %s900
            %s902 = sadd.s32 %s850, 96
            %s903 = sadd.s32 %s902, %s591
            %s904 = scalar_lea.vmem [#allocation2], %s903
            %s905 = sshll.u32 %s901, 4
            %s906 = int_to_ptr.hbm [resolvable:$true] %s905
            %s907 = sshll.u32 %s904, 4
            %s908 = int_to_ptr.vmem [resolvable:$true] %s907
            %912 = dma.hbm_to_vmem [thread:$0]  %s906, 32, %s908, %s594, 128, 128, 1
            %s913 = sadd.s32 %s840, 2
            %s914 = sld [smem:[#allocation8 + %s913]]
            %s915 = sshrl.u32 %s914, 3
            %s916 = sand.u32 %s914, 7
            %s917 = smul.u32 %s915, 16
            %s918 = sadd.s32 %s916, %s917
            %s919 = scalar_lea.hbm %s4, %s918
            %s920 = sadd.s32 %s850, 128
            %s921 = sadd.s32 %s920, %s591
            %s922 = scalar_lea.vmem [#allocation2], %s921
            %s923 = sshll.u32 %s919, 4
            %s924 = int_to_ptr.hbm [resolvable:$true] %s923
            %s925 = sshll.u32 %s922, 4
            %s926 = int_to_ptr.vmem [resolvable:$true] %s925
            %930 = dma.hbm_to_vmem [thread:$0]  %s924, 32, %s926, %s594, 128, 128, 1
            %s931 = sadd.s32 %s840, 3
            %s932 = sld [smem:[#allocation8 + %s931]]
            %s933 = sshrl.u32 %s932, 3
            %s934 = sand.u32 %s932, 7
            %s935 = smul.u32 %s933, 16
            %s936 = sadd.s32 %s934, %s935
            %s937 = scalar_lea.hbm %s4, %s936
            %s938 = sadd.s32 %s850, 160
            %s939 = sadd.s32 %s938, %s591
            %s940 = scalar_lea.vmem [#allocation2], %s939
            %s941 = sshll.u32 %s937, 4
            %s942 = int_to_ptr.hbm [resolvable:$true] %s941
            %s943 = sshll.u32 %s940, 4
            %s944 = int_to_ptr.vmem [resolvable:$true] %s943
            %948 = dma.hbm_to_vmem [thread:$0]  %s942, 32, %s944, %s594, 128, 128, 1
            %s949 = sadd.s32 %s840, 4
            %s950 = sld [smem:[#allocation8 + %s949]]
            %s951 = sshrl.u32 %s950, 3
            %s952 = sand.u32 %s950, 7
            %s953 = smul.u32 %s951, 16
            %s954 = sadd.s32 %s952, %s953
            %s955 = scalar_lea.hbm %s4, %s954
            %s956 = sadd.s32 %s850, 192
            %s957 = sadd.s32 %s956, %s591
            %s958 = scalar_lea.vmem [#allocation2], %s957
            %s959 = sshll.u32 %s955, 4
            %s960 = int_to_ptr.hbm [resolvable:$true] %s959
            %s961 = sshll.u32 %s958, 4
            %s962 = int_to_ptr.vmem [resolvable:$true] %s961
            %966 = dma.hbm_to_vmem [thread:$0]  %s960, 32, %s962, %s594, 128, 128, 1
            %s967 = sadd.s32 %s578, 3
            %s968 = sadd.s32 %s571, %s967
            %s969 = smul.u32 %s968, 5
            %s970 = sld [smem:[#allocation6 + %s968]]
            %s971 = sshrl.u32 %s970, 3
            %s972 = sand.u32 %s970, 7
            %s973 = smul.u32 %s971, 16
            %s974 = sadd.s32 %s972, %s973
            %s975 = scalar_lea.hbm %s3, %s974
            %s976 = sshrl.u32 %s967, 3
            %s977 = sand.u32 %s967, 7
            %s978 = smul.u32 %s976, 16
            %s979 = sadd.s32 %s977, %s978
            %s980 = sadd.s32 %s979, %s591
            %s981 = scalar_lea.vmem [#allocation2], %s980
            %s982 = sshll.u32 %s975, 4
            %s983 = int_to_ptr.hbm [resolvable:$true] %s982
            %s984 = sshll.u32 %s981, 4
            %s985 = int_to_ptr.vmem [resolvable:$true] %s984
            %989 = dma.hbm_to_vmem [thread:$0]  %s983, 32, %s985, %s594, 128, 128, 1
            %s990 = sld [smem:[#allocation7 + %s968]]
            %s991 = sshrl.u32 %s990, 3
            %s992 = sand.u32 %s990, 7
            %s993 = smul.u32 %s991, 16
            %s994 = sadd.s32 %s992, %s993
            %s995 = scalar_lea.hbm %s4, %s994
            %s996 = sadd.s32 %s979, 32
            %s997 = sadd.s32 %s996, %s591
            %s998 = scalar_lea.vmem [#allocation2], %s997
            %s999 = sshll.u32 %s995, 4
            %s1000 = int_to_ptr.hbm [resolvable:$true] %s999
            %s1001 = sshll.u32 %s998, 4
            %s1002 = int_to_ptr.vmem [resolvable:$true] %s1001
            %1006 = dma.hbm_to_vmem [thread:$0]  %s1000, 32, %s1002, %s594, 128, 128, 1
            %s1007 = sld [smem:[#allocation8 + %s969]]
            %s1008 = sshrl.u32 %s1007, 3
            %s1009 = sand.u32 %s1007, 7
            %s1010 = smul.u32 %s1008, 16
            %s1011 = sadd.s32 %s1009, %s1010
            %s1012 = scalar_lea.hbm %s4, %s1011
            %s1013 = sadd.s32 %s979, 64
            %s1014 = sadd.s32 %s1013, %s591
            %s1015 = scalar_lea.vmem [#allocation2], %s1014
            %s1016 = sshll.u32 %s1012, 4
            %s1017 = int_to_ptr.hbm [resolvable:$true] %s1016
            %s1018 = sshll.u32 %s1015, 4
            %s1019 = int_to_ptr.vmem [resolvable:$true] %s1018
            %1023 = dma.hbm_to_vmem [thread:$0]  %s1017, 32, %s1019, %s594, 128, 128, 1
            %s1024 = sadd.s32 %s969, 1
            %s1025 = sld [smem:[#allocation8 + %s1024]]
            %s1026 = sshrl.u32 %s1025, 3
            %s1027 = sand.u32 %s1025, 7
            %s1028 = smul.u32 %s1026, 16
            %s1029 = sadd.s32 %s1027, %s1028
            %s1030 = scalar_lea.hbm %s4, %s1029
            %s1031 = sadd.s32 %s979, 96
            %s1032 = sadd.s32 %s1031, %s591
            %s1033 = scalar_lea.vmem [#allocation2], %s1032
            %s1034 = sshll.u32 %s1030, 4
            %s1035 = int_to_ptr.hbm [resolvable:$true] %s1034
            %s1036 = sshll.u32 %s1033, 4
            %s1037 = int_to_ptr.vmem [resolvable:$true] %s1036
            %1041 = dma.hbm_to_vmem [thread:$0]  %s1035, 32, %s1037, %s594, 128, 128, 1
            %s1042 = sadd.s32 %s969, 2
            %s1043 = sld [smem:[#allocation8 + %s1042]]
            %s1044 = sshrl.u32 %s1043, 3
            %s1045 = sand.u32 %s1043, 7
            %s1046 = smul.u32 %s1044, 16
            %s1047 = sadd.s32 %s1045, %s1046
            %s1048 = scalar_lea.hbm %s4, %s1047
            %s1049 = sadd.s32 %s979, 128
            %s1050 = sadd.s32 %s1049, %s591
            %s1051 = scalar_lea.vmem [#allocation2], %s1050
            %s1052 = sshll.u32 %s1048, 4
            %s1053 = int_to_ptr.hbm [resolvable:$true] %s1052
            %s1054 = sshll.u32 %s1051, 4
            %s1055 = int_to_ptr.vmem [resolvable:$true] %s1054
            %1059 = dma.hbm_to_vmem [thread:$0]  %s1053, 32, %s1055, %s594, 128, 128, 1
            %s1060 = sadd.s32 %s969, 3
            %s1061 = sld [smem:[#allocation8 + %s1060]]
            %s1062 = sshrl.u32 %s1061, 3
            %s1063 = sand.u32 %s1061, 7
            %s1064 = smul.u32 %s1062, 16
            %s1065 = sadd.s32 %s1063, %s1064
            %s1066 = scalar_lea.hbm %s4, %s1065
            %s1067 = sadd.s32 %s979, 160
            %s1068 = sadd.s32 %s1067, %s591
            %s1069 = scalar_lea.vmem [#allocation2], %s1068
            %s1070 = sshll.u32 %s1066, 4
            %s1071 = int_to_ptr.hbm [resolvable:$true] %s1070
            %s1072 = sshll.u32 %s1069, 4
            %s1073 = int_to_ptr.vmem [resolvable:$true] %s1072
            %1077 = dma.hbm_to_vmem [thread:$0]  %s1071, 32, %s1073, %s594, 128, 128, 1
            %s1078 = sadd.s32 %s969, 4
            %s1079 = sld [smem:[#allocation8 + %s1078]]
            %s1080 = sshrl.u32 %s1079, 3
            %s1081 = sand.u32 %s1079, 7
            %s1082 = smul.u32 %s1080, 16
            %s1083 = sadd.s32 %s1081, %s1082
            %s1084 = scalar_lea.hbm %s4, %s1083
            %s1085 = sadd.s32 %s979, 192
            %s1086 = sadd.s32 %s1085, %s591
            %s1087 = scalar_lea.vmem [#allocation2], %s1086
            %s1088 = sshll.u32 %s1084, 4
            %s1089 = int_to_ptr.hbm [resolvable:$true] %s1088
            %s1090 = sshll.u32 %s1087, 4
            %s1091 = int_to_ptr.vmem [resolvable:$true] %s1090
            %1095 = dma.hbm_to_vmem [thread:$0]  %s1089, 32, %s1091, %s594, 128, 128, 1
          $region32: #{tpu_custom_call.1} parent=26 // loop_footer
            %s577 = sadd.s32 1, %s573
          $region33: #{tpu_custom_call.1} parent=26 // loop_footer_branch
            %572 = sbr.rel target = $region29
          $region34: #{tpu_custom_call.1} parent=26 // loop_exit
            _
        $region27: #{tpu_custom_call.1} parent=11 // pred_fallthru
          _
        %s1096 = smul.u32 %s68, 28
        %s1097 = smul.addr %s1096, 8
        %s1098 = scalar_lea.vmem [#allocation2], %s1097
        %s1099 = scalar_lea.sflag [#allocation3], %s68
        %s1100 = smul.u32 8, 7
        %s1101 = smul.u32 %s1100, 2
        %s1102 = smul.u32 %s1101, 2
        %s1103 = sshll.u32 %s1102, 4
        %1104 = dma.done %s1099, %s1103
        %v1105 = vld [vmem:[%s1098] sm:$0xff]
        %v1106 = vld [vmem:[%s1098 + $0x8] sm:$0xff]
        %v1107 = vld [vmem:[%s1098 + $0x10] sm:$0xff]
        %v1108 = vld [vmem:[%s1098 + $0x18] sm:$0xff]
        %v1109 = vld [vmem:[%s1098 + $0x20] sm:$0xff]
        %v1110 = vld [vmem:[%s1098 + $0x28] sm:$0xff]
        %v1111 = vld [vmem:[%s1098 + $0x30] sm:$0xff]
        %v1112 = vld [vmem:[%s1098 + $0x38] sm:$0xff]
        %v1113 = vld [vmem:[%s1098 + $0x40] sm:$0xff]
        %v1114 = vld [vmem:[%s1098 + $0x48] sm:$0xff]
        %v1115 = vld [vmem:[%s1098 + $0x50] sm:$0xff]
        %v1116 = vld [vmem:[%s1098 + $0x58] sm:$0xff]
        %v1117 = vld [vmem:[%s1098 + $0x60] sm:$0xff]
        %v1118 = vld [vmem:[%s1098 + $0x68] sm:$0xff]
        %v1119 = vld [vmem:[%s1098 + $0x70] sm:$0xff]
        %v1120 = vld [vmem:[%s1098 + $0x78] sm:$0xff]
        %v1121 = vld [vmem:[%s1098 + $0x80] sm:$0xff]
        %v1122 = vld [vmem:[%s1098 + $0x88] sm:$0xff]
        %v1123 = vld [vmem:[%s1098 + $0x90] sm:$0xff]
        %v1124 = vld [vmem:[%s1098 + $0x98] sm:$0xff]
        %v1125 = vld [vmem:[%s1098 + $0xa0] sm:$0xff]
        %v1126 = vld [vmem:[%s1098 + $0xa8] sm:$0xff]
        %v1127 = vld [vmem:[%s1098 + $0xb0] sm:$0xff]
        %v1128 = vld [vmem:[%s1098 + $0xb8] sm:$0xff]
        %v1129 = vld [vmem:[%s1098 + $0xc0] sm:$0xff]
        %v1130 = vld [vmem:[%s1098 + $0xc8] sm:$0xff]
        %v1131 = vld [vmem:[%s1098 + $0xd0] sm:$0xff]
        %v1132 = vld [vmem:[%s1098 + $0xd8] sm:$0xff]
        %v1133 = vmul.f32 %v1105, %v1105
        %v1134 = vmul.f32 %v1106, %v1106
        %v1135 = vmul.f32 %v1107, %v1107
        %v1136 = vmul.f32 %v1108, %v1108
        %v1137 = vmul.f32 %v1109, %v1105
        %v1138 = vmul.f32 %v1110, %v1106
        %v1139 = vmul.f32 %v1111, %v1107
        %v1140 = vmul.f32 %v1112, %v1108
        %v1141 = vmul.f32 %v1113, %v1105
        %v1142 = vmul.f32 %v1114, %v1106
        %v1143 = vmul.f32 %v1115, %v1107
        %v1144 = vmul.f32 %v1116, %v1108
        %v1145 = vmul.f32 %v1117, %v1105
        %v1146 = vmul.f32 %v1118, %v1106
        %v1147 = vmul.f32 %v1119, %v1107
        %v1148 = vmul.f32 %v1120, %v1108
        %v1149 = vmul.f32 %v1121, %v1105
        %v1150 = vmul.f32 %v1122, %v1106
        %v1151 = vmul.f32 %v1123, %v1107
        %v1152 = vmul.f32 %v1124, %v1108
        %v1153 = vmul.f32 %v1125, %v1105
        %v1154 = vmul.f32 %v1126, %v1106
        %v1155 = vmul.f32 %v1127, %v1107
        %v1156 = vmul.f32 %v1128, %v1108
        %v1157 = vmul.f32 %v1129, %v1105
        %v1158 = vmul.f32 %v1130, %v1106
        %v1159 = vmul.f32 %v1131, %v1107
        %v1160 = vmul.f32 %v1132, %v1108
        %v1161 = vadd.f32 %v1133, %v1134
        %1162 = vadd.xlane.f32.xlu0 %v1161
        %v1163 = vpop.xlane.xlu0 %1162
        %v1164 = vadd.f32 %v1135, %v1136
        %1165 = vadd.xlane.f32.xlu0 %v1164
        %v1166 = vpop.xlane.xlu0 %1165
        %v1167 = vadd.f32 %v1137, %v1138
        %1168 = vadd.xlane.f32.xlu0 %v1167
        %v1169 = vpop.xlane.xlu0 %1168
        %v1170 = vadd.f32 %v1139, %v1140
        %1171 = vadd.xlane.f32.xlu0 %v1170
        %v1172 = vpop.xlane.xlu0 %1171
        %v1173 = vadd.f32 %v1141, %v1142
        %1174 = vadd.xlane.f32.xlu0 %v1173
        %v1175 = vpop.xlane.xlu0 %1174
        %v1176 = vadd.f32 %v1143, %v1144
        %1177 = vadd.xlane.f32.xlu0 %v1176
        %v1178 = vpop.xlane.xlu0 %1177
        %v1179 = vadd.f32 %v1145, %v1146
        %1180 = vadd.xlane.f32.xlu0 %v1179
        %v1181 = vpop.xlane.xlu0 %1180
        %v1182 = vadd.f32 %v1147, %v1148
        %1183 = vadd.xlane.f32.xlu0 %v1182
        %v1184 = vpop.xlane.xlu0 %1183
        %v1185 = vadd.f32 %v1149, %v1150
        %1186 = vadd.xlane.f32.xlu0 %v1185
        %v1187 = vpop.xlane.xlu0 %1186
        %v1188 = vadd.f32 %v1151, %v1152
        %1189 = vadd.xlane.f32.xlu0 %v1188
        %v1190 = vpop.xlane.xlu0 %1189
        %v1191 = vadd.f32 %v1153, %v1154
        %1192 = vadd.xlane.f32.xlu0 %v1191
        %v1193 = vpop.xlane.xlu0 %1192
        %v1194 = vadd.f32 %v1155, %v1156
        %1195 = vadd.xlane.f32.xlu0 %v1194
        %v1196 = vpop.xlane.xlu0 %1195
        %v1197 = vadd.f32 %v1157, %v1158
        %1198 = vadd.xlane.f32.xlu0 %v1197
        %v1199 = vpop.xlane.xlu0 %1198
        %v1200 = vadd.f32 %v1159, %v1160
        %1201 = vadd.xlane.f32.xlu0 %v1200
        %v1202 = vpop.xlane.xlu0 %1201
        %v1203 = vlaneseq
        %v1204 = vshrl.u32 %v1203, 7
        %s1205 = smul.u32 %s30, 16
        %v1206 = vlaneseq
        %v1207 = vand.u32 %v1206, 127
        %v1208 = vstv %s1205
        %v1209 = vadd.s32 %v1208, %v1207
        %vm1210 = vcmp.eq.s32.totalorder %v1204, 1
        %v1211 = vsub.f32 0.0, %v1163
        %v1212 = vsub.f32 0.0, %v1166
        %v1213 = vsub.f32 0.0, %v1169
        %v1214 = vsub.f32 0.0, %v1172
        %v1215 = vsub.f32 0.0, %v1175
        %v1216 = vsub.f32 0.0, %v1178
        %v1217 = vsub.f32 0.0, %v1181
        %v1218 = vsub.f32 0.0, %v1184
        %v1219 = vsub.f32 0.0, %v1187
        %v1220 = vsub.f32 0.0, %v1190
        %v1221 = vsub.f32 0.0, %v1193
        %v1222 = vsub.f32 0.0, %v1196
        %v1223 = vsub.f32 0.0, %v1199
        %v1224 = vsub.f32 0.0, %v1202
        %v1239 = vperm.slane %v1163, %v1207
        %v1240 = vadd.s32 %v1207, 4294967288
        %v1241 = vperm.slane %v1166, %v1240
        %vm1242 = vcmask 130112
        %v1243 = vsel %vm1242, %v1241, %v1239
        %v1244 = vperm.slane %v1169, %v1207
        %v1245 = vperm.slane %v1172, %v1240
        %v1246 = vsel %vm1242, %v1245, %v1244
        %v1247 = vperm.slane %v1175, %v1207
        %v1248 = vperm.slane %v1178, %v1240
        %v1249 = vsel %vm1242, %v1248, %v1247
        %v1250 = vperm.slane %v1181, %v1207
        %v1251 = vperm.slane %v1184, %v1240
        %v1252 = vsel %vm1242, %v1251, %v1250
        %v1253 = vperm.slane %v1187, %v1207
        %v1254 = vperm.slane %v1190, %v1240
        %v1255 = vsel %vm1242, %v1254, %v1253
        %v1256 = vperm.slane %v1193, %v1207
        %v1257 = vperm.slane %v1196, %v1240
        %v1258 = vsel %vm1242, %v1257, %v1256
        %v1259 = vperm.slane %v1199, %v1207
        %v1260 = vperm.slane %v1202, %v1240
        %v1261 = vsel %vm1242, %v1260, %v1259
        %vm1262 = vcmask 1041409
        %v1263 = vsel %vm1262, %v1246, %v1243
        %vm1264 = vcmask 1042434
        %v1265 = vsel %vm1264, %v1249, %v1263
        %vm1266 = vcmask 1043459
        %v1267 = vsel %vm1266, %v1252, %v1265
        %vm1268 = vcmask 1044484
        %v1269 = vsel %vm1268, %v1255, %v1267
        %vm1270 = vcmask 1045509
        %v1271 = vsel %vm1270, %v1258, %v1269
        %vm1272 = vcmask 1046534
        %v1273 = vsel %vm1272, %v1261, %v1271
        %v1289 = vperm.slane %v1211, %v1207
        %v1290 = vperm.slane %v1212, %v1240
        %v1291 = vsel %vm1242, %v1290, %v1289
        %v1292 = vperm.slane %v1213, %v1207
        %v1293 = vperm.slane %v1214, %v1240
        %v1294 = vsel %vm1242, %v1293, %v1292
        %v1295 = vperm.slane %v1215, %v1207
        %v1296 = vperm.slane %v1216, %v1240
        %v1297 = vsel %vm1242, %v1296, %v1295
        %v1298 = vperm.slane %v1217, %v1207
        %v1299 = vperm.slane %v1218, %v1240
        %v1300 = vsel %vm1242, %v1299, %v1298
        %v1301 = vperm.slane %v1219, %v1207
        %v1302 = vperm.slane %v1220, %v1240
        %v1303 = vsel %vm1242, %v1302, %v1301
        %v1304 = vperm.slane %v1221, %v1207
        %v1305 = vperm.slane %v1222, %v1240
        %v1306 = vsel %vm1242, %v1305, %v1304
        %v1307 = vperm.slane %v1223, %v1207
        %v1308 = vperm.slane %v1224, %v1240
        %v1309 = vsel %vm1242, %v1308, %v1307
        %v1310 = vsel %vm1262, %v1294, %v1291
        %v1311 = vsel %vm1264, %v1297, %v1310
        %v1312 = vsel %vm1266, %v1300, %v1311
        %v1313 = vsel %vm1268, %v1303, %v1312
        %v1314 = vsel %vm1270, %v1306, %v1313
        %v1315 = vsel %vm1272, %v1309, %v1314
        %v1317 = vsel %vm1210, %v1273, %v1315
        %v1318 = vand.u32 2147483647, %v1317
        %v1319 = vsub.f32 0.0, %v1318
        %v1320 = vmul.f32 %v1319, 1.442695
        %v1321 = vpow.pop %v1320
        %vm1322 = vcmp.lt.f32.partialorder %v1321, 1e-05
        %v1323 = vmul.f32 %v1321, 0.5
        %v1324 = vsub.f32 1.0, %v1323
        %v1325 = vmul.f32 %v1321, %v1324
        %v1326 = vadd.f32 %v1321, 1.0
        %v1327 = vlog2.pop %v1326
        %v1328 = vmul.f32 %v1327, 0.6931472
        %v1329 = vsel %vm1322, %v1325, %v1328
        %v1330 = vmin.f32 %v1317, 0.0
        %v1331 = vsub.f32 %v1330, %v1329
        %vm1332 = vcmp.ge.s32.totalorder %v1204, 1
        %vm1333 = vcmp.lt.s32.totalorder %v1209, 40
        %vm1334 = vmand %vm1332, %vm1333
        %v1335 = vld [vmem:[#allocation4] sm:$0x7f]
        %v1336 = vsel %vm1334, %v1331, 0.0
        %v1337 = vadd.f32 %v1335, %v1336
        %vm1338 = vcmask 129024
        %1339 = vst.msk [vmem:[#allocation4] sm:$0x7f] %vm1338, %v1337
        %p1340 = scmp.eq.s32.totalorder %s30, 2
        // Predicated region
        $region35: #{tpu_custom_call.1} parent=11 // pred_check
          %p1341 = pneg %p1340
        $region36: #{tpu_custom_call.1} parent=11 // pred_check_branch
          %1343 = sbr.rel (%p1341) target = $region38
        $region37: #{tpu_custom_call.1} parent=11 // pred_region
          %v1344 = vld [vmem:[#allocation4] sm:$0x7f]
          %v1345 = vsel %vm1338, %v1344, 0.0
          %1346 = vadd.xlane.f32.xlu0 %v1345
          %v1347 = vpop.xlane.xlu0 %1346
          %v1348 = vrot.slane %v1347, 4
          %v1349 = vadd.f32 %v1347, %v1348
          %v1350 = vrot.slane %v1349, 2
          %v1351 = vadd.f32 %v1349, %v1350
          %v1352 = vrot.slane %v1351, 1
          %v1353 = vadd.f32 %v1351, %v1352
          %s1354 = vtos %v1353
          %v1355 = vstv %s1354
          %v1356 = vsub.f32 0.0, %v1355
          %vm1357 = vcmask 0
          %1358 = vst.msk [vmem:[#allocation9] sm:$0x1] %vm1357, %v1356
        $region38: #{tpu_custom_call.1} parent=11 // pred_fallthru
          _
        // Predicated region
        $region39: #{tpu_custom_call.1} parent=11 // pred_check
          %p1359 = pneg %p40
        $region40: #{tpu_custom_call.1} parent=11 // pred_check_branch
          %1361 = sbr.rel (%p1359) target = $region42
        $region41: #{tpu_custom_call.1} parent=11 // pred_region
          %1363 = vsyncadd [#allocation10], 0
          %s1365 = sshll.u32 [#allocation9], 4
          %s1366 = int_to_ptr.vmem [resolvable:$true] %s1365
          %s1367 = sshll.u32 %s5, 4
          %s1368 = int_to_ptr.hbm [resolvable:$true] %s1367
          %1370 = dma.vmem_to_hbm [thread:$0]  %s1366, 16, %s1368, [#allocation10]
        $region42: #{tpu_custom_call.1} parent=11 // pred_fallthru
          _
        // Predicated region
        $region43: #{tpu_custom_call.1} parent=11 // pred_check
          %p1371 = pneg %p40
        $region44: #{tpu_custom_call.1} parent=11 // pred_check_branch
          %1373 = sbr.rel (%p1371) target = $region46
        $region45: #{tpu_custom_call.1} parent=11 // pred_region
          %1375 = dma.done [#allocation10], 16
        $region46: #{tpu_custom_call.1} parent=11 // pred_fallthru
          _
      $region12: #{tpu_custom_call.1} parent=5 // pred_fallthru
        _
      %p1376 = scmp.le.s32.totalorder 1, %s30
      // Predicated region
      $region47: #{tpu_custom_call.1} parent=5 // pred_check
        %p1377 = pneg %p1376
      $region48: #{tpu_custom_call.1} parent=5 // pred_check_branch
        %1379 = sbr.rel (%p1377) target = $region50
      $region49: #{tpu_custom_call.1} parent=5 // pred_region
        %s1380 = ssub.s32 %s30, 1
      $region50: #{tpu_custom_call.1} parent=5 // pred_fallthru
        _
    $region6: #{tpu_custom_call.1} parent=1 // loop_footer
      %s34 = sadd.s32 1, %s30
    $region7: #{tpu_custom_call.1} parent=1 // loop_footer_branch
      %29 = sbr.rel target = $region3
    $region8: #{tpu_custom_call.1} parent=1 // loop_exit
      _
    %1381 = vsyncpa [#allocation10], 1
    %s1382 = scalar_lea.sflag [#allocation10], 1
    %1383 = vsyncpa %s1382, 1
  %1384 = vsyncmov [#allocation3]
  %s1385 = vpop.sfrf %1384
  %p1386 = scmp.eq.s32.totalorder %s1385, 0
  %p1387 = pneg %p1386
  %1389 = shalt.err (%p1387)
  %s1390 = scalar_lea.sflag [#allocation3], 1
  %1391 = vsyncmov %s1390
  %s1392 = vpop.sfrf %1391
  %p1393 = scmp.eq.s32.totalorder %s1392, 0
  %p1394 = pneg %p1393
  %1396 = shalt.err (%p1394)

</llo_original>
